<compile_context>
chip_gen: v7x
topology: tpu7x:2x2x1
jax: 0.10.0
libtpu: 0.0.40
codegen_flags: <defaults>
</compile_context>

<pallas_src>
import jax
import jax.numpy as jnp
from jax import lax
from jax.experimental import pallas as pl
from jax.experimental.pallas import tpu as pltpu


def _round_up(x, m):
    return (x + m - 1) // m * m


def _nbytes(shape, dtype):
    n = 1
    for s in shape:
        n *= int(s)
    return n * jnp.dtype(dtype).itemsize


def _fold_bn(gamma, beta, mean, var, eps=1e-5):
    scale = gamma / jnp.sqrt(var + eps)
    bias = beta - mean * scale
    return scale, bias


def _prep_weight(w_hwio, scale, cp, dtype):
    """(3,3,Cin,Cout) -> (3, 3*Cp, Cp); BN scale folded into output channels."""
    kh, kw, ci, co = w_hwio.shape
    w = w_hwio * scale.reshape(1, 1, 1, co)
    w = jnp.pad(w, ((0, 0), (0, 0), (0, cp - ci), (0, cp - co)))
    return w.reshape(kh, kw * cp, cp).astype(dtype)


def _prep_bias(b, cp):
    return jnp.pad(b.astype(jnp.float32), (0, cp - b.shape[0])).reshape(1, cp)


def basic_block_forward(x_nchw, params, *, tile_h=None, compute_dtype=None):
    """Pallas BasicBlock.forward (stride=1, identity shortcut). NCHW in / NCHW out."""
    x = jnp.transpose(x_nchw, (0, 2, 3, 1))                 # NCHW -> NHWC
    N, H, W, Cin = x.shape
    Cout = params["w1"].shape[-1]
    if Cin != Cout:
        raise NotImplementedError("projection/downsample shortcut not implemented")

    cdtype = x.dtype if compute_dtype is None else compute_dtype
    out_dtype = x.dtype

    Cp = _round_up(max(Cin, Cout), 128)       # lane-dense channel dim
    Wop = _round_up(W, 8)                     # padded output width (sublane aligned)
    Whp = Wop + 8                             # h cols -1..Whp-2 (>= W+2, multiple of 8)
    Wxp = Whp + 2                             # x cols -2..Wxp-3 (conv1 im2col needs +2)

    TH = H if tile_h is None else max(1, min(int(tile_h), H))
    T = pl.cdiv(H, TH)
    Hp = T * TH
    Hh = TH + 2                               # h rows per tile (1-row halo each side)
    M1 = Hh * Whp                             # conv1 matmul M
    M2 = TH * Wop                             # conv2 matmul M

    # Fold BN (eval mode, running stats) into the conv weights / biases.
    s1, b1 = _fold_bn(params["gamma1"], params["beta1"], params["mean1"], params["var1"])
    s2, b2 = _fold_bn(params["gamma2"], params["beta2"], params["mean2"], params["var2"])
    w1 = _prep_weight(params["w1"], s1, Cp, cdtype)
    w2 = _prep_weight(params["w2"], s2, Cp, cdtype)
    b1 = _prep_bias(b1, Cp)
    b2 = _prep_bias(b2, Cp)

    # One zero-padded copy of the input serves conv1's halo and the residual.
    x_c = jnp.pad(x, ((0, 0), (0, 0), (0, 0), (0, Cp - Cin)))
    x_pad = jnp.pad(x_c, ((0, 0), (2, 2 + Hp - H), (2, Wxp - W - 2), (0, 0)))
    x_pad = x_pad.astype(cdtype)                              # (N, Hp+4, Wxp, Cp)

    def kernel(x_hbm, w1_ref, b1_ref, w2_ref, b2_ref, out_ref,
               xbuf, col1, col2, sem):
        n = pl.program_id(0)
        t = pl.program_id(1)
        nt = pl.num_programs(1)
        slot = t % 2

        def fetch(tt, sl):
            pltpu.make_async_copy(
                x_hbm.at[n, pl.ds(tt * TH, TH + 4)], xbuf.at[sl], sem.at[sl]
            ).start()

        # First tile of this batch element: no prefetch exists yet, fetch it now.
        @pl.when(t == 0)
        def _():
            fetch(0, 0)

        # Wait for the current tile's halo'd window ...
        pltpu.make_async_copy(
            x_hbm.at[n, pl.ds(t * TH, TH + 4)], xbuf.at[slot], sem.at[slot]
        ).wait()

        # ... and immediately prefetch the next tile into the other slot so the
        # HBM transfer overlaps this tile's two convolutions.
        @pl.when(t + 1 < nt)
        def _():
            fetch(t + 1, (t + 1) % 2)

        xcur = xbuf.at[slot]                                   # (TH+4, Wxp, Cp)

        # kw-im2col of the input tile: 3 slab copies, reused by all 3 kh taps.
        for kw in range(3):
            col1[:, kw * Cp:(kw + 1) * Cp] = (
                xcur[:, kw:kw + Whp, :].reshape((TH + 4) * Whp, Cp))

        # conv1 (+ folded bn1 scale): 3 big-M matmuls, K = 3*Cp, f32 accumulation.
        acc = None
        for kh in range(3):
            lhs = col1[kh * Whp:kh * Whp + M1, :]
            part = jnp.dot(lhs, w1_ref[kh], preferred_element_type=jnp.float32)
            acc = part if acc is None else acc + part

        h3 = jnp.maximum(acc + b1_ref[...], 0.0).reshape(Hh, Whp, Cp)

        # SAME-padding semantics for conv2: every h position outside the image
        # (rows <0 / >=H, cols -1 and >=W, padded tail columns) must be zero.
        i_iota = lax.broadcasted_iota(jnp.int32, (Hh, Whp, 1), 0)
        c_iota = lax.broadcasted_iota(jnp.int32, (Hh, Whp, 1), 1)
        hrow = t * TH + i_iota - 1
        valid = (hrow >= 0) & (hrow < H) & (c_iota >= 1) & (c_iota <= W)
        h3 = jnp.where(valid, h3, 0.0).astype(cdtype)

        # kw-im2col of h: 3 slab copies, reused by conv2's 3 kh taps.
        for kw in range(3):
            col2[:, kw * Cp:(kw + 1) * Cp] = (
                h3[:, kw:kw + Wop, :].reshape(Hh * Wop, Cp))

        # conv2 (+ folded bn2 scale).
        acc2 = None
        for kh in range(3):
            lhs = col2[kh * Wop:kh * Wop + M2, :]
            part = jnp.dot(lhs, w2_ref[kh], preferred_element_type=jnp.float32)
            acc2 = part if acc2 is None else acc2 + part

        # bn2 bias + identity residual + relu, one lane-dense store.
        res = xcur[2:2 + TH, 2:2 + Wop, :].reshape(M2, Cp).astype(jnp.float32)
        y = jnp.maximum(acc2 + b2_ref[...] + res, 0.0)
        out_ref[0] = y.reshape(TH, Wop, Cp).astype(out_ref.dtype)

    wspec = pl.BlockSpec((3, 3 * Cp, Cp), lambda n, t: (0, 0, 0))   # resident weights
    bspec = pl.BlockSpec((1, Cp), lambda n, t: (0, 0))              # resident biases

    est = (2 * _nbytes((TH + 4, _round_up(Wxp, 8), Cp), cdtype)     # xbuf (2 slots)
           + _nbytes(((TH + 4) * Whp, 3 * Cp), cdtype)              # col1
           + _nbytes(((TH + 2) * Wop, 3 * Cp), cdtype)              # col2
           + 2 * 2 * _nbytes((3, 3 * Cp, Cp), cdtype)               # w1,w2 (x2 buffers)
           + 2 * _nbytes((1, TH, Wop, Cp), out_dtype)               # out block (x2 buffers)
           + 3 * _nbytes(((TH + 2) * Whp, Cp), jnp.float32))        # matmul temps / h
    vmem_limit = int(min(128 * 1024 * 1024, max(32 * 1024 * 1024, 2 * est)))

    out_padded = pl.pallas_call(
        kernel,
        out_shape=jax.ShapeDtypeStruct((N, Hp, Wop, Cp), out_dtype),
        grid_spec=pltpu.PrefetchScalarGridSpec(
            num_scalar_prefetch=0,
            grid=(N, T),
            in_specs=[
                pl.BlockSpec(memory_space=pl.ANY),   # padded input stays in HBM
                wspec, bspec,                        # conv1 / bn1
                wspec, bspec,                        # conv2 / bn2
            ],
            out_specs=pl.BlockSpec((1, TH, Wop, Cp), lambda n, t: (n, t, 0, 0)),
            scratch_shapes=[
                pltpu.VMEM((2, TH + 4, Wxp, Cp), cdtype),           # halo'd input, 2 slots
                pltpu.VMEM(((TH + 4) * Whp, 3 * Cp), cdtype),       # kw-im2col of x
                pltpu.VMEM(((TH + 2) * Wop, 3 * Cp), cdtype),       # kw-im2col of h
                pltpu.SemaphoreType.DMA((2,)),
            ]),
        compiler_params=pltpu.CompilerParams(
            dimension_semantics=("parallel", "arbitrary"),
            vmem_limit_bytes=vmem_limit),
    )(x_pad, w1, b1, w2, b2)

    out = out_padded[:, :H, :W, :Cout]
    return jnp.transpose(out, (0, 3, 1, 2))                  # NHWC -> NCHW


def basic_block_reference(x_nchw, params):
    """Pure-JAX reference (lax conv) for correctness checking."""
    x = jnp.transpose(x_nchw, (0, 2, 3, 1))

    def conv(inp, w):
        return lax.conv_general_dilated(
            inp, w, window_strides=(1, 1), padding="SAME",
            dimension_numbers=("NHWC", "HWIO", "NHWC"))

    s1, b1 = _fold_bn(params["gamma1"], params["beta1"], params["mean1"], params["var1"])
    s2, b2 = _fold_bn(params["gamma2"], params["beta2"], params["mean2"], params["var2"])

    h = jnp.maximum(conv(x, params["w1"]) * s1 + b1, 0.0)
    out = jnp.maximum(conv(h, params["w2"]) * s2 + b2 + x, 0.0)
    return jnp.transpose(out, (0, 3, 1, 2))


def init_params(key, inplanes, planes):
    k = jax.random.split(key, 4)
    return {
        # conv weights in HWIO layout (transposed PyTorch OIHW)
        "w1": 0.1 * jax.random.normal(k[0], (3, 3, inplanes, planes), jnp.float32),
        "w2": 0.1 * jax.random.normal(k[1], (3, 3, planes, planes), jnp.float32),
        "gamma1": 1.0 + 0.1 * jax.random.normal(k[2], (planes,), jnp.float32),
        "beta1": 0.05 * jnp.arange(planes, dtype=jnp.float32),
        "mean1": 0.01 * jnp.arange(planes, dtype=jnp.float32),
        "var1": 1.0 + 0.1 * jnp.arange(planes, dtype=jnp.float32),
        "gamma2": 1.0 + 0.1 * jax.random.normal(k[3], (planes,), jnp.float32),
        "beta2": -0.05 * jnp.arange(planes, dtype=jnp.float32),
        "mean2": -0.01 * jnp.arange(planes, dtype=jnp.float32),
        "var2": 1.0 + 0.05 * jnp.arange(planes, dtype=jnp.float32),
    }


if __name__ == "__main__":
    key = jax.random.PRNGKey(0)
    kx, kp = jax.random.split(key)

    batch, inplanes, planes, spatial = 2, 4, 4, 16
    x = jax.random.normal(kx, (batch, inplanes, spatial, spatial), jnp.float32)  # NCHW
    params = init_params(kp, inplanes, planes)

    ref = jax.block_until_ready(basic_block_reference(x, params))

    # tile_h=8 exercises the multi-tile double-buffered DMA path;
    # tile_h=None runs the whole image height in one tile per batch element.
    for th in (8, None):
        out = jax.block_until_ready(basic_block_forward(x, params, tile_h=th))
        assert out.shape == (batch, planes, spatial, spatial)
        assert jnp.allclose(out, ref, atol=1e-4, rtol=1e-4), f"mismatch (tile_h={th})"

    print("KERNEL_OK")
</pallas_src>

<mosaic_0001>
module attributes {stable_mosaic.version = 11 : i64} {
  func.func @kernel(%arg0: i32, %arg1: i32, %arg2: memref<2x20x26x128xf32, #tpu.memory_space<any>>, %arg3: memref<3x384x128xf32, #tpu.memory_space<vmem>>, %arg4: memref<1x128xf32, #tpu.memory_space<vmem>>, %arg5: memref<3x384x128xf32, #tpu.memory_space<vmem>>, %arg6: memref<1x128xf32, #tpu.memory_space<vmem>>, %arg7: memref<1x8x16x128xf32, #tpu.memory_space<vmem>>, %arg8: memref<2x12x26x128xf32, #tpu.memory_space<vmem>>, %arg9: memref<288x384xf32, #tpu.memory_space<vmem>>, %arg10: memref<160x384xf32, #tpu.memory_space<vmem>>, %arg11: memref<2x!tpu.dma_semaphore, #tpu.memory_space<semaphore_mem>>) attributes {dimension_semantics = [#tpu.dimension_semantics<parallel>, #tpu.dimension_semantics<arbitrary>], iteration_bounds = array<i64: 2, 2>, scalar_prefetch = 0 : i64, scratch_operands = 4 : i64, tpu.core_type = #tpu.core_type<tc>, window_params = [{}, {pipeline_mode = #tpu.pipeline_mode<synchronous>, transform_indices = @transform_1, window_bounds = array<i64: 3, 384, 128>}, {pipeline_mode = #tpu.pipeline_mode<synchronous>, transform_indices = @transform_2, window_bounds = array<i64: 1, 128>}, {pipeline_mode = #tpu.pipeline_mode<synchronous>, transform_indices = @transform_3, window_bounds = array<i64: 3, 384, 128>}, {pipeline_mode = #tpu.pipeline_mode<synchronous>, transform_indices = @transform_4, window_bounds = array<i64: 1, 128>}, {transform_indices = @transform_5, window_bounds = array<i64: 1, 8, 16, 128>}]} {
    %c2_i32 = arith.constant 2 : i32
    %c0_i32 = arith.constant 0 : i32
    %0 = arith.cmpi eq, %c2_i32, %c0_i32 : i32
    %c1_i32 = arith.constant 1 : i32
    %1 = arith.select %0, %c1_i32, %c2_i32 : i32
    %2 = arith.remsi %arg1, %1 : i32
    %c0_i32_0 = arith.constant 0 : i32
    %3 = arith.cmpi ne, %2, %c0_i32_0 : i32
    %c0_i32_1 = arith.constant 0 : i32
    %4 = arith.cmpi slt, %2, %c0_i32_1 : i32
    %c0_i32_2 = arith.constant 0 : i32
    %5 = arith.cmpi slt, %1, %c0_i32_2 : i32
    %6 = arith.xori %4, %5 : i1
    %7 = arith.andi %6, %3 : i1
    %8 = arith.addi %2, %1 : i32
    %9 = arith.select %7, %8, %2 : i32
    %c0_i32_3 = arith.constant 0 : i32
    %10 = arith.cmpi eq, %arg1, %c0_i32_3 : i32
    %11 = arith.extui %10 : i1 to i32
    %c0_i32_4 = arith.constant 0 : i32
    %12 = arith.cmpi ne, %11, %c0_i32_4 : i32
    scf.if %12 {
      %c0_i32_91 = arith.constant 0 : i32
      %c0_i32_92 = arith.constant 0 : i32
      %c0_i32_93 = arith.constant 0 : i32
      %c0_i32_94 = arith.constant 0 : i32
      %c0_i32_95 = arith.constant 0 : i32
      %118 = tpu.memref_slice %arg2[%arg0, %c0_i32_93, %c0_i32_94, %c0_i32_95] : memref<2x20x26x128xf32, #tpu.memory_space<any>> -> memref<1x12x26x128xf32, #tpu.memory_space<any>>
      %119 = tpu.memref_squeeze %118 : memref<1x12x26x128xf32, #tpu.memory_space<any>> -> memref<12x26x128xf32, #tpu.memory_space<any>>
      %c0_i32_96 = arith.constant 0 : i32
      %c0_i32_97 = arith.constant 0 : i32
      %c0_i32_98 = arith.constant 0 : i32
      %120 = tpu.memref_slice %arg8[%c0_i32_91, %c0_i32_96, %c0_i32_97, %c0_i32_98] : memref<2x12x26x128xf32, #tpu.memory_space<vmem>> -> memref<1x12x26x128xf32, #tpu.memory_space<vmem>>
      %121 = tpu.memref_squeeze %120 : memref<1x12x26x128xf32, #tpu.memory_space<vmem>> -> memref<12x26x128xf32, #tpu.memory_space<vmem>>
      %122 = tpu.memref_slice %arg11[%c0_i32_92] : memref<2x!tpu.dma_semaphore, #tpu.memory_space<semaphore_mem>> -> memref<1x!tpu.dma_semaphore, #tpu.memory_space<semaphore_mem>>
      %123 = tpu.memref_squeeze %122 : memref<1x!tpu.dma_semaphore, #tpu.memory_space<semaphore_mem>> -> memref<!tpu.dma_semaphore, #tpu.memory_space<semaphore_mem>>
      tpu.enqueue_dma source(%119 : memref<12x26x128xf32, #tpu.memory_space<any>>) target(%121 : memref<12x26x128xf32, #tpu.memory_space<vmem>>) target_semaphore(%123 : memref<!tpu.dma_semaphore, #tpu.memory_space<semaphore_mem>>)
    } else {
    }
    %c8_i32 = arith.constant 8 : i32
    %13 = arith.muli %arg1, %c8_i32 : i32
    %c0_i32_5 = arith.constant 0 : i32
    %c0_i32_6 = arith.constant 0 : i32
    %14 = tpu.memref_slice %arg2[%arg0, %13, %c0_i32_5, %c0_i32_6] : memref<2x20x26x128xf32, #tpu.memory_space<any>> -> memref<1x12x26x128xf32, #tpu.memory_space<any>>
    %15 = tpu.memref_squeeze %14 : memref<1x12x26x128xf32, #tpu.memory_space<any>> -> memref<12x26x128xf32, #tpu.memory_space<any>>
    %c0_i32_7 = arith.constant 0 : i32
    %c0_i32_8 = arith.constant 0 : i32
    %c0_i32_9 = arith.constant 0 : i32
    %16 = tpu.memref_slice %arg8[%9, %c0_i32_7, %c0_i32_8, %c0_i32_9] : memref<2x12x26x128xf32, #tpu.memory_space<vmem>> -> memref<1x12x26x128xf32, #tpu.memory_space<vmem>>
    %17 = tpu.memref_squeeze %16 : memref<1x12x26x128xf32, #tpu.memory_space<vmem>> -> memref<12x26x128xf32, #tpu.memory_space<vmem>>
    %18 = tpu.memref_slice %arg11[%9] : memref<2x!tpu.dma_semaphore, #tpu.memory_space<semaphore_mem>> -> memref<1x!tpu.dma_semaphore, #tpu.memory_space<semaphore_mem>>
    %19 = tpu.memref_squeeze %18 : memref<1x!tpu.dma_semaphore, #tpu.memory_space<semaphore_mem>> -> memref<!tpu.dma_semaphore, #tpu.memory_space<semaphore_mem>>
    tpu.wait_dma2 semaphore(%19 : memref<!tpu.dma_semaphore, #tpu.memory_space<semaphore_mem>>) src(%15 : memref<12x26x128xf32, #tpu.memory_space<any>>) dst(%17 : memref<12x26x128xf32, #tpu.memory_space<vmem>>)
    %c1_i32_10 = arith.constant 1 : i32
    %20 = arith.addi %arg1, %c1_i32_10 : i32
    %c2_i32_11 = arith.constant 2 : i32
    %21 = arith.cmpi slt, %20, %c2_i32_11 : i32
    %22 = arith.extui %21 : i1 to i32
    %c0_i32_12 = arith.constant 0 : i32
    %23 = arith.cmpi ne, %22, %c0_i32_12 : i32
    scf.if %23 {
      %c1_i32_91 = arith.constant 1 : i32
      %118 = arith.addi %arg1, %c1_i32_91 : i32
      %c1_i32_92 = arith.constant 1 : i32
      %119 = arith.addi %arg1, %c1_i32_92 : i32
      %c2_i32_93 = arith.constant 2 : i32
      %c0_i32_94 = arith.constant 0 : i32
      %120 = arith.cmpi eq, %c2_i32_93, %c0_i32_94 : i32
      %c1_i32_95 = arith.constant 1 : i32
      %121 = arith.select %120, %c1_i32_95, %c2_i32_93 : i32
      %122 = arith.remsi %119, %121 : i32
      %c0_i32_96 = arith.constant 0 : i32
      %123 = arith.cmpi ne, %122, %c0_i32_96 : i32
      %c0_i32_97 = arith.constant 0 : i32
      %124 = arith.cmpi slt, %122, %c0_i32_97 : i32
      %c0_i32_98 = arith.constant 0 : i32
      %125 = arith.cmpi slt, %121, %c0_i32_98 : i32
      %126 = arith.xori %124, %125 : i1
      %127 = arith.andi %126, %123 : i1
      %128 = arith.addi %122, %121 : i32
      %129 = arith.select %127, %128, %122 : i32
      %c8_i32_99 = arith.constant 8 : i32
      %130 = arith.muli %118, %c8_i32_99 : i32
      %c0_i32_100 = arith.constant 0 : i32
      %c0_i32_101 = arith.constant 0 : i32
      %131 = tpu.memref_slice %arg2[%arg0, %130, %c0_i32_100, %c0_i32_101] : memref<2x20x26x128xf32, #tpu.memory_space<any>> -> memref<1x12x26x128xf32, #tpu.memory_space<any>>
      %132 = tpu.memref_squeeze %131 : memref<1x12x26x128xf32, #tpu.memory_space<any>> -> memref<12x26x128xf32, #tpu.memory_space<any>>
      %c0_i32_102 = arith.constant 0 : i32
      %c0_i32_103 = arith.constant 0 : i32
      %c0_i32_104 = arith.constant 0 : i32
      %133 = tpu.memref_slice %arg8[%129, %c0_i32_102, %c0_i32_103, %c0_i32_104] : memref<2x12x26x128xf32, #tpu.memory_space<vmem>> -> memref<1x12x26x128xf32, #tpu.memory_space<vmem>>
      %134 = tpu.memref_squeeze %133 : memref<1x12x26x128xf32, #tpu.memory_space<vmem>> -> memref<12x26x128xf32, #tpu.memory_space<vmem>>
      %135 = tpu.memref_slice %arg11[%129] : memref<2x!tpu.dma_semaphore, #tpu.memory_space<semaphore_mem>> -> memref<1x!tpu.dma_semaphore, #tpu.memory_space<semaphore_mem>>
      %136 = tpu.memref_squeeze %135 : memref<1x!tpu.dma_semaphore, #tpu.memory_space<semaphore_mem>> -> memref<!tpu.dma_semaphore, #tpu.memory_space<semaphore_mem>>
      tpu.enqueue_dma source(%132 : memref<12x26x128xf32, #tpu.memory_space<any>>) target(%134 : memref<12x26x128xf32, #tpu.memory_space<vmem>>) target_semaphore(%136 : memref<!tpu.dma_semaphore, #tpu.memory_space<semaphore_mem>>)
    } else {
    }
    %c0_i32_13 = arith.constant 0 : i32
    %c0_i32_14 = arith.constant 0 : i32
    %c0_i32_15 = arith.constant 0 : i32
    %24 = tpu.memref_slice %arg8[%9, %c0_i32_13, %c0_i32_14, %c0_i32_15] : memref<2x12x26x128xf32, #tpu.memory_space<vmem>> -> memref<1x12x26x128xf32, #tpu.memory_space<vmem>>
    %25 = tpu.memref_squeeze %24 : memref<1x12x26x128xf32, #tpu.memory_space<vmem>> -> memref<12x26x128xf32, #tpu.memory_space<vmem>>
    %c0 = arith.constant 0 : index
    %c0_16 = arith.constant 0 : index
    %c0_17 = arith.constant 0 : index
    %26 = vector.load %25[%c0, %c0_16, %c0_17] : memref<12x26x128xf32, #tpu.memory_space<vmem>>, vector<12x24x128xf32>
    %27 = vector.shape_cast %26 : vector<12x24x128xf32> to vector<288x128xf32>
    %c0_18 = arith.constant 0 : index
    %c0_19 = arith.constant 0 : index
    %28 = vector.load %arg9[%c0_18, %c0_19] : memref<288x384xf32, #tpu.memory_space<vmem>>, vector<288x128xf32>
    tpu.vector_store %arg9[%c0_18, %c0_19], %27 {strides = array<i32>} : memref<288x384xf32, #tpu.memory_space<vmem>>, vector<288x128xf32>,
    %c0_i32_20 = arith.constant 0 : i32
    %c0_i32_21 = arith.constant 0 : i32
    %c0_i32_22 = arith.constant 0 : i32
    %29 = tpu.memref_slice %arg8[%9, %c0_i32_20, %c0_i32_21, %c0_i32_22] : memref<2x12x26x128xf32, #tpu.memory_space<vmem>> -> memref<1x12x26x128xf32, #tpu.memory_space<vmem>>
    %30 = tpu.memref_squeeze %29 : memref<1x12x26x128xf32, #tpu.memory_space<vmem>> -> memref<12x26x128xf32, #tpu.memory_space<vmem>>
    %c0_23 = arith.constant 0 : index
    %c1 = arith.constant 1 : index
    %c0_24 = arith.constant 0 : index
    %31 = vector.load %30[%c0_23, %c1, %c0_24] : memref<12x26x128xf32, #tpu.memory_space<vmem>>, vector<12x24x128xf32>
    %32 = vector.shape_cast %31 : vector<12x24x128xf32> to vector<288x128xf32>
    %c0_25 = arith.constant 0 : index
    %c128 = arith.constant 128 : index
    %33 = vector.load %arg9[%c0_25, %c128] : memref<288x384xf32, #tpu.memory_space<vmem>>, vector<288x128xf32>
    tpu.vector_store %arg9[%c0_25, %c128], %32 {strides = array<i32>} : memref<288x384xf32, #tpu.memory_space<vmem>>, vector<288x128xf32>,
    %c0_i32_26 = arith.constant 0 : i32
    %c0_i32_27 = arith.constant 0 : i32
    %c0_i32_28 = arith.constant 0 : i32
    %34 = tpu.memref_slice %arg8[%9, %c0_i32_26, %c0_i32_27, %c0_i32_28] : memref<2x12x26x128xf32, #tpu.memory_space<vmem>> -> memref<1x12x26x128xf32, #tpu.memory_space<vmem>>
    %35 = tpu.memref_squeeze %34 : memref<1x12x26x128xf32, #tpu.memory_space<vmem>> -> memref<12x26x128xf32, #tpu.memory_space<vmem>>
    %c0_29 = arith.constant 0 : index
    %c2 = arith.constant 2 : index
    %c0_30 = arith.constant 0 : index
    %36 = vector.load %35[%c0_29, %c2, %c0_30] : memref<12x26x128xf32, #tpu.memory_space<vmem>>, vector<12x24x128xf32>
    %37 = vector.shape_cast %36 : vector<12x24x128xf32> to vector<288x128xf32>
    %c0_31 = arith.constant 0 : index
    %c256 = arith.constant 256 : index
    %38 = vector.load %arg9[%c0_31, %c256] : memref<288x384xf32, #tpu.memory_space<vmem>>, vector<288x128xf32>
    tpu.vector_store %arg9[%c0_31, %c256], %37 {strides = array<i32>} : memref<288x384xf32, #tpu.memory_space<vmem>>, vector<288x128xf32>,
    %c0_32 = arith.constant 0 : index
    %c0_33 = arith.constant 0 : index
    %39 = vector.load %arg9[%c0_32, %c0_33] : memref<288x384xf32, #tpu.memory_space<vmem>>, vector<240x384xf32>
    %c0_34 = arith.constant 0 : index
    %c0_35 = arith.constant 0 : index
    %c0_36 = arith.constant 0 : index
    %40 = vector.load %arg3[%c0_34, %c0_35, %c0_36] : memref<3x384x128xf32, #tpu.memory_space<vmem>>, vector<1x384x128xf32>
    %41 = vector.shape_cast %40 : vector<1x384x128xf32> to vector<384x128xf32>
    %cst = arith.constant dense<0.000000e+00> : vector<240x128xf32>
    %42 = tpu.matmul %39, %41, %cst {dimension_numbers = #tpu.dot_dimension_numbers<[1], [0], [0], [1], [0, 0, 1, 1], [], []>} : vector<240x384xf32>, vector<384x128xf32>, vector<240x128xf32> -> vector<240x128xf32>
    %c24 = arith.constant 24 : index
    %c0_37 = arith.constant 0 : index
    %43 = vector.load %arg9[%c24, %c0_37] : memref<288x384xf32, #tpu.memory_space<vmem>>, vector<240x384xf32>
    %c1_38 = arith.constant 1 : index
    %c0_39 = arith.constant 0 : index
    %c0_40 = arith.constant 0 : index
    %44 = vector.load %arg3[%c1_38, %c0_39, %c0_40] : memref<3x384x128xf32, #tpu.memory_space<vmem>>, vector<1x384x128xf32>
    %45 = vector.shape_cast %44 : vector<1x384x128xf32> to vector<384x128xf32>
    %cst_41 = arith.constant dense<0.000000e+00> : vector<240x128xf32>
    %46 = tpu.matmul %43, %45, %cst_41 {dimension_numbers = #tpu.dot_dimension_numbers<[1], [0], [0], [1], [0, 0, 1, 1], [], []>} : vector<240x384xf32>, vector<384x128xf32>, vector<240x128xf32> -> vector<240x128xf32>
    %47 = arith.addf %42, %46 : vector<240x128xf32>
    %c48 = arith.constant 48 : index
    %c0_42 = arith.constant 0 : index
    %48 = vector.load %arg9[%c48, %c0_42] : memref<288x384xf32, #tpu.memory_space<vmem>>, vector<240x384xf32>
    %c2_43 = arith.constant 2 : index
    %c0_44 = arith.constant 0 : index
    %c0_45 = arith.constant 0 : index
    %49 = vector.load %arg3[%c2_43, %c0_44, %c0_45] : memref<3x384x128xf32, #tpu.memory_space<vmem>>, vector<1x384x128xf32>
    %50 = vector.shape_cast %49 : vector<1x384x128xf32> to vector<384x128xf32>
    %cst_46 = arith.constant dense<0.000000e+00> : vector<240x128xf32>
    %51 = tpu.matmul %48, %50, %cst_46 {dimension_numbers = #tpu.dot_dimension_numbers<[1], [0], [0], [1], [0, 0, 1, 1], [], []>} : vector<240x384xf32>, vector<384x128xf32>, vector<240x128xf32> -> vector<240x128xf32>
    %52 = arith.addf %47, %51 : vector<240x128xf32>
    %c0_47 = arith.constant 0 : index
    %c0_48 = arith.constant 0 : index
    %53 = vector.load %arg4[%c0_47, %c0_48] : memref<1x128xf32, #tpu.memory_space<vmem>>, vector<1x128xf32>
    %54 = vector.broadcast %53 : vector<1x128xf32> to vector<240x128xf32>
    %55 = arith.addf %52, %54 : vector<240x128xf32>
    %cst_49 = arith.constant 0.000000e+00 : f32
    %56 = vector.broadcast %cst_49 : f32 to vector<240x128xf32>
    %57 = arith.maximumf %55, %56 : vector<240x128xf32>
    %58 = vector.shape_cast %57 : vector<240x128xf32> to vector<10x24x128xf32>
    %59 = tpu.iota {dimensions = array<i32: 0>} : vector<10x24x1xi32>
    %60 = tpu.iota {dimensions = array<i32: 1>} : vector<10x24x1xi32>
    %c8_i32_50 = arith.constant 8 : i32
    %61 = arith.muli %arg1, %c8_i32_50 : i32
    %62 = vector.broadcast %61 : i32 to vector<10x24x1xi32>
    %63 = arith.addi %62, %59 : vector<10x24x1xi32>
    %c1_i32_51 = arith.constant 1 : i32
    %64 = vector.broadcast %c1_i32_51 : i32 to vector<10x24x1xi32>
    %65 = arith.subi %63, %64 : vector<10x24x1xi32>
    %c0_i32_52 = arith.constant 0 : i32
    %66 = vector.broadcast %c0_i32_52 : i32 to vector<10x24x1xi32>
    %67 = arith.cmpi sge, %65, %66 : vector<10x24x1xi32>
    %c16_i32 = arith.constant 16 : i32
    %68 = vector.broadcast %c16_i32 : i32 to vector<10x24x1xi32>
    %69 = arith.cmpi slt, %65, %68 : vector<10x24x1xi32>
    %70 = arith.andi %67, %69 : vector<10x24x1xi1>
    %c1_i32_53 = arith.constant 1 : i32
    %71 = vector.broadcast %c1_i32_53 : i32 to vector<10x24x1xi32>
    %72 = arith.cmpi sge, %60, %71 : vector<10x24x1xi32>
    %73 = arith.andi %70, %72 : vector<10x24x1xi1>
    %c16_i32_54 = arith.constant 16 : i32
    %74 = vector.broadcast %c16_i32_54 : i32 to vector<10x24x1xi32>
    %75 = arith.cmpi sle, %60, %74 : vector<10x24x1xi32>
    %76 = arith.andi %73, %75 : vector<10x24x1xi1>
    %cst_55 = arith.constant 0.000000e+00 : f32
    %77 = vector.shape_cast %76 : vector<10x24x1xi1> to vector<10x24x1xi1>
    %78 = vector.broadcast %77 : vector<10x24x1xi1> to vector<10x24x128xi1>
    %79 = vector.broadcast %cst_55 : f32 to vector<10x24x128xf32>
    %80 = arith.select %78, %58, %79 : vector<10x24x128xi1>, vector<10x24x128xf32>
    %81 = vector.extract_strided_slice %80 {offsets = [0, 0, 0], sizes = [10, 16, 128], strides = [1, 1, 1]} : vector<10x24x128xf32> to vector<10x16x128xf32>
    %82 = vector.shape_cast %81 : vector<10x16x128xf32> to vector<160x128xf32>
    %c0_56 = arith.constant 0 : index
    %c0_57 = arith.constant 0 : index
    %83 = vector.load %arg10[%c0_56, %c0_57] : memref<160x384xf32, #tpu.memory_space<vmem>>, vector<160x128xf32>
    tpu.vector_store %arg10[%c0_56, %c0_57], %82 {strides = array<i32>} : memref<160x384xf32, #tpu.memory_space<vmem>>, vector<160x128xf32>,
    %84 = vector.extract_strided_slice %80 {offsets = [0, 1, 0], sizes = [10, 16, 128], strides = [1, 1, 1]} : vector<10x24x128xf32> to vector<10x16x128xf32>
    %85 = vector.shape_cast %84 : vector<10x16x128xf32> to vector<160x128xf32>
    %c0_58 = arith.constant 0 : index
    %c128_59 = arith.constant 128 : index
    %86 = vector.load %arg10[%c0_58, %c128_59] : memref<160x384xf32, #tpu.memory_space<vmem>>, vector<160x128xf32>
    tpu.vector_store %arg10[%c0_58, %c128_59], %85 {strides = array<i32>} : memref<160x384xf32, #tpu.memory_space<vmem>>, vector<160x128xf32>,
    %87 = vector.extract_strided_slice %80 {offsets = [0, 2, 0], sizes = [10, 16, 128], strides = [1, 1, 1]} : vector<10x24x128xf32> to vector<10x16x128xf32>
    %88 = vector.shape_cast %87 : vector<10x16x128xf32> to vector<160x128xf32>
    %c0_60 = arith.constant 0 : index
    %c256_61 = arith.constant 256 : index
    %89 = vector.load %arg10[%c0_60, %c256_61] : memref<160x384xf32, #tpu.memory_space<vmem>>, vector<160x128xf32>
    tpu.vector_store %arg10[%c0_60, %c256_61], %88 {strides = array<i32>} : memref<160x384xf32, #tpu.memory_space<vmem>>, vector<160x128xf32>,
    %c0_62 = arith.constant 0 : index
    %c0_63 = arith.constant 0 : index
    %90 = vector.load %arg10[%c0_62, %c0_63] : memref<160x384xf32, #tpu.memory_space<vmem>>, vector<128x384xf32>
    %c0_64 = arith.constant 0 : index
    %c0_65 = arith.constant 0 : index
    %c0_66 = arith.constant 0 : index
    %91 = vector.load %arg5[%c0_64, %c0_65, %c0_66] : memref<3x384x128xf32, #tpu.memory_space<vmem>>, vector<1x384x128xf32>
    %92 = vector.shape_cast %91 : vector<1x384x128xf32> to vector<384x128xf32>
    %cst_67 = arith.constant dense<0.000000e+00> : vector<128x128xf32>
    %93 = tpu.matmul %90, %92, %cst_67 {dimension_numbers = #tpu.dot_dimension_numbers<[1], [0], [0], [1], [0, 0, 1, 1], [], []>} : vector<128x384xf32>, vector<384x128xf32>, vector<128x128xf32> -> vector<128x128xf32>
    %c16 = arith.constant 16 : index
    %c0_68 = arith.constant 0 : index
    %94 = vector.load %arg10[%c16, %c0_68] : memref<160x384xf32, #tpu.memory_space<vmem>>, vector<128x384xf32>
    %c1_69 = arith.constant 1 : index
    %c0_70 = arith.constant 0 : index
    %c0_71 = arith.constant 0 : index
    %95 = vector.load %arg5[%c1_69, %c0_70, %c0_71] : memref<3x384x128xf32, #tpu.memory_space<vmem>>, vector<1x384x128xf32>
    %96 = vector.shape_cast %95 : vector<1x384x128xf32> to vector<384x128xf32>
    %cst_72 = arith.constant dense<0.000000e+00> : vector<128x128xf32>
    %97 = tpu.matmul %94, %96, %cst_72 {dimension_numbers = #tpu.dot_dimension_numbers<[1], [0], [0], [1], [0, 0, 1, 1], [], []>} : vector<128x384xf32>, vector<384x128xf32>, vector<128x128xf32> -> vector<128x128xf32>
    %98 = arith.addf %93, %97 : vector<128x128xf32>
    %c32 = arith.constant 32 : index
    %c0_73 = arith.constant 0 : index
    %99 = vector.load %arg10[%c32, %c0_73] : memref<160x384xf32, #tpu.memory_space<vmem>>, vector<128x384xf32>
    %c2_74 = arith.constant 2 : index
    %c0_75 = arith.constant 0 : index
    %c0_76 = arith.constant 0 : index
    %100 = vector.load %arg5[%c2_74, %c0_75, %c0_76] : memref<3x384x128xf32, #tpu.memory_space<vmem>>, vector<1x384x128xf32>
    %101 = vector.shape_cast %100 : vector<1x384x128xf32> to vector<384x128xf32>
    %cst_77 = arith.constant dense<0.000000e+00> : vector<128x128xf32>
    %102 = tpu.matmul %99, %101, %cst_77 {dimension_numbers = #tpu.dot_dimension_numbers<[1], [0], [0], [1], [0, 0, 1, 1], [], []>} : vector<128x384xf32>, vector<384x128xf32>, vector<128x128xf32> -> vector<128x128xf32>
    %103 = arith.addf %98, %102 : vector<128x128xf32>
    %c0_i32_78 = arith.constant 0 : i32
    %c0_i32_79 = arith.constant 0 : i32
    %c0_i32_80 = arith.constant 0 : i32
    %104 = tpu.memref_slice %arg8[%9, %c0_i32_78, %c0_i32_79, %c0_i32_80] : memref<2x12x26x128xf32, #tpu.memory_space<vmem>> -> memref<1x12x26x128xf32, #tpu.memory_space<vmem>>
    %105 = tpu.memref_squeeze %104 : memref<1x12x26x128xf32, #tpu.memory_space<vmem>> -> memref<12x26x128xf32, #tpu.memory_space<vmem>>
    %c2_81 = arith.constant 2 : index
    %c2_82 = arith.constant 2 : index
    %c0_83 = arith.constant 0 : index
    %106 = vector.load %105[%c2_81, %c2_82, %c0_83] : memref<12x26x128xf32, #tpu.memory_space<vmem>>, vector<8x16x128xf32>
    %107 = vector.shape_cast %106 : vector<8x16x128xf32> to vector<128x128xf32>
    %c0_84 = arith.constant 0 : index
    %c0_85 = arith.constant 0 : index
    %108 = vector.load %arg6[%c0_84, %c0_85] : memref<1x128xf32, #tpu.memory_space<vmem>>, vector<1x128xf32>
    %109 = vector.broadcast %108 : vector<1x128xf32> to vector<128x128xf32>
    %110 = arith.addf %103, %109 : vector<128x128xf32>
    %111 = arith.addf %110, %107 : vector<128x128xf32>
    %cst_86 = arith.constant 0.000000e+00 : f32
    %112 = vector.broadcast %cst_86 : f32 to vector<128x128xf32>
    %113 = arith.maximumf %111, %112 : vector<128x128xf32>
    %114 = vector.shape_cast %113 : vector<128x128xf32> to vector<8x16x128xf32>
    %c0_87 = arith.constant 0 : index
    %c0_88 = arith.constant 0 : index
    %c0_89 = arith.constant 0 : index
    %c0_90 = arith.constant 0 : index
    %115 = vector.load %arg7[%c0_87, %c0_88, %c0_89, %c0_90] : memref<1x8x16x128xf32, #tpu.memory_space<vmem>>, vector<1x8x16x128xf32>
    %116 = vector.shape_cast %115 : vector<1x8x16x128xf32> to vector<8x16x128xf32>
    %117 = vector.shape_cast %114 : vector<8x16x128xf32> to vector<1x8x16x128xf32>
    tpu.vector_store %arg7[%c0_87, %c0_88, %c0_89, %c0_90], %117 {strides = array<i32>} : memref<1x8x16x128xf32, #tpu.memory_space<vmem>>, vector<1x8x16x128xf32>,
    return
  }
  func.func @transform_1(%arg0: i32, %arg1: i32) -> (i32, i32, i32) {
    %c0_i32 = arith.constant 0 : i32
    %c0_i32_0 = arith.constant 0 : i32
    %c0_i32_1 = arith.constant 0 : i32
    %c0_i32_2 = arith.constant 0 : i32
    return %c0_i32, %c0_i32_0, %c0_i32_1 : i32, i32, i32
  }
  func.func @transform_2(%arg0: i32, %arg1: i32) -> (i32, i32) {
    %c0_i32 = arith.constant 0 : i32
    %c0_i32_0 = arith.constant 0 : i32
    %c0_i32_1 = arith.constant 0 : i32
    return %c0_i32, %c0_i32_0 : i32, i32
  }
  func.func @transform_3(%arg0: i32, %arg1: i32) -> (i32, i32, i32) {
    %c0_i32 = arith.constant 0 : i32
    %c0_i32_0 = arith.constant 0 : i32
    %c0_i32_1 = arith.constant 0 : i32
    %c0_i32_2 = arith.constant 0 : i32
    return %c0_i32, %c0_i32_0, %c0_i32_1 : i32, i32, i32
  }
  func.func @transform_4(%arg0: i32, %arg1: i32) -> (i32, i32) {
    %c0_i32 = arith.constant 0 : i32
    %c0_i32_0 = arith.constant 0 : i32
    %c0_i32_1 = arith.constant 0 : i32
    return %c0_i32, %c0_i32_0 : i32, i32
  }
  func.func @transform_5(%arg0: i32, %arg1: i32) -> (i32, i32, i32, i32) {
    %c0_i32 = arith.constant 0 : i32
    %c0_i32_0 = arith.constant 0 : i32
    %c0_i32_1 = arith.constant 0 : i32
    return %arg0, %arg1, %c0_i32, %c0_i32_0 : i32, i32, i32, i32
  }
}

</mosaic_0001>

<llo_original>
// kernel: tpu_custom_call.1
$region0: #{tpu_custom_call.1}
  #allocation0 [shape = 'u32[]', space=smem, size = 0x4, offset = 0x4, fixed_abs, tag = 'smem constant byte address 0x4 - core index']
  #allocation1 [shape = 'u32[144,128]{1,0:T(1,128)}', space=vmem, size = 0x12000, scoped, tag = 'internal scratch']
  #allocation2 [shape = 'f32[2,12,26,128]{3,2,1,0:T(8,128)}', space=vmem, size = 0x60000, scoped, tag = 'scratch operand']
  #allocation3 [shape = 'f32[288,384]{1,0:T(8,128)}', space=vmem, size = 0x6c000, scoped, tag = 'scratch operand']
  #allocation4 [shape = 'f32[160,384]{1,0:T(8,128)}', space=vmem, size = 0x3c000, scoped, tag = 'scratch operand']
  #allocation5 [shape = 's32[2]{0}', space=sflag, size = 0x8, scoped, tag = 'scratch operand']
  #allocation8 [shape = 's32[]', space=sflag, size = 0x4, offset = 0, fixed_abs, tag = 'sflag constant byte address 0x0 - dummy sync flag']
  #allocation9 [shape = 's32[]', space=sflag, size = 0x4, offset = 0, fixed_abs, tag = 'sflag constant byte address 0x0 - dummy sync flag']
  %s0 = inlined_call_operand.vmem [shape: f32[2,20,26,128], index: 0, kind: input, shape index: {}]
  %s1 = inlined_call_operand.vmem [shape: f32[3,384,128], index: 1, kind: input, shape index: {}]
  %s2 = inlined_call_operand.vmem [shape: f32[1,128], index: 2, kind: input, shape index: {}]
  %s3 = inlined_call_operand.vmem [shape: f32[3,384,128], index: 3, kind: input, shape index: {}]
  %s4 = inlined_call_operand.vmem [shape: f32[1,128], index: 4, kind: input, shape index: {}]
  %s5 = inlined_call_operand.hbm [shape: f32[2,16,16,128], index: 5, kind: output, shape index: {}]
  %s6 = sld [smem:[#allocation0]]
  $region131: #{tpu_custom_call.1} parent=0
    _
  %s8 = ssub.s32 1, %s6
  %s9 = scalar_select 0, %s8, %s6
  $region1: #{tpu_custom_call.1} parent=0
    #allocation6 [shape = 'u8[131072]{0}', space=vmem, size = 0x20000, scoped, tag = 'output window, operand 0']
    #allocation7 [shape = 's32[2]{0}', space=sflag, size = 0x8, scoped, tag = 'scoped memory for tpu_custom_call.1']
    %10 = vsyncpa [#allocation7], 0
    %s11 = scalar_lea.sflag [#allocation7], 1
    %12 = vsyncpa %s11, 0
    loop: start=0, step=1, limit=6
    $region2: #{tpu_custom_call.1} parent=1 // loop_pre_header
      _
    $region3: #{tpu_custom_call.1} parent=1 // loop_header
      %s14 = sphi 0, %s18
      %p15 = scmp.ge.s32.totalorder %s14, 6
      %s21 = sphi 0, %s33
      %s22 = sphi 0, %s29
      %s23 = sphi 0, %s21
      %s24 = sphi 0, %s22
      %s25 = sphi 0, %s23
      %s26 = sphi 0, %s24
      %s34 = sphi 0, %s34
      %s36 = sphi 0, %s34
      %s37 = sphi 0, %s36
      %s51 = sphi 0, %s37
      %s55 = sphi 0, %s55
      %s57 = sphi 0, %s55
      %s58 = sphi 0, %s57
      %s72 = sphi 0, %s58
      %s76 = sphi 0, %s76
      %s78 = sphi 0, %s76
      %s79 = sphi 0, %s78
      %s93 = sphi 0, %s79
      %s97 = sphi 0, %s97
      %s99 = sphi 0, %s97
      %s100 = sphi 0, %s99
      %s114 = sphi 0, %s100
      %s122 = sphi 0, %s124
      %s125 = sphi 0, %s122
      %s126 = sphi 0, %s125
      %s142 = sphi 0, %s126
    $region4: #{tpu_custom_call.1} parent=1 // loop_header_branch
      %17 = sbr.rel (%p15) target = $region8
    $region5: #{tpu_custom_call.1} parent=1 // loop_body
      %s19 = ssub.s32 %s14, 1
      %s20 = ssub.s32 %s14, 2
      %s27 = sadd.s32 1, %s22
      %p28 = scmp.ge.s32.totalorder %s27, 2
      %s29 = scalar_select %p28, 0, %s27
      %s30 = sadd.s32 1, %s21
      %s31 = scalar_select %p28, %s30, %s21
      %p32 = scmp.ge.s32.totalorder %s31, 2
      %s33 = scalar_select %p32, 0, %s31
      %s35 = sadd.s32 %s34, 1
      %p38 = scmp.eq.s32.totalorder %s14, 3
      %p39 = scmp.ne.s32.totalorder %s34, %s36
      %p40 = scmp.eq.s32.totalorder %s14, 0
      %p41 = por %p39, %p40
      %p42 = scmp.ne.s32.totalorder %s34, %s36
      %p43 = scmp.eq.s32.totalorder %s19, 3
      %p44 = por %p42, %p43
      %p45 = scmp.ne.s32.totalorder %s36, %s37
      %p46 = scmp.eq.s32.totalorder %s19, 0
      %p47 = por %p45, %p46
      %p48 = scmp.ne.s32.totalorder %s36, %s37
      %p49 = scmp.eq.s32.totalorder %s20, 3
      %p50 = por %p48, %p49
      %p52 = scmp.ne.s32.totalorder %s37, %s51
      %p53 = scmp.eq.s32.totalorder %s20, 0
      %p54 = por %p52, %p53
      %s56 = sadd.s32 %s55, 1
      %p59 = scmp.eq.s32.totalorder %s14, 3
      %p60 = scmp.ne.s32.totalorder %s55, %s57
      %p61 = scmp.eq.s32.totalorder %s14, 0
      %p62 = por %p60, %p61
      %p63 = scmp.ne.s32.totalorder %s55, %s57
      %p64 = scmp.eq.s32.totalorder %s19, 3
      %p65 = por %p63, %p64
      %p66 = scmp.ne.s32.totalorder %s57, %s58
      %p67 = scmp.eq.s32.totalorder %s19, 0
      %p68 = por %p66, %p67
      %p69 = scmp.ne.s32.totalorder %s57, %s58
      %p70 = scmp.eq.s32.totalorder %s20, 3
      %p71 = por %p69, %p70
      %p73 = scmp.ne.s32.totalorder %s58, %s72
      %p74 = scmp.eq.s32.totalorder %s20, 0
      %p75 = por %p73, %p74
      %s77 = sadd.s32 %s76, 1
      %p80 = scmp.eq.s32.totalorder %s14, 3
      %p81 = scmp.ne.s32.totalorder %s76, %s78
      %p82 = scmp.eq.s32.totalorder %s14, 0
      %p83 = por %p81, %p82
      %p84 = scmp.ne.s32.totalorder %s76, %s78
      %p85 = scmp.eq.s32.totalorder %s19, 3
      %p86 = por %p84, %p85
      %p87 = scmp.ne.s32.totalorder %s78, %s79
      %p88 = scmp.eq.s32.totalorder %s19, 0
      %p89 = por %p87, %p88
      %p90 = scmp.ne.s32.totalorder %s78, %s79
      %p91 = scmp.eq.s32.totalorder %s20, 3
      %p92 = por %p90, %p91
      %p94 = scmp.ne.s32.totalorder %s79, %s93
      %p95 = scmp.eq.s32.totalorder %s20, 0
      %p96 = por %p94, %p95
      %s98 = sadd.s32 %s97, 1
      %p101 = scmp.eq.s32.totalorder %s14, 3
      %p102 = scmp.ne.s32.totalorder %s97, %s99
      %p103 = scmp.eq.s32.totalorder %s14, 0
      %p104 = por %p102, %p103
      %p105 = scmp.ne.s32.totalorder %s97, %s99
      %p106 = scmp.eq.s32.totalorder %s19, 3
      %p107 = por %p105, %p106
      %p108 = scmp.ne.s32.totalorder %s99, %s100
      %p109 = scmp.eq.s32.totalorder %s19, 0
      %p110 = por %p108, %p109
      %p111 = scmp.ne.s32.totalorder %s99, %s100
      %p112 = scmp.eq.s32.totalorder %s20, 3
      %p113 = por %p111, %p112
      %p115 = scmp.ne.s32.totalorder %s100, %s114
      %p116 = scmp.eq.s32.totalorder %s20, 0
      %p117 = por %p115, %p116
      %s118 = ssub.s32 %s21, %s33
      %s119 = ssub.s32 %s22, %s29
      %s120 = sor.u32 %s118, %s119
      %p121 = scmp.eq.s32.totalorder %s120, 0
      %s123 = sadd.s32 %s122, 1
      %s124 = scalar_select %p121, %s122, %s123
      %p127 = pneg %p121
      %p128 = scmp.eq.s32.totalorder %s14, 3
      %p129 = por %p127, %p128
      %p130 = scmp.ne.s32.totalorder %s122, %s125
      %p131 = scmp.eq.s32.totalorder %s14, 0
      %p132 = por %p130, %p131
      %p133 = scmp.ne.s32.totalorder %s122, %s125
      %p134 = scmp.eq.s32.totalorder %s19, 3
      %p135 = por %p133, %p134
      %p136 = scmp.ne.s32.totalorder %s125, %s126
      %p137 = scmp.eq.s32.totalorder %s19, 0
      %p138 = por %p136, %p137
      %p139 = scmp.ne.s32.totalorder %s125, %s126
      %p140 = scmp.eq.s32.totalorder %s20, 3
      %p141 = por %p139, %p140
      %p143 = scmp.ne.s32.totalorder %s126, %s142
      %p144 = scmp.eq.s32.totalorder %s20, 0
      %p145 = por %p143, %p144
      %p146 = scmp.le.s32.totalorder 1, %s14
      %p147 = scmp.lt.s32.totalorder %s14, 5
      %p148 = pnand %p146, %p147
      %p149 = pneg %p148
      // Predicated region
      $region9: #{tpu_custom_call.1} parent=5 // pred_check
        _
      $region10: #{tpu_custom_call.1} parent=5 // pred_check_branch
        %151 = sbr.rel (%p148) target = $region12
      $region11: #{tpu_custom_call.1} parent=5 // pred_region
        %s152 = ssub.s32 %s14, 1
        // Predicated region
        $region13: #{tpu_custom_call.1} parent=11 // pred_check
          %p153 = pneg %p47
        $region14: #{tpu_custom_call.1} parent=11 // pred_check_branch
          %155 = sbr.rel (%p153) target = $region16
        $region15: #{tpu_custom_call.1} parent=11 // pred_region
          _
        $region16: #{tpu_custom_call.1} parent=11 // pred_fallthru
          _
        // Predicated region
        $region17: #{tpu_custom_call.1} parent=11 // pred_check
          %p156 = pneg %p68
        $region18: #{tpu_custom_call.1} parent=11 // pred_check_branch
          %158 = sbr.rel (%p156) target = $region20
        $region19: #{tpu_custom_call.1} parent=11 // pred_region
          _
        $region20: #{tpu_custom_call.1} parent=11 // pred_fallthru
          _
        // Predicated region
        $region21: #{tpu_custom_call.1} parent=11 // pred_check
          %p159 = pneg %p89
        $region22: #{tpu_custom_call.1} parent=11 // pred_check_branch
          %161 = sbr.rel (%p159) target = $region24
        $region23: #{tpu_custom_call.1} parent=11 // pred_region
          _
        $region24: #{tpu_custom_call.1} parent=11 // pred_fallthru
          _
        // Predicated region
        $region25: #{tpu_custom_call.1} parent=11 // pred_check
          %p162 = pneg %p110
        $region26: #{tpu_custom_call.1} parent=11 // pred_check_branch
          %164 = sbr.rel (%p162) target = $region28
        $region27: #{tpu_custom_call.1} parent=11 // pred_region
          _
        $region28: #{tpu_custom_call.1} parent=11 // pred_fallthru
          _
      $region12: #{tpu_custom_call.1} parent=5 // pred_fallthru
        _
      %p165 = scmp.lt.s32.totalorder %s14, 4
      // Predicated region
      $region29: #{tpu_custom_call.1} parent=5 // pred_check
        %p166 = pneg %p165
      $region30: #{tpu_custom_call.1} parent=5 // pred_check_branch
        %168 = sbr.rel (%p166) target = $region32
      $region31: #{tpu_custom_call.1} parent=5 // pred_region
        _
      $region32: #{tpu_custom_call.1} parent=5 // pred_fallthru
        _
      %p169 = scmp.le.s32.totalorder 1, %s14
      %p170 = scmp.lt.s32.totalorder %s14, 5
      %p171 = pnand %p169, %p170
      %p172 = pneg %p171
      // Predicated region
      $region33: #{tpu_custom_call.1} parent=5 // pred_check
        _
      $region34: #{tpu_custom_call.1} parent=5 // pred_check_branch
        %174 = sbr.rel (%p171) target = $region36
      $region35: #{tpu_custom_call.1} parent=5 // pred_region
        %s175 = ssub.s32 %s14, 1
        %p176 = pneg %p47
        %p177 = pneg %p44
        %p178 = pneg %p68
        %p179 = pneg %p65
        %p180 = pneg %p89
        %p181 = pneg %p86
        %p182 = pneg %p110
        %p183 = pneg %p107
        %p184 = pneg %p138
        %p185 = pneg %p135
        %s186 = sand.u32 %s125, 1
        %s187 = scalar_lea.sflag [#allocation7], %s186
        %s188 = sand.u32 %s125, 1
        %s189 = smul.addr %s188, 128
        %s190 = scalar_lea.vmem [#allocation6], %s189
        %s191 = smul.u32 8, %s24
        %p192 = scmp.lt.s32.totalorder %s24, 0
        %s193 = ssub.s32 0, %s24
        %s194 = scalar_select %p192, %s193, %s24
        %s195 = sand.u32 %s194, 1
        %s196 = ssub.s32 0, %s195
        %s197 = scalar_select %p192, %s196, %s195
        %p198 = scmp.ne.s32.totalorder %s197, 0
        %p199 = scmp.lt.s32.totalorder %s197, 0
        %p200 = pnand %p199, %p198
        %p201 = pneg %p200
        %s202 = sadd.s32 %s197, 2
        %s203 = scalar_select %p201, %s202, %s197
        %p204 = scmp.eq.s32.totalorder %s24, 0
        // Predicated region
        $region37: #{tpu_custom_call.1} parent=35 // pred_check
          %p205 = pneg %p204
        $region38: #{tpu_custom_call.1} parent=35 // pred_check_branch
          %207 = sbr.rel (%p205) target = $region40
        $region39: #{tpu_custom_call.1} parent=35 // pred_region
          %s208 = smul.u32 %s23, 640
          %s209 = scalar_lea.vmem %s0, %s208
          %p211 = scmp.lt.u32.totalorder 26, 8
          %p212 = pneg %p211
          // Predicated region
          $region41: #{tpu_custom_call.1} parent=39 // pred_check
            _
          $region42: #{tpu_custom_call.1} parent=39 // pred_check_branch
            %214 = sbr.rel (%p211) target = $region44
          $region43: #{tpu_custom_call.1} parent=39 // pred_region
            %s251 = sand.u32 26, 7
            %p252 = scmp.eq.s32.totalorder %s251, 0
            %p253 = pneg %p252
            // Predicated region
            $region56: #{tpu_custom_call.1} parent=43 // pred_check
              _
            $region57: #{tpu_custom_call.1} parent=43 // pred_check_branch
              %255 = sbr.rel (%p252) target = $region59
            $region58: #{tpu_custom_call.1} parent=43 // pred_region
              %s256 = sand.u32 26, 7
              %s257 = ssub.s32 26, %s256
              %s258 = scalar_lea.vmem %s209, %s257
              %s259 = ssub.s32 26, %s256
              %s260 = scalar_lea.vmem [#allocation2], %s259
              loop: start=0, step=1, limit=1
              $region60: #{tpu_custom_call.1} parent=58 // loop_pre_header
                _
              $region61: #{tpu_custom_call.1} parent=58 // loop_header
                %s262 = sphi 0, %s266
                %p263 = scmp.ge.s32.totalorder %s262, 1
                %s267 = sphi %s209, %s209
                %s268 = sphi [#allocation2], [#allocation2]
              $region62: #{tpu_custom_call.1} parent=58 // loop_header_branch
                %265 = sbr.rel (%p263) target = $region66
              $region63: #{tpu_custom_call.1} parent=58 // loop_body
                %v269 = vld [vmem:[%s267] sm:$0xff]
                %270 = vst [vmem:[%s268] sm:$0xff] %v269
                %v271 = vld [vmem:[%s267 + $0x8] sm:$0xff]
                %272 = vst [vmem:[%s268 + $0x8] sm:$0xff] %v271
                %v273 = vld [vmem:[%s267 + $0x10] sm:$0xff]
                %274 = vst [vmem:[%s268 + $0x10] sm:$0xff] %v273
                %v275 = vld [vmem:[%s267 + $0x20] sm:$0xff]
                %276 = vst [vmem:[%s268 + $0x20] sm:$0xff] %v275
                %v277 = vld [vmem:[%s267 + $0x28] sm:$0xff]
                %278 = vst [vmem:[%s268 + $0x28] sm:$0xff] %v277
                %v279 = vld [vmem:[%s267 + $0x30] sm:$0xff]
                %280 = vst [vmem:[%s268 + $0x30] sm:$0xff] %v279
                %v281 = vld [vmem:[%s267 + $0x40] sm:$0xff]
                %282 = vst [vmem:[%s268 + $0x40] sm:$0xff] %v281
                %v283 = vld [vmem:[%s267 + $0x48] sm:$0xff]
                %284 = vst [vmem:[%s268 + $0x48] sm:$0xff] %v283
                %v285 = vld [vmem:[%s267 + $0x50] sm:$0xff]
                %286 = vst [vmem:[%s268 + $0x50] sm:$0xff] %v285
                %v287 = vld [vmem:[%s267 + $0x60] sm:$0xff]
                %288 = vst [vmem:[%s268 + $0x60] sm:$0xff] %v287
                %v289 = vld [vmem:[%s267 + $0x68] sm:$0xff]
                %290 = vst [vmem:[%s268 + $0x68] sm:$0xff] %v289
                %v291 = vld [vmem:[%s267 + $0x70] sm:$0xff]
                %292 = vst [vmem:[%s268 + $0x70] sm:$0xff] %v291
                %v293 = vld [vmem:[%s267 + $0x80] sm:$0xff]
                %294 = vst [vmem:[%s268 + $0x80] sm:$0xff] %v293
                %v295 = vld [vmem:[%s267 + $0x88] sm:$0xff]
                %296 = vst [vmem:[%s268 + $0x88] sm:$0xff] %v295
                %v297 = vld [vmem:[%s267 + $0x90] sm:$0xff]
                %298 = vst [vmem:[%s268 + $0x90] sm:$0xff] %v297
                %v299 = vld [vmem:[%s267 + $0xa0] sm:$0xff]
                %300 = vst [vmem:[%s268 + $0xa0] sm:$0xff] %v299
                %v301 = vld [vmem:[%s267 + $0xa8] sm:$0xff]
                %302 = vst [vmem:[%s268 + $0xa8] sm:$0xff] %v301
                %v303 = vld [vmem:[%s267 + $0xb0] sm:$0xff]
                %304 = vst [vmem:[%s268 + $0xb0] sm:$0xff] %v303
                %v305 = vld [vmem:[%s267 + $0xc0] sm:$0xff]
                %306 = vst [vmem:[%s268 + $0xc0] sm:$0xff] %v305
                %v307 = vld [vmem:[%s267 + $0xc8] sm:$0xff]
                %308 = vst [vmem:[%s268 + $0xc8] sm:$0xff] %v307
                %v309 = vld [vmem:[%s267 + $0xd0] sm:$0xff]
                %310 = vst [vmem:[%s268 + $0xd0] sm:$0xff] %v309
                %v311 = vld [vmem:[%s267 + $0xe0] sm:$0xff]
                %312 = vst [vmem:[%s268 + $0xe0] sm:$0xff] %v311
                %v313 = vld [vmem:[%s267 + $0xe8] sm:$0xff]
                %314 = vst [vmem:[%s268 + $0xe8] sm:$0xff] %v313
                %v315 = vld [vmem:[%s267 + $0xf0] sm:$0xff]
                %316 = vst [vmem:[%s268 + $0xf0] sm:$0xff] %v315
                %v317 = vld [vmem:[%s267 + $0x100] sm:$0xff]
                %318 = vst [vmem:[%s268 + $0x100] sm:$0xff] %v317
                %v319 = vld [vmem:[%s267 + $0x108] sm:$0xff]
                %320 = vst [vmem:[%s268 + $0x108] sm:$0xff] %v319
                %v321 = vld [vmem:[%s267 + $0x110] sm:$0xff]
                %322 = vst [vmem:[%s268 + $0x110] sm:$0xff] %v321
                %v323 = vld [vmem:[%s267 + $0x120] sm:$0xff]
                %324 = vst [vmem:[%s268 + $0x120] sm:$0xff] %v323
                %v325 = vld [vmem:[%s267 + $0x128] sm:$0xff]
                %326 = vst [vmem:[%s268 + $0x128] sm:$0xff] %v325
                %v327 = vld [vmem:[%s267 + $0x130] sm:$0xff]
                %328 = vst [vmem:[%s268 + $0x130] sm:$0xff] %v327
                %v329 = vld [vmem:[%s267 + $0x140] sm:$0xff]
                %330 = vst [vmem:[%s268 + $0x140] sm:$0xff] %v329
                %v331 = vld [vmem:[%s267 + $0x148] sm:$0xff]
                %332 = vst [vmem:[%s268 + $0x148] sm:$0xff] %v331
                %v333 = vld [vmem:[%s267 + $0x150] sm:$0xff]
                %334 = vst [vmem:[%s268 + $0x150] sm:$0xff] %v333
                %v335 = vld [vmem:[%s267 + $0x160] sm:$0xff]
                %336 = vst [vmem:[%s268 + $0x160] sm:$0xff] %v335
                %v337 = vld [vmem:[%s267 + $0x168] sm:$0xff]
                %338 = vst [vmem:[%s268 + $0x168] sm:$0xff] %v337
                %v339 = vld [vmem:[%s267 + $0x170] sm:$0xff]
                %340 = vst [vmem:[%s268 + $0x170] sm:$0xff] %v339
              $region64: #{tpu_custom_call.1} parent=58 // loop_footer
                %s266 = sadd.s32 1, %s262
              $region65: #{tpu_custom_call.1} parent=58 // loop_footer_branch
                %261 = sbr.rel target = $region61
              $region66: #{tpu_custom_call.1} parent=58 // loop_exit
                _
              %s341 = sshllo.u32 0, %s256
              loop: start=0, step=1, limit=1
              $region67: #{tpu_custom_call.1} parent=58 // loop_pre_header
                _
              $region68: #{tpu_custom_call.1} parent=58 // loop_header
                %s343 = sphi 0, %s347
                %p344 = scmp.ge.s32.totalorder %s343, 1
                %s348 = sphi %s258, %s258
                %s349 = sphi %s260, %s260
              $region69: #{tpu_custom_call.1} parent=58 // loop_header_branch
                %346 = sbr.rel (%p344) target = $region73
              $region70: #{tpu_custom_call.1} parent=58 // loop_body
                %v350 = vld [vmem:[%s348] sm:%s341]
                %351 = vst [vmem:[%s349] sm:%s341] %v350
                %v352 = vld [vmem:[%s348 + $0x20] sm:%s341]
                %353 = vst [vmem:[%s349 + $0x20] sm:%s341] %v352
                %v354 = vld [vmem:[%s348 + $0x40] sm:%s341]
                %355 = vst [vmem:[%s349 + $0x40] sm:%s341] %v354
                %v356 = vld [vmem:[%s348 + $0x60] sm:%s341]
                %357 = vst [vmem:[%s349 + $0x60] sm:%s341] %v356
                %v358 = vld [vmem:[%s348 + $0x80] sm:%s341]
                %359 = vst [vmem:[%s349 + $0x80] sm:%s341] %v358
                %v360 = vld [vmem:[%s348 + $0xa0] sm:%s341]
                %361 = vst [vmem:[%s349 + $0xa0] sm:%s341] %v360
                %v362 = vld [vmem:[%s348 + $0xc0] sm:%s341]
                %363 = vst [vmem:[%s349 + $0xc0] sm:%s341] %v362
                %v364 = vld [vmem:[%s348 + $0xe0] sm:%s341]
                %365 = vst [vmem:[%s349 + $0xe0] sm:%s341] %v364
                %v366 = vld [vmem:[%s348 + $0x100] sm:%s341]
                %367 = vst [vmem:[%s349 + $0x100] sm:%s341] %v366
                %v368 = vld [vmem:[%s348 + $0x120] sm:%s341]
                %369 = vst [vmem:[%s349 + $0x120] sm:%s341] %v368
                %v370 = vld [vmem:[%s348 + $0x140] sm:%s341]
                %371 = vst [vmem:[%s349 + $0x140] sm:%s341] %v370
                %v372 = vld [vmem:[%s348 + $0x160] sm:%s341]
                %373 = vst [vmem:[%s349 + $0x160] sm:%s341] %v372
              $region71: #{tpu_custom_call.1} parent=58 // loop_footer
                %s347 = sadd.s32 1, %s343
              $region72: #{tpu_custom_call.1} parent=58 // loop_footer_branch
                %342 = sbr.rel target = $region68
              $region73: #{tpu_custom_call.1} parent=58 // loop_exit
                _
            $region59: #{tpu_custom_call.1} parent=43 // pred_fallthru
              _
          $region44: #{tpu_custom_call.1} parent=39 // pred_fallthru
            _
          // Predicated region
          $region45: #{tpu_custom_call.1} parent=39 // pred_check
            %p215 = pneg %p211
          $region46: #{tpu_custom_call.1} parent=39 // pred_check_branch
            %217 = sbr.rel (%p215) target = $region48
          $region47: #{tpu_custom_call.1} parent=39 // pred_region
            %s218 = sshllo.u32 0, 26
            loop: start=0, step=1, limit=1
            $region49: #{tpu_custom_call.1} parent=47 // loop_pre_header
              _
            $region50: #{tpu_custom_call.1} parent=47 // loop_header
              %s220 = sphi 0, %s224
              %p221 = scmp.ge.s32.totalorder %s220, 1
              %s225 = sphi %s209, %s209
              %s226 = sphi [#allocation2], [#allocation2]
            $region51: #{tpu_custom_call.1} parent=47 // loop_header_branch
              %223 = sbr.rel (%p221) target = $region55
            $region52: #{tpu_custom_call.1} parent=47 // loop_body
              %v227 = vld [vmem:[%s225] sm:%s218]
              %228 = vst [vmem:[%s226] sm:%s218] %v227
              %v229 = vld [vmem:[%s225 + $0x20] sm:%s218]
              %230 = vst [vmem:[%s226 + $0x20] sm:%s218] %v229
              %v231 = vld [vmem:[%s225 + $0x40] sm:%s218]
              %232 = vst [vmem:[%s226 + $0x40] sm:%s218] %v231
              %v233 = vld [vmem:[%s225 + $0x60] sm:%s218]
              %234 = vst [vmem:[%s226 + $0x60] sm:%s218] %v233
              %v235 = vld [vmem:[%s225 + $0x80] sm:%s218]
              %236 = vst [vmem:[%s226 + $0x80] sm:%s218] %v235
              %v237 = vld [vmem:[%s225 + $0xa0] sm:%s218]
              %238 = vst [vmem:[%s226 + $0xa0] sm:%s218] %v237
              %v239 = vld [vmem:[%s225 + $0xc0] sm:%s218]
              %240 = vst [vmem:[%s226 + $0xc0] sm:%s218] %v239
              %v241 = vld [vmem:[%s225 + $0xe0] sm:%s218]
              %242 = vst [vmem:[%s226 + $0xe0] sm:%s218] %v241
              %v243 = vld [vmem:[%s225 + $0x100] sm:%s218]
              %244 = vst [vmem:[%s226 + $0x100] sm:%s218] %v243
              %v245 = vld [vmem:[%s225 + $0x120] sm:%s218]
              %246 = vst [vmem:[%s226 + $0x120] sm:%s218] %v245
              %v247 = vld [vmem:[%s225 + $0x140] sm:%s218]
              %248 = vst [vmem:[%s226 + $0x140] sm:%s218] %v247
              %v249 = vld [vmem:[%s225 + $0x160] sm:%s218]
              %250 = vst [vmem:[%s226 + $0x160] sm:%s218] %v249
            $region53: #{tpu_custom_call.1} parent=47 // loop_footer
              %s224 = sadd.s32 1, %s220
            $region54: #{tpu_custom_call.1} parent=47 // loop_footer_branch
              %219 = sbr.rel target = $region50
            $region55: #{tpu_custom_call.1} parent=47 // loop_exit
              _
          $region48: #{tpu_custom_call.1} parent=39 // pred_fallthru
            _
          // Predicated region
          $region74: #{tpu_custom_call.1} parent=39 // pred_check
            _
          $region75: #{tpu_custom_call.1} parent=39 // pred_check_branch
            %376 = sbr.rel (0) target = $region77
          $region76: #{tpu_custom_call.1} parent=39 // pred_region
            %377 = vsyncadd [#allocation5], 4992
          $region77: #{tpu_custom_call.1} parent=39 // pred_fallthru
            _
        $region40: #{tpu_custom_call.1} parent=35 // pred_fallthru
          _
        %s378 = smul.u32 %s24, 8
        %s379 = smul.u32 %s203, 384
        %s380 = scalar_lea.vmem [#allocation2], %s379
        %s381 = scalar_lea.sflag [#allocation5], %s203
        %s382 = smul.u32 12, 26
        %s383 = smul.u32 %s382, 1
        %s384 = sshll.u32 %s383, 4
        %385 = dma.done %s381, %s384
        %s386 = sadd.s32 %s24, 1
        %p387 = scmp.lt.s32.totalorder %s386, 2
        // Predicated region
        $region78: #{tpu_custom_call.1} parent=35 // pred_check
          %p388 = pneg %p387
        $region79: #{tpu_custom_call.1} parent=35 // pred_check_branch
          %390 = sbr.rel (%p388) target = $region81
        $region80: #{tpu_custom_call.1} parent=35 // pred_region
          %p391 = scmp.lt.s32.totalorder %s386, 0
          %s392 = ssub.s32 0, %s386
          %s393 = scalar_select %p391, %s392, %s386
          %s394 = sand.u32 %s393, 1
          %s395 = ssub.s32 0, %s394
          %s396 = scalar_select %p391, %s395, %s394
          %p397 = scmp.ne.s32.totalorder %s396, 0
          %p398 = scmp.lt.s32.totalorder %s396, 0
          %p399 = pnand %p398, %p397
          %p400 = pneg %p399
          %s401 = sadd.s32 %s396, 2
          %s402 = scalar_select %p400, %s401, %s396
          %s403 = smul.u32 %s386, 8
          %s404 = smul.u32 %s403, 32
          %s405 = smul.u32 %s23, 640
          %s406 = sadd.s32 %s404, %s405
          %s407 = scalar_lea.vmem %s0, %s406
          %s408 = smul.u32 %s402, 384
          %s409 = scalar_lea.vmem [#allocation2], %s408
          %s410 = scalar_lea.sflag [#allocation5], %s402
          %p412 = scmp.lt.u32.totalorder 26, 8
          %p413 = pneg %p412
          // Predicated region
          $region82: #{tpu_custom_call.1} parent=80 // pred_check
            _
          $region83: #{tpu_custom_call.1} parent=80 // pred_check_branch
            %415 = sbr.rel (%p412) target = $region85
          $region84: #{tpu_custom_call.1} parent=80 // pred_region
            %s452 = sand.u32 26, 7
            %p453 = scmp.eq.s32.totalorder %s452, 0
            %p454 = pneg %p453
            // Predicated region
            $region97: #{tpu_custom_call.1} parent=84 // pred_check
              _
            $region98: #{tpu_custom_call.1} parent=84 // pred_check_branch
              %456 = sbr.rel (%p453) target = $region100
            $region99: #{tpu_custom_call.1} parent=84 // pred_region
              %s457 = sand.u32 26, 7
              %s458 = ssub.s32 26, %s457
              %s459 = scalar_lea.vmem %s407, %s458
              %s460 = ssub.s32 26, %s457
              %s461 = scalar_lea.vmem %s409, %s460 [#allocation2]
              loop: start=0, step=1, limit=1
              $region101: #{tpu_custom_call.1} parent=99 // loop_pre_header
                _
              $region102: #{tpu_custom_call.1} parent=99 // loop_header
                %s463 = sphi 0, %s467
                %p464 = scmp.ge.s32.totalorder %s463, 1
                %s468 = sphi %s407, %s407
                %s469 = sphi %s409, %s409
              $region103: #{tpu_custom_call.1} parent=99 // loop_header_branch
                %466 = sbr.rel (%p464) target = $region107
              $region104: #{tpu_custom_call.1} parent=99 // loop_body
                %v470 = vld [vmem:[%s468] sm:$0xff]
                %471 = vst [vmem:[%s469] sm:$0xff] %v470
                %v472 = vld [vmem:[%s468 + $0x8] sm:$0xff]
                %473 = vst [vmem:[%s469 + $0x8] sm:$0xff] %v472
                %v474 = vld [vmem:[%s468 + $0x10] sm:$0xff]
                %475 = vst [vmem:[%s469 + $0x10] sm:$0xff] %v474
                %v476 = vld [vmem:[%s468 + $0x20] sm:$0xff]
                %477 = vst [vmem:[%s469 + $0x20] sm:$0xff] %v476
                %v478 = vld [vmem:[%s468 + $0x28] sm:$0xff]
                %479 = vst [vmem:[%s469 + $0x28] sm:$0xff] %v478
                %v480 = vld [vmem:[%s468 + $0x30] sm:$0xff]
                %481 = vst [vmem:[%s469 + $0x30] sm:$0xff] %v480
                %v482 = vld [vmem:[%s468 + $0x40] sm:$0xff]
                %483 = vst [vmem:[%s469 + $0x40] sm:$0xff] %v482
                %v484 = vld [vmem:[%s468 + $0x48] sm:$0xff]
                %485 = vst [vmem:[%s469 + $0x48] sm:$0xff] %v484
                %v486 = vld [vmem:[%s468 + $0x50] sm:$0xff]
                %487 = vst [vmem:[%s469 + $0x50] sm:$0xff] %v486
                %v488 = vld [vmem:[%s468 + $0x60] sm:$0xff]
                %489 = vst [vmem:[%s469 + $0x60] sm:$0xff] %v488
                %v490 = vld [vmem:[%s468 + $0x68] sm:$0xff]
                %491 = vst [vmem:[%s469 + $0x68] sm:$0xff] %v490
                %v492 = vld [vmem:[%s468 + $0x70] sm:$0xff]
                %493 = vst [vmem:[%s469 + $0x70] sm:$0xff] %v492
                %v494 = vld [vmem:[%s468 + $0x80] sm:$0xff]
                %495 = vst [vmem:[%s469 + $0x80] sm:$0xff] %v494
                %v496 = vld [vmem:[%s468 + $0x88] sm:$0xff]
                %497 = vst [vmem:[%s469 + $0x88] sm:$0xff] %v496
                %v498 = vld [vmem:[%s468 + $0x90] sm:$0xff]
                %499 = vst [vmem:[%s469 + $0x90] sm:$0xff] %v498
                %v500 = vld [vmem:[%s468 + $0xa0] sm:$0xff]
                %501 = vst [vmem:[%s469 + $0xa0] sm:$0xff] %v500
                %v502 = vld [vmem:[%s468 + $0xa8] sm:$0xff]
                %503 = vst [vmem:[%s469 + $0xa8] sm:$0xff] %v502
                %v504 = vld [vmem:[%s468 + $0xb0] sm:$0xff]
                %505 = vst [vmem:[%s469 + $0xb0] sm:$0xff] %v504
                %v506 = vld [vmem:[%s468 + $0xc0] sm:$0xff]
                %507 = vst [vmem:[%s469 + $0xc0] sm:$0xff] %v506
                %v508 = vld [vmem:[%s468 + $0xc8] sm:$0xff]
                %509 = vst [vmem:[%s469 + $0xc8] sm:$0xff] %v508
                %v510 = vld [vmem:[%s468 + $0xd0] sm:$0xff]
                %511 = vst [vmem:[%s469 + $0xd0] sm:$0xff] %v510
                %v512 = vld [vmem:[%s468 + $0xe0] sm:$0xff]
                %513 = vst [vmem:[%s469 + $0xe0] sm:$0xff] %v512
                %v514 = vld [vmem:[%s468 + $0xe8] sm:$0xff]
                %515 = vst [vmem:[%s469 + $0xe8] sm:$0xff] %v514
                %v516 = vld [vmem:[%s468 + $0xf0] sm:$0xff]
                %517 = vst [vmem:[%s469 + $0xf0] sm:$0xff] %v516
                %v518 = vld [vmem:[%s468 + $0x100] sm:$0xff]
                %519 = vst [vmem:[%s469 + $0x100] sm:$0xff] %v518
                %v520 = vld [vmem:[%s468 + $0x108] sm:$0xff]
                %521 = vst [vmem:[%s469 + $0x108] sm:$0xff] %v520
                %v522 = vld [vmem:[%s468 + $0x110] sm:$0xff]
                %523 = vst [vmem:[%s469 + $0x110] sm:$0xff] %v522
                %v524 = vld [vmem:[%s468 + $0x120] sm:$0xff]
                %525 = vst [vmem:[%s469 + $0x120] sm:$0xff] %v524
                %v526 = vld [vmem:[%s468 + $0x128] sm:$0xff]
                %527 = vst [vmem:[%s469 + $0x128] sm:$0xff] %v526
                %v528 = vld [vmem:[%s468 + $0x130] sm:$0xff]
                %529 = vst [vmem:[%s469 + $0x130] sm:$0xff] %v528
                %v530 = vld [vmem:[%s468 + $0x140] sm:$0xff]
                %531 = vst [vmem:[%s469 + $0x140] sm:$0xff] %v530
                %v532 = vld [vmem:[%s468 + $0x148] sm:$0xff]
                %533 = vst [vmem:[%s469 + $0x148] sm:$0xff] %v532
                %v534 = vld [vmem:[%s468 + $0x150] sm:$0xff]
                %535 = vst [vmem:[%s469 + $0x150] sm:$0xff] %v534
                %v536 = vld [vmem:[%s468 + $0x160] sm:$0xff]
                %537 = vst [vmem:[%s469 + $0x160] sm:$0xff] %v536
                %v538 = vld [vmem:[%s468 + $0x168] sm:$0xff]
                %539 = vst [vmem:[%s469 + $0x168] sm:$0xff] %v538
                %v540 = vld [vmem:[%s468 + $0x170] sm:$0xff]
                %541 = vst [vmem:[%s469 + $0x170] sm:$0xff] %v540
              $region105: #{tpu_custom_call.1} parent=99 // loop_footer
                %s467 = sadd.s32 1, %s463
              $region106: #{tpu_custom_call.1} parent=99 // loop_footer_branch
                %462 = sbr.rel target = $region102
              $region107: #{tpu_custom_call.1} parent=99 // loop_exit
                _
              %s542 = sshllo.u32 0, %s457
              loop: start=0, step=1, limit=1
              $region108: #{tpu_custom_call.1} parent=99 // loop_pre_header
                _
              $region109: #{tpu_custom_call.1} parent=99 // loop_header
                %s544 = sphi 0, %s548
                %p545 = scmp.ge.s32.totalorder %s544, 1
                %s549 = sphi %s459, %s459
                %s550 = sphi %s461, %s461
              $region110: #{tpu_custom_call.1} parent=99 // loop_header_branch
                %547 = sbr.rel (%p545) target = $region114
              $region111: #{tpu_custom_call.1} parent=99 // loop_body
                %v551 = vld [vmem:[%s549] sm:%s542]
                %552 = vst [vmem:[%s550] sm:%s542] %v551
                %v553 = vld [vmem:[%s549 + $0x20] sm:%s542]
                %554 = vst [vmem:[%s550 + $0x20] sm:%s542] %v553
                %v555 = vld [vmem:[%s549 + $0x40] sm:%s542]
                %556 = vst [vmem:[%s550 + $0x40] sm:%s542] %v555
                %v557 = vld [vmem:[%s549 + $0x60] sm:%s542]
                %558 = vst [vmem:[%s550 + $0x60] sm:%s542] %v557
                %v559 = vld [vmem:[%s549 + $0x80] sm:%s542]
                %560 = vst [vmem:[%s550 + $0x80] sm:%s542] %v559
                %v561 = vld [vmem:[%s549 + $0xa0] sm:%s542]
                %562 = vst [vmem:[%s550 + $0xa0] sm:%s542] %v561
                %v563 = vld [vmem:[%s549 + $0xc0] sm:%s542]
                %564 = vst [vmem:[%s550 + $0xc0] sm:%s542] %v563
                %v565 = vld [vmem:[%s549 + $0xe0] sm:%s542]
                %566 = vst [vmem:[%s550 + $0xe0] sm:%s542] %v565
                %v567 = vld [vmem:[%s549 + $0x100] sm:%s542]
                %568 = vst [vmem:[%s550 + $0x100] sm:%s542] %v567
                %v569 = vld [vmem:[%s549 + $0x120] sm:%s542]
                %570 = vst [vmem:[%s550 + $0x120] sm:%s542] %v569
                %v571 = vld [vmem:[%s549 + $0x140] sm:%s542]
                %572 = vst [vmem:[%s550 + $0x140] sm:%s542] %v571
                %v573 = vld [vmem:[%s549 + $0x160] sm:%s542]
                %574 = vst [vmem:[%s550 + $0x160] sm:%s542] %v573
              $region112: #{tpu_custom_call.1} parent=99 // loop_footer
                %s548 = sadd.s32 1, %s544
              $region113: #{tpu_custom_call.1} parent=99 // loop_footer_branch
                %543 = sbr.rel target = $region109
              $region114: #{tpu_custom_call.1} parent=99 // loop_exit
                _
            $region100: #{tpu_custom_call.1} parent=84 // pred_fallthru
              _
          $region85: #{tpu_custom_call.1} parent=80 // pred_fallthru
            _
          // Predicated region
          $region86: #{tpu_custom_call.1} parent=80 // pred_check
            %p416 = pneg %p412
          $region87: #{tpu_custom_call.1} parent=80 // pred_check_branch
            %418 = sbr.rel (%p416) target = $region89
          $region88: #{tpu_custom_call.1} parent=80 // pred_region
            %s419 = sshllo.u32 0, 26
            loop: start=0, step=1, limit=1
            $region90: #{tpu_custom_call.1} parent=88 // loop_pre_header
              _
            $region91: #{tpu_custom_call.1} parent=88 // loop_header
              %s421 = sphi 0, %s425
              %p422 = scmp.ge.s32.totalorder %s421, 1
              %s426 = sphi %s407, %s407
              %s427 = sphi %s409, %s409
            $region92: #{tpu_custom_call.1} parent=88 // loop_header_branch
              %424 = sbr.rel (%p422) target = $region96
            $region93: #{tpu_custom_call.1} parent=88 // loop_body
              %v428 = vld [vmem:[%s426] sm:%s419]
              %429 = vst [vmem:[%s427] sm:%s419] %v428
              %v430 = vld [vmem:[%s426 + $0x20] sm:%s419]
              %431 = vst [vmem:[%s427 + $0x20] sm:%s419] %v430
              %v432 = vld [vmem:[%s426 + $0x40] sm:%s419]
              %433 = vst [vmem:[%s427 + $0x40] sm:%s419] %v432
              %v434 = vld [vmem:[%s426 + $0x60] sm:%s419]
              %435 = vst [vmem:[%s427 + $0x60] sm:%s419] %v434
              %v436 = vld [vmem:[%s426 + $0x80] sm:%s419]
              %437 = vst [vmem:[%s427 + $0x80] sm:%s419] %v436
              %v438 = vld [vmem:[%s426 + $0xa0] sm:%s419]
              %439 = vst [vmem:[%s427 + $0xa0] sm:%s419] %v438
              %v440 = vld [vmem:[%s426 + $0xc0] sm:%s419]
              %441 = vst [vmem:[%s427 + $0xc0] sm:%s419] %v440
              %v442 = vld [vmem:[%s426 + $0xe0] sm:%s419]
              %443 = vst [vmem:[%s427 + $0xe0] sm:%s419] %v442
              %v444 = vld [vmem:[%s426 + $0x100] sm:%s419]
              %445 = vst [vmem:[%s427 + $0x100] sm:%s419] %v444
              %v446 = vld [vmem:[%s426 + $0x120] sm:%s419]
              %447 = vst [vmem:[%s427 + $0x120] sm:%s419] %v446
              %v448 = vld [vmem:[%s426 + $0x140] sm:%s419]
              %449 = vst [vmem:[%s427 + $0x140] sm:%s419] %v448
              %v450 = vld [vmem:[%s426 + $0x160] sm:%s419]
              %451 = vst [vmem:[%s427 + $0x160] sm:%s419] %v450
            $region94: #{tpu_custom_call.1} parent=88 // loop_footer
              %s425 = sadd.s32 1, %s421
            $region95: #{tpu_custom_call.1} parent=88 // loop_footer_branch
              %420 = sbr.rel target = $region91
            $region96: #{tpu_custom_call.1} parent=88 // loop_exit
              _
          $region89: #{tpu_custom_call.1} parent=80 // pred_fallthru
            _
          // Predicated region
          $region115: #{tpu_custom_call.1} parent=80 // pred_check
            _
          $region116: #{tpu_custom_call.1} parent=80 // pred_check_branch
            %577 = sbr.rel (0) target = $region118
          $region117: #{tpu_custom_call.1} parent=80 // pred_region
            %578 = vsyncadd %s410, 4992
          $region118: #{tpu_custom_call.1} parent=80 // pred_fallthru
            _
        $region81: #{tpu_custom_call.1} parent=35 // pred_fallthru
          _
        %v579 = vld [vmem:[%s380] sm:$0xff]
        %v580 = vld [vmem:[%s380 + $0x8] sm:$0xff]
        %v581 = vld [vmem:[%s380 + $0x10] sm:$0xff]
        %v582 = vld [vmem:[%s380 + $0x20] sm:$0xff]
        %v583 = vld [vmem:[%s380 + $0x28] sm:$0xff]
        %v584 = vld [vmem:[%s380 + $0x30] sm:$0xff]
        %v585 = vld [vmem:[%s380 + $0x40] sm:$0xff]
        %v586 = vld [vmem:[%s380 + $0x48] sm:$0xff]
        %v587 = vld [vmem:[%s380 + $0x50] sm:$0xff]
        %v588 = vld [vmem:[%s380 + $0x60] sm:$0xff]
        %v589 = vld [vmem:[%s380 + $0x68] sm:$0xff]
        %v590 = vld [vmem:[%s380 + $0x70] sm:$0xff]
        %v591 = vld [vmem:[%s380 + $0x80] sm:$0xff]
        %v592 = vld [vmem:[%s380 + $0x88] sm:$0xff]
        %v593 = vld [vmem:[%s380 + $0x90] sm:$0xff]
        %v594 = vld [vmem:[%s380 + $0xa0] sm:$0xff]
        %v595 = vld [vmem:[%s380 + $0xa8] sm:$0xff]
        %v596 = vld [vmem:[%s380 + $0xb0] sm:$0xff]
        %v597 = vld [vmem:[%s380 + $0xc0] sm:$0xff]
        %v598 = vld [vmem:[%s380 + $0xc8] sm:$0xff]
        %v599 = vld [vmem:[%s380 + $0xd0] sm:$0xff]
        %v600 = vld [vmem:[%s380 + $0xe0] sm:$0xff]
        %v601 = vld [vmem:[%s380 + $0xe8] sm:$0xff]
        %v602 = vld [vmem:[%s380 + $0xf0] sm:$0xff]
        %v603 = vld [vmem:[%s380 + $0x100] sm:$0xff]
        %v604 = vld [vmem:[%s380 + $0x108] sm:$0xff]
        %v605 = vld [vmem:[%s380 + $0x110] sm:$0xff]
        %v606 = vld [vmem:[%s380 + $0x120] sm:$0xff]
        %v607 = vld [vmem:[%s380 + $0x128] sm:$0xff]
        %v608 = vld [vmem:[%s380 + $0x130] sm:$0xff]
        %v609 = vld [vmem:[%s380 + $0x140] sm:$0xff]
        %v610 = vld [vmem:[%s380 + $0x148] sm:$0xff]
        %v611 = vld [vmem:[%s380 + $0x150] sm:$0xff]
        %v612 = vld [vmem:[%s380 + $0x160] sm:$0xff]
        %v613 = vld [vmem:[%s380 + $0x168] sm:$0xff]
        %v614 = vld [vmem:[%s380 + $0x170] sm:$0xff]
        %615 = vst [vmem:[#allocation3] sm:$0xff] %v579
        %616 = vst [vmem:[#allocation3 + $0x18] sm:$0xff] %v580
        %617 = vst [vmem:[#allocation3 + $0x30] sm:$0xff] %v581
        %618 = vst [vmem:[#allocation3 + $0x48] sm:$0xff] %v582
        %619 = vst [vmem:[#allocation3 + $0x60] sm:$0xff] %v583
        %620 = vst [vmem:[#allocation3 + $0x78] sm:$0xff] %v584
        %621 = vst [vmem:[#allocation3 + $0x90] sm:$0xff] %v585
        %622 = vst [vmem:[#allocation3 + $0xa8] sm:$0xff] %v586
        %623 = vst [vmem:[#allocation3 + $0xc0] sm:$0xff] %v587
        %624 = vst [vmem:[#allocation3 + $0xd8] sm:$0xff] %v588
        %625 = vst [vmem:[#allocation3 + $0xf0] sm:$0xff] %v589
        %626 = vst [vmem:[#allocation3 + $0x108] sm:$0xff] %v590
        %627 = vst [vmem:[#allocation3 + $0x120] sm:$0xff] %v591
        %628 = vst [vmem:[#allocation3 + $0x138] sm:$0xff] %v592
        %629 = vst [vmem:[#allocation3 + $0x150] sm:$0xff] %v593
        %630 = vst [vmem:[#allocation3 + $0x168] sm:$0xff] %v594
        %631 = vst [vmem:[#allocation3 + $0x180] sm:$0xff] %v595
        %632 = vst [vmem:[#allocation3 + $0x198] sm:$0xff] %v596
        %633 = vst [vmem:[#allocation3 + $0x1b0] sm:$0xff] %v597
        %634 = vst [vmem:[#allocation3 + $0x1c8] sm:$0xff] %v598
        %635 = vst [vmem:[#allocation3 + $0x1e0] sm:$0xff] %v599
        %636 = vst [vmem:[#allocation3 + $0x1f8] sm:$0xff] %v600
        %637 = vst [vmem:[#allocation3 + $0x210] sm:$0xff] %v601
        %638 = vst [vmem:[#allocation3 + $0x228] sm:$0xff] %v602
        %639 = vst [vmem:[#allocation3 + $0x240] sm:$0xff] %v603
        %640 = vst [vmem:[#allocation3 + $0x258] sm:$0xff] %v604
        %641 = vst [vmem:[#allocation3 + $0x270] sm:$0xff] %v605
        %642 = vst [vmem:[#allocation3 + $0x288] sm:$0xff] %v606
        %643 = vst [vmem:[#allocation3 + $0x2a0] sm:$0xff] %v607
        %644 = vst [vmem:[#allocation3 + $0x2b8] sm:$0xff] %v608
        %645 = vst [vmem:[#allocation3 + $0x2d0] sm:$0xff] %v609
        %646 = vst [vmem:[#allocation3 + $0x2e8] sm:$0xff] %v610
        %647 = vst [vmem:[#allocation3 + $0x300] sm:$0xff] %v611
        %648 = vst [vmem:[#allocation3 + $0x318] sm:$0xff] %v612
        %649 = vst [vmem:[#allocation3 + $0x330] sm:$0xff] %v613
        %650 = vst [vmem:[#allocation3 + $0x348] sm:$0xff] %v614
        %v651 = vld [vmem:[%s380 + $0x1] sm:$0xff]
        %v652 = vld [vmem:[%s380 + $0x9] sm:$0xff]
        %v653 = vld [vmem:[%s380 + $0x11] sm:$0xff]
        %v654 = vld [vmem:[%s380 + $0x21] sm:$0xff]
        %v655 = vld [vmem:[%s380 + $0x29] sm:$0xff]
        %v656 = vld [vmem:[%s380 + $0x31] sm:$0xff]
        %v657 = vld [vmem:[%s380 + $0x41] sm:$0xff]
        %v658 = vld [vmem:[%s380 + $0x49] sm:$0xff]
        %v659 = vld [vmem:[%s380 + $0x51] sm:$0xff]
        %v660 = vld [vmem:[%s380 + $0x61] sm:$0xff]
        %v661 = vld [vmem:[%s380 + $0x69] sm:$0xff]
        %v662 = vld [vmem:[%s380 + $0x71] sm:$0xff]
        %v663 = vld [vmem:[%s380 + $0x81] sm:$0xff]
        %v664 = vld [vmem:[%s380 + $0x89] sm:$0xff]
        %v665 = vld [vmem:[%s380 + $0x91] sm:$0xff]
        %v666 = vld [vmem:[%s380 + $0xa1] sm:$0xff]
        %v667 = vld [vmem:[%s380 + $0xa9] sm:$0xff]
        %v668 = vld [vmem:[%s380 + $0xb1] sm:$0xff]
        %v669 = vld [vmem:[%s380 + $0xc1] sm:$0xff]
        %v670 = vld [vmem:[%s380 + $0xc9] sm:$0xff]
        %v671 = vld [vmem:[%s380 + $0xd1] sm:$0xff]
        %v672 = vld [vmem:[%s380 + $0xe1] sm:$0xff]
        %v673 = vld [vmem:[%s380 + $0xe9] sm:$0xff]
        %v674 = vld [vmem:[%s380 + $0xf1] sm:$0xff]
        %v675 = vld [vmem:[%s380 + $0x101] sm:$0xff]
        %v676 = vld [vmem:[%s380 + $0x109] sm:$0xff]
        %v677 = vld [vmem:[%s380 + $0x111] sm:$0xff]
        %v678 = vld [vmem:[%s380 + $0x121] sm:$0xff]
        %v679 = vld [vmem:[%s380 + $0x129] sm:$0xff]
        %v680 = vld [vmem:[%s380 + $0x131] sm:$0xff]
        %v681 = vld [vmem:[%s380 + $0x141] sm:$0xff]
        %v682 = vld [vmem:[%s380 + $0x149] sm:$0xff]
        %v683 = vld [vmem:[%s380 + $0x151] sm:$0xff]
        %v684 = vld [vmem:[%s380 + $0x161] sm:$0xff]
        %v685 = vld [vmem:[%s380 + $0x169] sm:$0xff]
        %v686 = vld [vmem:[%s380 + $0x171] sm:$0xff]
        %687 = vst [vmem:[#allocation3 + $0x8] sm:$0xff] %v651
        %688 = vst [vmem:[#allocation3 + $0x20] sm:$0xff] %v652
        %689 = vst [vmem:[#allocation3 + $0x38] sm:$0xff] %v653
        %690 = vst [vmem:[#allocation3 + $0x50] sm:$0xff] %v654
        %691 = vst [vmem:[#allocation3 + $0x68] sm:$0xff] %v655
        %692 = vst [vmem:[#allocation3 + $0x80] sm:$0xff] %v656
        %693 = vst [vmem:[#allocation3 + $0x98] sm:$0xff] %v657
        %694 = vst [vmem:[#allocation3 + $0xb0] sm:$0xff] %v658
        %695 = vst [vmem:[#allocation3 + $0xc8] sm:$0xff] %v659
        %696 = vst [vmem:[#allocation3 + $0xe0] sm:$0xff] %v660
        %697 = vst [vmem:[#allocation3 + $0xf8] sm:$0xff] %v661
        %698 = vst [vmem:[#allocation3 + $0x110] sm:$0xff] %v662
        %699 = vst [vmem:[#allocation3 + $0x128] sm:$0xff] %v663
        %700 = vst [vmem:[#allocation3 + $0x140] sm:$0xff] %v664
        %701 = vst [vmem:[#allocation3 + $0x158] sm:$0xff] %v665
        %702 = vst [vmem:[#allocation3 + $0x170] sm:$0xff] %v666
        %703 = vst [vmem:[#allocation3 + $0x188] sm:$0xff] %v667
        %704 = vst [vmem:[#allocation3 + $0x1a0] sm:$0xff] %v668
        %705 = vst [vmem:[#allocation3 + $0x1b8] sm:$0xff] %v669
        %706 = vst [vmem:[#allocation3 + $0x1d0] sm:$0xff] %v670
        %707 = vst [vmem:[#allocation3 + $0x1e8] sm:$0xff] %v671
        %708 = vst [vmem:[#allocation3 + $0x200] sm:$0xff] %v672
        %709 = vst [vmem:[#allocation3 + $0x218] sm:$0xff] %v673
        %710 = vst [vmem:[#allocation3 + $0x230] sm:$0xff] %v674
        %711 = vst [vmem:[#allocation3 + $0x248] sm:$0xff] %v675
        %712 = vst [vmem:[#allocation3 + $0x260] sm:$0xff] %v676
        %713 = vst [vmem:[#allocation3 + $0x278] sm:$0xff] %v677
        %714 = vst [vmem:[#allocation3 + $0x290] sm:$0xff] %v678
        %715 = vst [vmem:[#allocation3 + $0x2a8] sm:$0xff] %v679
        %716 = vst [vmem:[#allocation3 + $0x2c0] sm:$0xff] %v680
        %717 = vst [vmem:[#allocation3 + $0x2d8] sm:$0xff] %v681
        %718 = vst [vmem:[#allocation3 + $0x2f0] sm:$0xff] %v682
        %719 = vst [vmem:[#allocation3 + $0x308] sm:$0xff] %v683
        %720 = vst [vmem:[#allocation3 + $0x320] sm:$0xff] %v684
        %721 = vst [vmem:[#allocation3 + $0x338] sm:$0xff] %v685
        %722 = vst [vmem:[#allocation3 + $0x350] sm:$0xff] %v686
        %v723 = vld [vmem:[%s380 + $0x2] sm:$0xff]
        %v724 = vld [vmem:[%s380 + $0xa] sm:$0xff]
        %v725 = vld [vmem:[%s380 + $0x12] sm:$0xff]
        %v726 = vld [vmem:[%s380 + $0x22] sm:$0xff]
        %v727 = vld [vmem:[%s380 + $0x2a] sm:$0xff]
        %v728 = vld [vmem:[%s380 + $0x32] sm:$0xff]
        %v729 = vld [vmem:[%s380 + $0x42] sm:$0xff]
        %v730 = vld [vmem:[%s380 + $0x4a] sm:$0xff]
        %v731 = vld [vmem:[%s380 + $0x52] sm:$0xff]
        %v732 = vld [vmem:[%s380 + $0x62] sm:$0xff]
        %v733 = vld [vmem:[%s380 + $0x6a] sm:$0xff]
        %v734 = vld [vmem:[%s380 + $0x72] sm:$0xff]
        %v735 = vld [vmem:[%s380 + $0x82] sm:$0xff]
        %v736 = vld [vmem:[%s380 + $0x8a] sm:$0xff]
        %v737 = vld [vmem:[%s380 + $0x92] sm:$0xff]
        %v738 = vld [vmem:[%s380 + $0xa2] sm:$0xff]
        %v739 = vld [vmem:[%s380 + $0xaa] sm:$0xff]
        %v740 = vld [vmem:[%s380 + $0xb2] sm:$0xff]
        %v741 = vld [vmem:[%s380 + $0xc2] sm:$0xff]
        %v742 = vld [vmem:[%s380 + $0xca] sm:$0xff]
        %v743 = vld [vmem:[%s380 + $0xd2] sm:$0xff]
        %v744 = vld [vmem:[%s380 + $0xe2] sm:$0xff]
        %v745 = vld [vmem:[%s380 + $0xea] sm:$0xff]
        %v746 = vld [vmem:[%s380 + $0xf2] sm:$0xff]
        %v747 = vld [vmem:[%s380 + $0x102] sm:$0xff]
        %v748 = vld [vmem:[%s380 + $0x10a] sm:$0xff]
        %v749 = vld [vmem:[%s380 + $0x112] sm:$0xff]
        %v750 = vld [vmem:[%s380 + $0x122] sm:$0xff]
        %v751 = vld [vmem:[%s380 + $0x12a] sm:$0xff]
        %v752 = vld [vmem:[%s380 + $0x132] sm:$0xff]
        %v753 = vld [vmem:[%s380 + $0x142] sm:$0xff]
        %v754 = vld [vmem:[%s380 + $0x14a] sm:$0xff]
        %v755 = vld [vmem:[%s380 + $0x152] sm:$0xff]
        %v756 = vld [vmem:[%s380 + $0x162] sm:$0xff]
        %v757 = vld [vmem:[%s380 + $0x16a] sm:$0xff]
        %v758 = vld [vmem:[%s380 + $0x172] sm:$0xff]
        %759 = vst [vmem:[#allocation3 + $0x10] sm:$0xff] %v723
        %760 = vst [vmem:[#allocation3 + $0x28] sm:$0xff] %v724
        %761 = vst [vmem:[#allocation3 + $0x40] sm:$0xff] %v725
        %762 = vst [vmem:[#allocation3 + $0x58] sm:$0xff] %v726
        %763 = vst [vmem:[#allocation3 + $0x70] sm:$0xff] %v727
        %764 = vst [vmem:[#allocation3 + $0x88] sm:$0xff] %v728
        %765 = vst [vmem:[#allocation3 + $0xa0] sm:$0xff] %v729
        %766 = vst [vmem:[#allocation3 + $0xb8] sm:$0xff] %v730
        %767 = vst [vmem:[#allocation3 + $0xd0] sm:$0xff] %v731
        %768 = vst [vmem:[#allocation3 + $0xe8] sm:$0xff] %v732
        %769 = vst [vmem:[#allocation3 + $0x100] sm:$0xff] %v733
        %770 = vst [vmem:[#allocation3 + $0x118] sm:$0xff] %v734
        %771 = vst [vmem:[#allocation3 + $0x130] sm:$0xff] %v735
        %772 = vst [vmem:[#allocation3 + $0x148] sm:$0xff] %v736
        %773 = vst [vmem:[#allocation3 + $0x160] sm:$0xff] %v737
        %774 = vst [vmem:[#allocation3 + $0x178] sm:$0xff] %v738
        %775 = vst [vmem:[#allocation3 + $0x190] sm:$0xff] %v739
        %776 = vst [vmem:[#allocation3 + $0x1a8] sm:$0xff] %v740
        %777 = vst [vmem:[#allocation3 + $0x1c0] sm:$0xff] %v741
        %778 = vst [vmem:[#allocation3 + $0x1d8] sm:$0xff] %v742
        %779 = vst [vmem:[#allocation3 + $0x1f0] sm:$0xff] %v743
        %780 = vst [vmem:[#allocation3 + $0x208] sm:$0xff] %v744
        %781 = vst [vmem:[#allocation3 + $0x220] sm:$0xff] %v745
        %782 = vst [vmem:[#allocation3 + $0x238] sm:$0xff] %v746
        %783 = vst [vmem:[#allocation3 + $0x250] sm:$0xff] %v747
        %784 = vst [vmem:[#allocation3 + $0x268] sm:$0xff] %v748
        %785 = vst [vmem:[#allocation3 + $0x280] sm:$0xff] %v749
        %786 = vst [vmem:[#allocation3 + $0x298] sm:$0xff] %v750
        %787 = vst [vmem:[#allocation3 + $0x2b0] sm:$0xff] %v751
        %788 = vst [vmem:[#allocation3 + $0x2c8] sm:$0xff] %v752
        %789 = vst [vmem:[#allocation3 + $0x2e0] sm:$0xff] %v753
        %790 = vst [vmem:[#allocation3 + $0x2f8] sm:$0xff] %v754
        %791 = vst [vmem:[#allocation3 + $0x310] sm:$0xff] %v755
        %792 = vst [vmem:[#allocation3 + $0x328] sm:$0xff] %v756
        %793 = vst [vmem:[#allocation3 + $0x340] sm:$0xff] %v757
        %794 = vst [vmem:[#allocation3 + $0x358] sm:$0xff] %v758
        %v795 = vld [vmem:[#allocation3] sm:$0xff]
        %v796 = vld [vmem:[#allocation3 + $0x8] sm:$0xff]
        %v797 = vld [vmem:[#allocation3 + $0x10] sm:$0xff]
        %v798 = vld [vmem:[#allocation3 + $0x18] sm:$0xff]
        %v799 = vld [vmem:[#allocation3 + $0x20] sm:$0xff]
        %v800 = vld [vmem:[#allocation3 + $0x28] sm:$0xff]
        %v801 = vld [vmem:[#allocation3 + $0x30] sm:$0xff]
        %v802 = vld [vmem:[#allocation3 + $0x38] sm:$0xff]
        %v803 = vld [vmem:[#allocation3 + $0x40] sm:$0xff]
        %v804 = vld [vmem:[#allocation3 + $0x48] sm:$0xff]
        %v805 = vld [vmem:[#allocation3 + $0x50] sm:$0xff]
        %v806 = vld [vmem:[#allocation3 + $0x58] sm:$0xff]
        %v807 = vld [vmem:[#allocation3 + $0x60] sm:$0xff]
        %v808 = vld [vmem:[#allocation3 + $0x68] sm:$0xff]
        %v809 = vld [vmem:[#allocation3 + $0x70] sm:$0xff]
        %v810 = vld [vmem:[#allocation3 + $0x78] sm:$0xff]
        %v811 = vld [vmem:[#allocation3 + $0x80] sm:$0xff]
        %v812 = vld [vmem:[#allocation3 + $0x88] sm:$0xff]
        %v813 = vld [vmem:[#allocation3 + $0x90] sm:$0xff]
        %v814 = vld [vmem:[#allocation3 + $0x98] sm:$0xff]
        %v815 = vld [vmem:[#allocation3 + $0xa0] sm:$0xff]
        %v816 = vld [vmem:[#allocation3 + $0xa8] sm:$0xff]
        %v817 = vld [vmem:[#allocation3 + $0xb0] sm:$0xff]
        %v818 = vld [vmem:[#allocation3 + $0xb8] sm:$0xff]
        %v819 = vld [vmem:[#allocation3 + $0xc0] sm:$0xff]
        %v820 = vld [vmem:[#allocation3 + $0xc8] sm:$0xff]
        %v821 = vld [vmem:[#allocation3 + $0xd0] sm:$0xff]
        %v822 = vld [vmem:[#allocation3 + $0xd8] sm:$0xff]
        %v823 = vld [vmem:[#allocation3 + $0xe0] sm:$0xff]
        %v824 = vld [vmem:[#allocation3 + $0xe8] sm:$0xff]
        %v825 = vld [vmem:[#allocation3 + $0xf0] sm:$0xff]
        %v826 = vld [vmem:[#allocation3 + $0xf8] sm:$0xff]
        %v827 = vld [vmem:[#allocation3 + $0x100] sm:$0xff]
        %v828 = vld [vmem:[#allocation3 + $0x108] sm:$0xff]
        %v829 = vld [vmem:[#allocation3 + $0x110] sm:$0xff]
        %v830 = vld [vmem:[#allocation3 + $0x118] sm:$0xff]
        %v831 = vld [vmem:[#allocation3 + $0x120] sm:$0xff]
        %v832 = vld [vmem:[#allocation3 + $0x128] sm:$0xff]
        %v833 = vld [vmem:[#allocation3 + $0x130] sm:$0xff]
        %v834 = vld [vmem:[#allocation3 + $0x138] sm:$0xff]
        %v835 = vld [vmem:[#allocation3 + $0x140] sm:$0xff]
        %v836 = vld [vmem:[#allocation3 + $0x148] sm:$0xff]
        %v837 = vld [vmem:[#allocation3 + $0x150] sm:$0xff]
        %v838 = vld [vmem:[#allocation3 + $0x158] sm:$0xff]
        %v839 = vld [vmem:[#allocation3 + $0x160] sm:$0xff]
        %v840 = vld [vmem:[#allocation3 + $0x168] sm:$0xff]
        %v841 = vld [vmem:[#allocation3 + $0x170] sm:$0xff]
        %v842 = vld [vmem:[#allocation3 + $0x178] sm:$0xff]
        %v843 = vld [vmem:[#allocation3 + $0x180] sm:$0xff]
        %v844 = vld [vmem:[#allocation3 + $0x188] sm:$0xff]
        %v845 = vld [vmem:[#allocation3 + $0x190] sm:$0xff]
        %v846 = vld [vmem:[#allocation3 + $0x198] sm:$0xff]
        %v847 = vld [vmem:[#allocation3 + $0x1a0] sm:$0xff]
        %v848 = vld [vmem:[#allocation3 + $0x1a8] sm:$0xff]
        %v849 = vld [vmem:[#allocation3 + $0x1b0] sm:$0xff]
        %v850 = vld [vmem:[#allocation3 + $0x1b8] sm:$0xff]
        %v851 = vld [vmem:[#allocation3 + $0x1c0] sm:$0xff]
        %v852 = vld [vmem:[#allocation3 + $0x1c8] sm:$0xff]
        %v853 = vld [vmem:[#allocation3 + $0x1d0] sm:$0xff]
        %v854 = vld [vmem:[#allocation3 + $0x1d8] sm:$0xff]
        %v855 = vld [vmem:[#allocation3 + $0x1e0] sm:$0xff]
        %v856 = vld [vmem:[#allocation3 + $0x1e8] sm:$0xff]
        %v857 = vld [vmem:[#allocation3 + $0x1f0] sm:$0xff]
        %v858 = vld [vmem:[#allocation3 + $0x1f8] sm:$0xff]
        %v859 = vld [vmem:[#allocation3 + $0x200] sm:$0xff]
        %v860 = vld [vmem:[#allocation3 + $0x208] sm:$0xff]
        %v861 = vld [vmem:[#allocation3 + $0x210] sm:$0xff]
        %v862 = vld [vmem:[#allocation3 + $0x218] sm:$0xff]
        %v863 = vld [vmem:[#allocation3 + $0x220] sm:$0xff]
        %v864 = vld [vmem:[#allocation3 + $0x228] sm:$0xff]
        %v865 = vld [vmem:[#allocation3 + $0x230] sm:$0xff]
        %v866 = vld [vmem:[#allocation3 + $0x238] sm:$0xff]
        %v867 = vld [vmem:[#allocation3 + $0x240] sm:$0xff]
        %v868 = vld [vmem:[#allocation3 + $0x248] sm:$0xff]
        %v869 = vld [vmem:[#allocation3 + $0x250] sm:$0xff]
        %v870 = vld [vmem:[#allocation3 + $0x258] sm:$0xff]
        %v871 = vld [vmem:[#allocation3 + $0x260] sm:$0xff]
        %v872 = vld [vmem:[#allocation3 + $0x268] sm:$0xff]
        %v873 = vld [vmem:[#allocation3 + $0x270] sm:$0xff]
        %v874 = vld [vmem:[#allocation3 + $0x278] sm:$0xff]
        %v875 = vld [vmem:[#allocation3 + $0x280] sm:$0xff]
        %v876 = vld [vmem:[#allocation3 + $0x288] sm:$0xff]
        %v877 = vld [vmem:[#allocation3 + $0x290] sm:$0xff]
        %v878 = vld [vmem:[#allocation3 + $0x298] sm:$0xff]
        %v879 = vld [vmem:[#allocation3 + $0x2a0] sm:$0xff]
        %v880 = vld [vmem:[#allocation3 + $0x2a8] sm:$0xff]
        %v881 = vld [vmem:[#allocation3 + $0x2b0] sm:$0xff]
        %v882 = vld [vmem:[#allocation3 + $0x2b8] sm:$0xff]
        %v883 = vld [vmem:[#allocation3 + $0x2c0] sm:$0xff]
        %v884 = vld [vmem:[#allocation3 + $0x2c8] sm:$0xff]
        %v885 = vld [vmem:[%s1] sm:$0xff]
        %v886 = vld [vmem:[%s1 + $0x8] sm:$0xff]
        %v887 = vld [vmem:[%s1 + $0x10] sm:$0xff]
        %v888 = vld [vmem:[%s1 + $0x18] sm:$0xff]
        %v889 = vld [vmem:[%s1 + $0x20] sm:$0xff]
        %v890 = vld [vmem:[%s1 + $0x28] sm:$0xff]
        %v891 = vld [vmem:[%s1 + $0x30] sm:$0xff]
        %v892 = vld [vmem:[%s1 + $0x38] sm:$0xff]
        %v893 = vld [vmem:[%s1 + $0x40] sm:$0xff]
        %v894 = vld [vmem:[%s1 + $0x48] sm:$0xff]
        %v895 = vld [vmem:[%s1 + $0x50] sm:$0xff]
        %v896 = vld [vmem:[%s1 + $0x58] sm:$0xff]
        %v897 = vld [vmem:[%s1 + $0x60] sm:$0xff]
        %v898 = vld [vmem:[%s1 + $0x68] sm:$0xff]
        %v899 = vld [vmem:[%s1 + $0x70] sm:$0xff]
        %v900 = vld [vmem:[%s1 + $0x78] sm:$0xff]
        %v901 = vld [vmem:[%s1 + $0x80] sm:$0xff]
        %v902 = vld [vmem:[%s1 + $0x88] sm:$0xff]
        %v903 = vld [vmem:[%s1 + $0x90] sm:$0xff]
        %v904 = vld [vmem:[%s1 + $0x98] sm:$0xff]
        %v905 = vld [vmem:[%s1 + $0xa0] sm:$0xff]
        %v906 = vld [vmem:[%s1 + $0xa8] sm:$0xff]
        %v907 = vld [vmem:[%s1 + $0xb0] sm:$0xff]
        %v908 = vld [vmem:[%s1 + $0xb8] sm:$0xff]
        %v909 = vld [vmem:[%s1 + $0xc0] sm:$0xff]
        %v910 = vld [vmem:[%s1 + $0xc8] sm:$0xff]
        %v911 = vld [vmem:[%s1 + $0xd0] sm:$0xff]
        %v912 = vld [vmem:[%s1 + $0xd8] sm:$0xff]
        %v913 = vld [vmem:[%s1 + $0xe0] sm:$0xff]
        %v914 = vld [vmem:[%s1 + $0xe8] sm:$0xff]
        %v915 = vld [vmem:[%s1 + $0xf0] sm:$0xff]
        %v916 = vld [vmem:[%s1 + $0xf8] sm:$0xff]
        %v917 = vld [vmem:[%s1 + $0x100] sm:$0xff]
        %v918 = vld [vmem:[%s1 + $0x108] sm:$0xff]
        %v919 = vld [vmem:[%s1 + $0x110] sm:$0xff]
        %v920 = vld [vmem:[%s1 + $0x118] sm:$0xff]
        %v921 = vld [vmem:[%s1 + $0x120] sm:$0xff]
        %v922 = vld [vmem:[%s1 + $0x128] sm:$0xff]
        %v923 = vld [vmem:[%s1 + $0x130] sm:$0xff]
        %v924 = vld [vmem:[%s1 + $0x138] sm:$0xff]
        %v925 = vld [vmem:[%s1 + $0x140] sm:$0xff]
        %v926 = vld [vmem:[%s1 + $0x148] sm:$0xff]
        %v927 = vld [vmem:[%s1 + $0x150] sm:$0xff]
        %v928 = vld [vmem:[%s1 + $0x158] sm:$0xff]
        %v929 = vld [vmem:[%s1 + $0x160] sm:$0xff]
        %v930 = vld [vmem:[%s1 + $0x168] sm:$0xff]
        %v931 = vld [vmem:[%s1 + $0x170] sm:$0xff]
        %v932 = vld [vmem:[%s1 + $0x178] sm:$0xff]
        %v933 = vld [vmem:[#allocation3 + $0x2d0] sm:$0xff]
        %v934 = vld [vmem:[#allocation3 + $0x2d8] sm:$0xff]
        %v935 = vld [vmem:[#allocation3 + $0x2e0] sm:$0xff]
        %v936 = vld [vmem:[#allocation3 + $0x2e8] sm:$0xff]
        %v937 = vld [vmem:[#allocation3 + $0x2f0] sm:$0xff]
        %v938 = vld [vmem:[#allocation3 + $0x2f8] sm:$0xff]
        %v939 = vld [vmem:[#allocation3 + $0x300] sm:$0xff]
        %v940 = vld [vmem:[#allocation3 + $0x308] sm:$0xff]
        %v941 = vld [vmem:[#allocation3 + $0x310] sm:$0xff]
        %s942 = scalar_lea.vmem %s1, 384
        %v943 = vld [vmem:[%s942] sm:$0xff]
        %v944 = vld [vmem:[%s942 + $0x8] sm:$0xff]
        %v945 = vld [vmem:[%s942 + $0x10] sm:$0xff]
        %v946 = vld [vmem:[%s942 + $0x18] sm:$0xff]
        %v947 = vld [vmem:[%s942 + $0x20] sm:$0xff]
        %v948 = vld [vmem:[%s942 + $0x28] sm:$0xff]
        %v949 = vld [vmem:[%s942 + $0x30] sm:$0xff]
        %v950 = vld [vmem:[%s942 + $0x38] sm:$0xff]
        %v951 = vld [vmem:[%s942 + $0x40] sm:$0xff]
        %v952 = vld [vmem:[%s942 + $0x48] sm:$0xff]
        %v953 = vld [vmem:[%s942 + $0x50] sm:$0xff]
        %v954 = vld [vmem:[%s942 + $0x58] sm:$0xff]
        %v955 = vld [vmem:[%s942 + $0x60] sm:$0xff]
        %v956 = vld [vmem:[%s942 + $0x68] sm:$0xff]
        %v957 = vld [vmem:[%s942 + $0x70] sm:$0xff]
        %v958 = vld [vmem:[%s942 + $0x78] sm:$0xff]
        %v959 = vld [vmem:[%s942 + $0x80] sm:$0xff]
        %v960 = vld [vmem:[%s942 + $0x88] sm:$0xff]
        %v961 = vld [vmem:[%s942 + $0x90] sm:$0xff]
        %v962 = vld [vmem:[%s942 + $0x98] sm:$0xff]
        %v963 = vld [vmem:[%s942 + $0xa0] sm:$0xff]
        %v964 = vld [vmem:[%s942 + $0xa8] sm:$0xff]
        %v965 = vld [vmem:[%s942 + $0xb0] sm:$0xff]
        %v966 = vld [vmem:[%s942 + $0xb8] sm:$0xff]
        %v967 = vld [vmem:[%s942 + $0xc0] sm:$0xff]
        %v968 = vld [vmem:[%s942 + $0xc8] sm:$0xff]
        %v969 = vld [vmem:[%s942 + $0xd0] sm:$0xff]
        %v970 = vld [vmem:[%s942 + $0xd8] sm:$0xff]
        %v971 = vld [vmem:[%s942 + $0xe0] sm:$0xff]
        %v972 = vld [vmem:[%s942 + $0xe8] sm:$0xff]
        %v973 = vld [vmem:[%s942 + $0xf0] sm:$0xff]
        %v974 = vld [vmem:[%s942 + $0xf8] sm:$0xff]
        %v975 = vld [vmem:[%s942 + $0x100] sm:$0xff]
        %v976 = vld [vmem:[%s942 + $0x108] sm:$0xff]
        %v977 = vld [vmem:[%s942 + $0x110] sm:$0xff]
        %v978 = vld [vmem:[%s942 + $0x118] sm:$0xff]
        %v979 = vld [vmem:[%s942 + $0x120] sm:$0xff]
        %v980 = vld [vmem:[%s942 + $0x128] sm:$0xff]
        %v981 = vld [vmem:[%s942 + $0x130] sm:$0xff]
        %v982 = vld [vmem:[%s942 + $0x138] sm:$0xff]
        %v983 = vld [vmem:[%s942 + $0x140] sm:$0xff]
        %v984 = vld [vmem:[%s942 + $0x148] sm:$0xff]
        %v985 = vld [vmem:[%s942 + $0x150] sm:$0xff]
        %v986 = vld [vmem:[%s942 + $0x158] sm:$0xff]
        %v987 = vld [vmem:[%s942 + $0x160] sm:$0xff]
        %v988 = vld [vmem:[%s942 + $0x168] sm:$0xff]
        %v989 = vld [vmem:[%s942 + $0x170] sm:$0xff]
        %v990 = vld [vmem:[%s942 + $0x178] sm:$0xff]
        %991 = vmatprep.subr.mxu0 0.0
        %992 = vmatpush1.msra.mxu0 %v943
        %993 = vmatprep.subr.mxu0 0.0
        %994 = vmatpush1.msra.mxu0 %v944
        %995 = vmatprep.subr.mxu0 0.0
        %996 = vmatpush1.msra.mxu0 %v945
        %997 = vmatprep.subr.mxu0 0.0
        %998 = vmatpush1.msra.mxu0 %v946
        %999 = vmatprep.subr.mxu0 0.0
        %1000 = vmatpush1.msra.mxu0 %v947
        %1001 = vmatprep.subr.mxu0 0.0
        %1002 = vmatpush1.msra.mxu0 %v948
        %1003 = vmatprep.subr.mxu0 0.0
        %1004 = vmatpush1.msra.mxu0 %v949
        %1005 = vmatprep.subr.mxu0 0.0
        %1006 = vmatpush1.msra.mxu0 %v950
        %1007 = vmatprep.subr.mxu0 0.0
        %1008 = vmatpush1.msra.mxu0 %v951
        %1009 = vmatprep.subr.mxu0 0.0
        %1010 = vmatpush1.msra.mxu0 %v952
        %1011 = vmatprep.subr.mxu0 0.0
        %1012 = vmatpush1.msra.mxu0 %v953
        %1013 = vmatprep.subr.mxu0 0.0
        %1014 = vmatpush1.msra.mxu0 %v954
        %1015 = vmatprep.subr.mxu0 0.0
        %1016 = vmatpush1.msra.mxu0 %v955
        %1017 = vmatprep.subr.mxu0 0.0
        %1018 = vmatpush1.msra.mxu0 %v956
        %1019 = vmatprep.subr.mxu0 0.0
        %1020 = vmatpush1.msra.mxu0 %v957
        %1021 = vmatprep.subr.mxu0 0.0
        %1022 = vmatpush1.msra.mxu0 %v958
        %1023 = vmatprep.subr.mxu0 0.0
        %1024 = vmatpush1.msra.mxu0 %v959
        %1025 = vmatprep.subr.mxu0 0.0
        %1026 = vmatpush1.msra.mxu0 %v960
        %1027 = vmatprep.subr.mxu0 0.0
        %1028 = vmatpush1.msra.mxu0 %v961
        %1029 = vmatprep.subr.mxu0 0.0
        %1030 = vmatpush1.msra.mxu0 %v962
        %1031 = vmatprep.subr.mxu0 0.0
        %1032 = vmatpush1.msra.mxu0 %v963
        %1033 = vmatprep.subr.mxu0 0.0
        %1034 = vmatpush1.msra.mxu0 %v964
        %1035 = vmatprep.subr.mxu0 0.0
        %1036 = vmatpush1.msra.mxu0 %v965
        %1037 = vmatprep.subr.mxu0 0.0
        %1038 = vmatpush1.msra.mxu0 %v966
        %1039 = vmatprep.subr.mxu0 0.0
        %1040 = vmatpush1.msra.mxu0 %v967
        %1041 = vmatprep.subr.mxu0 0.0
        %1042 = vmatpush1.msra.mxu0 %v968
        %1043 = vmatprep.subr.mxu0 0.0
        %1044 = vmatpush1.msra.mxu0 %v969
        %1045 = vmatprep.subr.mxu0 0.0
        %1046 = vmatpush1.msra.mxu0 %v970
        %1047 = vmatprep.subr.mxu0 0.0
        %1048 = vmatpush1.msra.mxu0 %v971
        %1049 = vmatprep.subr.mxu0 0.0
        %1050 = vmatpush1.msra.mxu0 %v972
        %1051 = vmatprep.subr.mxu0 0.0
        %1052 = vmatpush1.msra.mxu0 %v973
        %1053 = vmatprep.subr.mxu0 0.0
        %1054 = vmatpush1.msra.mxu0 %v974
        %1055 = vmatprep.mubr.f32.mxu0 %v805
        %1056 = vmatmul.mubr.f32.gmra.mrb[0].mxu0 %v804
        %v1057 = vpop.f32.mrb[0].mxu0
        %v1058 = vadd.f32 0.0, %v1057
        %v1059 = vpop.f32.mrb[0].mxu0
        %1060 = vmatprep.mubr.f32.mxu0 %v808
        %1061 = vmatmul.mubr.f32.gmra.mrb[0].mxu0 %v807
        %v1062 = vpop.f32.mrb[0].mxu0
        %v1063 = vadd.f32 0.0, %v1062
        %v1064 = vpop.f32.mrb[0].mxu0
        %1065 = vmatprep.mubr.f32.mxu0 %v811
        %1066 = vmatmul.mubr.f32.gmra.mrb[0].mxu0 %v810
        %v1067 = vpop.f32.mrb[0].mxu0
        %v1068 = vadd.f32 0.0, %v1067
        %v1069 = vpop.f32.mrb[0].mxu0
        %1070 = vmatprep.mubr.f32.mxu0 %v814
        %1071 = vmatmul.mubr.f32.gmra.mrb[0].mxu0 %v813
        %v1072 = vpop.f32.mrb[0].mxu0
        %v1073 = vadd.f32 0.0, %v1072
        %v1074 = vpop.f32.mrb[0].mxu0
        %1075 = vmatprep.mubr.f32.mxu0 %v817
        %1076 = vmatmul.mubr.f32.gmra.mrb[0].mxu0 %v816
        %v1077 = vpop.f32.mrb[0].mxu0
        %v1078 = vadd.f32 0.0, %v1077
        %v1079 = vpop.f32.mrb[0].mxu0
        %1080 = vmatprep.mubr.f32.mxu0 %v820
        %1081 = vmatmul.mubr.f32.gmra.mrb[0].mxu0 %v819
        %v1082 = vpop.f32.mrb[0].mxu0
        %v1083 = vadd.f32 0.0, %v1082
        %v1084 = vpop.f32.mrb[0].mxu0
        %1085 = vmatprep.mubr.f32.mxu0 %v823
        %1086 = vmatmul.mubr.f32.gmra.mrb[0].mxu0 %v822
        %v1087 = vpop.f32.mrb[0].mxu0
        %v1088 = vadd.f32 0.0, %v1087
        %v1089 = vpop.f32.mrb[0].mxu0
        %1090 = vmatprep.mubr.f32.mxu0 %v826
        %1091 = vmatmul.mubr.f32.gmra.mrb[0].mxu0 %v825
        %v1092 = vpop.f32.mrb[0].mxu0
        %v1093 = vadd.f32 0.0, %v1092
        %v1094 = vpop.f32.mrb[0].mxu0
        %1095 = vmatprep.mubr.f32.mxu0 %v829
        %1096 = vmatmul.mubr.f32.gmra.mrb[0].mxu0 %v828
        %v1097 = vpop.f32.mrb[0].mxu0
        %v1098 = vadd.f32 0.0, %v1097
        %v1099 = vpop.f32.mrb[0].mxu0
        %1100 = vmatprep.mubr.f32.mxu0 %v832
        %1101 = vmatmul.mubr.f32.gmra.mrb[0].mxu0 %v831
        %v1102 = vpop.f32.mrb[0].mxu0
        %v1103 = vadd.f32 0.0, %v1102
        %v1104 = vpop.f32.mrb[0].mxu0
        %1105 = vmatprep.mubr.f32.mxu0 %v835
        %1106 = vmatmul.mubr.f32.gmra.mrb[0].mxu0 %v834
        %v1107 = vpop.f32.mrb[0].mxu0
        %v1108 = vadd.f32 0.0, %v1107
        %v1109 = vpop.f32.mrb[0].mxu0
        %1110 = vmatprep.mubr.f32.mxu0 %v838
        %1111 = vmatmul.mubr.f32.gmra.mrb[0].mxu0 %v837
        %v1112 = vpop.f32.mrb[0].mxu0
        %v1113 = vadd.f32 0.0, %v1112
        %v1114 = vpop.f32.mrb[0].mxu0
        %1115 = vmatprep.mubr.f32.mxu0 %v841
        %1116 = vmatmul.mubr.f32.gmra.mrb[0].mxu0 %v840
        %v1117 = vpop.f32.mrb[0].mxu0
        %v1118 = vadd.f32 0.0, %v1117
        %v1119 = vpop.f32.mrb[0].mxu0
        %1120 = vmatprep.mubr.f32.mxu0 %v844
        %1121 = vmatmul.mubr.f32.gmra.mrb[0].mxu0 %v843
        %v1122 = vpop.f32.mrb[0].mxu0
        %v1123 = vadd.f32 0.0, %v1122
        %v1124 = vpop.f32.mrb[0].mxu0
        %1125 = vmatprep.mubr.f32.mxu0 %v847
        %1126 = vmatmul.mubr.f32.gmra.mrb[0].mxu0 %v846
        %v1127 = vpop.f32.mrb[0].mxu0
        %v1128 = vadd.f32 0.0, %v1127
        %v1129 = vpop.f32.mrb[0].mxu0
        %1130 = vmatprep.mubr.f32.mxu0 %v850
        %1131 = vmatmul.mubr.f32.gmra.mrb[0].mxu0 %v849
        %v1132 = vpop.f32.mrb[0].mxu0
        %v1133 = vadd.f32 0.0, %v1132
        %v1134 = vpop.f32.mrb[0].mxu0
        %1135 = vmatprep.mubr.f32.mxu0 %v853
        %1136 = vmatmul.mubr.f32.gmra.mrb[0].mxu0 %v852
        %v1137 = vpop.f32.mrb[0].mxu0
        %v1138 = vadd.f32 0.0, %v1137
        %v1139 = vpop.f32.mrb[0].mxu0
        %1140 = vmatprep.mubr.f32.mxu0 %v856
        %1141 = vmatmul.mubr.f32.gmra.mrb[0].mxu0 %v855
        %v1142 = vpop.f32.mrb[0].mxu0
        %v1143 = vadd.f32 0.0, %v1142
        %v1144 = vpop.f32.mrb[0].mxu0
        %1145 = vmatprep.mubr.f32.mxu0 %v859
        %1146 = vmatmul.mubr.f32.gmra.mrb[0].mxu0 %v858
        %v1147 = vpop.f32.mrb[0].mxu0
        %v1148 = vadd.f32 0.0, %v1147
        %v1149 = vpop.f32.mrb[0].mxu0
        %1150 = vmatprep.mubr.f32.mxu0 %v862
        %1151 = vmatmul.mubr.f32.gmra.mrb[0].mxu0 %v861
        %v1152 = vpop.f32.mrb[0].mxu0
        %v1153 = vadd.f32 0.0, %v1152
        %v1154 = vpop.f32.mrb[0].mxu0
        %1155 = vmatprep.mubr.f32.mxu0 %v865
        %1156 = vmatmul.mubr.f32.gmra.mrb[0].mxu0 %v864
        %v1157 = vpop.f32.mrb[0].mxu0
        %v1158 = vadd.f32 0.0, %v1157
        %v1159 = vpop.f32.mrb[0].mxu0
        %1160 = vmatprep.mubr.f32.mxu0 %v868
        %1161 = vmatmul.mubr.f32.gmra.mrb[0].mxu0 %v867
        %v1162 = vpop.f32.mrb[0].mxu0
        %v1163 = vadd.f32 0.0, %v1162
        %v1164 = vpop.f32.mrb[0].mxu0
        %1165 = vmatprep.mubr.f32.mxu0 %v871
        %1166 = vmatmul.mubr.f32.gmra.mrb[0].mxu0 %v870
        %v1167 = vpop.f32.mrb[0].mxu0
        %v1168 = vadd.f32 0.0, %v1167
        %v1169 = vpop.f32.mrb[0].mxu0
        %1170 = vmatprep.mubr.f32.mxu0 %v874
        %1171 = vmatmul.mubr.f32.gmra.mrb[0].mxu0 %v873
        %v1172 = vpop.f32.mrb[0].mxu0
        %v1173 = vadd.f32 0.0, %v1172
        %v1174 = vpop.f32.mrb[0].mxu0
        %1175 = vmatprep.mubr.f32.mxu0 %v877
        %1176 = vmatmul.mubr.f32.gmra.mrb[0].mxu0 %v876
        %v1177 = vpop.f32.mrb[0].mxu0
        %v1178 = vadd.f32 0.0, %v1177
        %v1179 = vpop.f32.mrb[0].mxu0
        %1180 = vmatprep.mubr.f32.mxu0 %v880
        %1181 = vmatmul.mubr.f32.gmra.mrb[0].mxu0 %v879
        %v1182 = vpop.f32.mrb[0].mxu0
        %v1183 = vadd.f32 0.0, %v1182
        %v1184 = vpop.f32.mrb[0].mxu0
        %1185 = vmatprep.mubr.f32.mxu0 %v883
        %1186 = vmatmul.mubr.f32.gmra.mrb[0].mxu0 %v882
        %v1187 = vpop.f32.mrb[0].mxu0
        %v1188 = vadd.f32 0.0, %v1187
        %v1189 = vpop.f32.mrb[0].mxu0
        %1190 = vmatprep.mubr.f32.mxu0 %v934
        %1191 = vmatmul.mubr.f32.gmra.mrb[0].mxu0 %v933
        %v1192 = vpop.f32.mrb[0].mxu0
        %v1193 = vadd.f32 0.0, %v1192
        %v1194 = vpop.f32.mrb[0].mxu0
        %1195 = vmatprep.mubr.f32.mxu0 %v937
        %1196 = vmatmul.mubr.f32.gmra.mrb[0].mxu0 %v936
        %v1197 = vpop.f32.mrb[0].mxu0
        %v1198 = vadd.f32 0.0, %v1197
        %v1199 = vpop.f32.mrb[0].mxu0
        %1200 = vmatprep.mubr.f32.mxu0 %v940
        %1201 = vmatmul.mubr.f32.gmra.mrb[0].mxu0 %v939
        %v1202 = vpop.f32.mrb[0].mxu0
        %v1203 = vadd.f32 0.0, %v1202
        %v1204 = vpop.f32.mrb[0].mxu0
        %1205 = vdwg.mxu0
        %1206 = vmatprep.subr.mxu0 0.0
        %1207 = vmatpush1.msra.mxu0 %v975
        %1208 = vmatprep.subr.mxu0 0.0
        %1209 = vmatpush1.msra.mxu0 %v976
        %1210 = vmatprep.subr.mxu0 0.0
        %1211 = vmatpush1.msra.mxu0 %v977
        %1212 = vmatprep.subr.mxu0 0.0
        %1213 = vmatpush1.msra.mxu0 %v978
        %1214 = vmatprep.subr.mxu0 0.0
        %1215 = vmatpush1.msra.mxu0 %v979
        %1216 = vmatprep.subr.mxu0 0.0
        %1217 = vmatpush1.msra.mxu0 %v980
        %1218 = vmatprep.subr.mxu0 0.0
        %1219 = vmatpush1.msra.mxu0 %v981
        %1220 = vmatprep.subr.mxu0 0.0
        %1221 = vmatpush1.msra.mxu0 %v982
        %1222 = vmatprep.subr.mxu0 0.0
        %1223 = vmatpush1.msra.mxu0 %v983
        %1224 = vmatprep.subr.mxu0 0.0
        %1225 = vmatpush1.msra.mxu0 %v984
        %1226 = vmatprep.subr.mxu0 0.0
        %1227 = vmatpush1.msra.mxu0 %v985
        %1228 = vmatprep.subr.mxu0 0.0
        %1229 = vmatpush1.msra.mxu0 %v986
        %1230 = vmatprep.subr.mxu0 0.0
        %1231 = vmatpush1.msra.mxu0 %v987
        %1232 = vmatprep.subr.mxu0 0.0
        %1233 = vmatpush1.msra.mxu0 %v988
        %1234 = vmatprep.subr.mxu0 0.0
        %1235 = vmatpush1.msra.mxu0 %v989
        %1236 = vmatprep.subr.mxu0 0.0
        %1237 = vmatpush1.msra.mxu0 %v990
        %1238 = vmatprep.subr.mxu0 0.0
        %1239 = vmatpush1.msra.mxu0 0.0
        %1240 = vmatprep.subr.mxu0 0.0
        %1241 = vmatpush1.msra.mxu0 0.0
        %1242 = vmatprep.subr.mxu0 0.0
        %1243 = vmatpush1.msra.mxu0 0.0
        %1244 = vmatprep.subr.mxu0 0.0
        %1245 = vmatpush1.msra.mxu0 0.0
        %1246 = vmatprep.subr.mxu0 0.0
        %1247 = vmatpush1.msra.mxu0 0.0
        %1248 = vmatprep.subr.mxu0 0.0
        %1249 = vmatpush1.msra.mxu0 0.0
        %1250 = vmatprep.subr.mxu0 0.0
        %1251 = vmatpush1.msra.mxu0 0.0
        %1252 = vmatprep.subr.mxu0 0.0
        %1253 = vmatpush1.msra.mxu0 0.0
        %1254 = vmatprep.subr.mxu0 0.0
        %1255 = vmatpush1.msra.mxu0 0.0
        %1256 = vmatprep.subr.mxu0 0.0
        %1257 = vmatpush1.msra.mxu0 0.0
        %1258 = vmatprep.subr.mxu0 0.0
        %1259 = vmatpush1.msra.mxu0 0.0
        %1260 = vmatprep.subr.mxu0 0.0
        %1261 = vmatpush1.msra.mxu0 0.0
        %1262 = vmatprep.subr.mxu0 0.0
        %1263 = vmatpush1.msra.mxu0 0.0
        %1264 = vmatprep.subr.mxu0 0.0
        %1265 = vmatpush1.msra.mxu0 0.0
        %1266 = vmatprep.subr.mxu0 0.0
        %1267 = vmatpush1.msra.mxu0 0.0
        %1268 = vmatprep.subr.mxu0 0.0
        %1269 = vmatpush1.msra.mxu0 0.0
        %1270 = vmatprep.mubr.f32.mxu0 0.0
        %1271 = vmatmul.mubr.f32.gmra.mrb[0].mxu0 %v806
        %v1272 = vpop.f32.mrb[0].mxu0
        %v1273 = vadd.f32 %v1058, %v1272
        %v1274 = vpop.f32.mrb[0].mxu0
        %1275 = vmatprep.mubr.f32.mxu0 0.0
        %1276 = vmatmul.mubr.f32.gmra.mrb[0].mxu0 %v809
        %v1277 = vpop.f32.mrb[0].mxu0
        %v1278 = vadd.f32 %v1063, %v1277
        %v1279 = vpop.f32.mrb[0].mxu0
        %1280 = vmatprep.mubr.f32.mxu0 0.0
        %1281 = vmatmul.mubr.f32.gmra.mrb[0].mxu0 %v812
        %v1282 = vpop.f32.mrb[0].mxu0
        %v1283 = vadd.f32 %v1068, %v1282
        %v1284 = vpop.f32.mrb[0].mxu0
        %1285 = vmatprep.mubr.f32.mxu0 0.0
        %1286 = vmatmul.mubr.f32.gmra.mrb[0].mxu0 %v815
        %v1287 = vpop.f32.mrb[0].mxu0
        %v1288 = vadd.f32 %v1073, %v1287
        %v1289 = vpop.f32.mrb[0].mxu0
        %1290 = vmatprep.mubr.f32.mxu0 0.0
        %1291 = vmatmul.mubr.f32.gmra.mrb[0].mxu0 %v818
        %v1292 = vpop.f32.mrb[0].mxu0
        %v1293 = vadd.f32 %v1078, %v1292
        %v1294 = vpop.f32.mrb[0].mxu0
        %1295 = vmatprep.mubr.f32.mxu0 0.0
        %1296 = vmatmul.mubr.f32.gmra.mrb[0].mxu0 %v821
        %v1297 = vpop.f32.mrb[0].mxu0
        %v1298 = vadd.f32 %v1083, %v1297
        %v1299 = vpop.f32.mrb[0].mxu0
        %1300 = vmatprep.mubr.f32.mxu0 0.0
        %1301 = vmatmul.mubr.f32.gmra.mrb[0].mxu0 %v824
        %v1302 = vpop.f32.mrb[0].mxu0
        %v1303 = vadd.f32 %v1088, %v1302
        %v1304 = vpop.f32.mrb[0].mxu0
        %1305 = vmatprep.mubr.f32.mxu0 0.0
        %1306 = vmatmul.mubr.f32.gmra.mrb[0].mxu0 %v827
        %v1307 = vpop.f32.mrb[0].mxu0
        %v1308 = vadd.f32 %v1093, %v1307
        %v1309 = vpop.f32.mrb[0].mxu0
        %1310 = vmatprep.mubr.f32.mxu0 0.0
        %1311 = vmatmul.mubr.f32.gmra.mrb[0].mxu0 %v830
        %v1312 = vpop.f32.mrb[0].mxu0
        %v1313 = vadd.f32 %v1098, %v1312
        %v1314 = vpop.f32.mrb[0].mxu0
        %1315 = vmatprep.mubr.f32.mxu0 0.0
        %1316 = vmatmul.mubr.f32.gmra.mrb[0].mxu0 %v833
        %v1317 = vpop.f32.mrb[0].mxu0
        %v1318 = vadd.f32 %v1103, %v1317
        %v1319 = vpop.f32.mrb[0].mxu0
        %1320 = vmatprep.mubr.f32.mxu0 0.0
        %1321 = vmatmul.mubr.f32.gmra.mrb[0].mxu0 %v836
        %v1322 = vpop.f32.mrb[0].mxu0
        %v1323 = vadd.f32 %v1108, %v1322
        %v1324 = vpop.f32.mrb[0].mxu0
        %1325 = vmatprep.mubr.f32.mxu0 0.0
        %1326 = vmatmul.mubr.f32.gmra.mrb[0].mxu0 %v839
        %v1327 = vpop.f32.mrb[0].mxu0
        %v1328 = vadd.f32 %v1113, %v1327
        %v1329 = vpop.f32.mrb[0].mxu0
        %1330 = vmatprep.mubr.f32.mxu0 0.0
        %1331 = vmatmul.mubr.f32.gmra.mrb[0].mxu0 %v842
        %v1332 = vpop.f32.mrb[0].mxu0
        %v1333 = vadd.f32 %v1118, %v1332
        %v1334 = vpop.f32.mrb[0].mxu0
        %1335 = vmatprep.mubr.f32.mxu0 0.0
        %1336 = vmatmul.mubr.f32.gmra.mrb[0].mxu0 %v845
        %v1337 = vpop.f32.mrb[0].mxu0
        %v1338 = vadd.f32 %v1123, %v1337
        %v1339 = vpop.f32.mrb[0].mxu0
        %1340 = vmatprep.mubr.f32.mxu0 0.0
        %1341 = vmatmul.mubr.f32.gmra.mrb[0].mxu0 %v848
        %v1342 = vpop.f32.mrb[0].mxu0
        %v1343 = vadd.f32 %v1128, %v1342
        %v1344 = vpop.f32.mrb[0].mxu0
        %1345 = vmatprep.mubr.f32.mxu0 0.0
        %1346 = vmatmul.mubr.f32.gmra.mrb[0].mxu0 %v851
        %v1347 = vpop.f32.mrb[0].mxu0
        %v1348 = vadd.f32 %v1133, %v1347
        %v1349 = vpop.f32.mrb[0].mxu0
        %1350 = vmatprep.mubr.f32.mxu0 0.0
        %1351 = vmatmul.mubr.f32.gmra.mrb[0].mxu0 %v854
        %v1352 = vpop.f32.mrb[0].mxu0
        %v1353 = vadd.f32 %v1138, %v1352
        %v1354 = vpop.f32.mrb[0].mxu0
        %1355 = vmatprep.mubr.f32.mxu0 0.0
        %1356 = vmatmul.mubr.f32.gmra.mrb[0].mxu0 %v857
        %v1357 = vpop.f32.mrb[0].mxu0
        %v1358 = vadd.f32 %v1143, %v1357
        %v1359 = vpop.f32.mrb[0].mxu0
        %1360 = vmatprep.mubr.f32.mxu0 0.0
        %1361 = vmatmul.mubr.f32.gmra.mrb[0].mxu0 %v860
        %v1362 = vpop.f32.mrb[0].mxu0
        %v1363 = vadd.f32 %v1148, %v1362
        %v1364 = vpop.f32.mrb[0].mxu0
        %1365 = vmatprep.mubr.f32.mxu0 0.0
        %1366 = vmatmul.mubr.f32.gmra.mrb[0].mxu0 %v863
        %v1367 = vpop.f32.mrb[0].mxu0
        %v1368 = vadd.f32 %v1153, %v1367
        %v1369 = vpop.f32.mrb[0].mxu0
        %1370 = vmatprep.mubr.f32.mxu0 0.0
        %1371 = vmatmul.mubr.f32.gmra.mrb[0].mxu0 %v866
        %v1372 = vpop.f32.mrb[0].mxu0
        %v1373 = vadd.f32 %v1158, %v1372
        %v1374 = vpop.f32.mrb[0].mxu0
        %1375 = vmatprep.mubr.f32.mxu0 0.0
        %1376 = vmatmul.mubr.f32.gmra.mrb[0].mxu0 %v869
        %v1377 = vpop.f32.mrb[0].mxu0
        %v1378 = vadd.f32 %v1163, %v1377
        %v1379 = vpop.f32.mrb[0].mxu0
        %1380 = vmatprep.mubr.f32.mxu0 0.0
        %1381 = vmatmul.mubr.f32.gmra.mrb[0].mxu0 %v872
        %v1382 = vpop.f32.mrb[0].mxu0
        %v1383 = vadd.f32 %v1168, %v1382
        %v1384 = vpop.f32.mrb[0].mxu0
        %1385 = vmatprep.mubr.f32.mxu0 0.0
        %1386 = vmatmul.mubr.f32.gmra.mrb[0].mxu0 %v875
        %v1387 = vpop.f32.mrb[0].mxu0
        %v1388 = vadd.f32 %v1173, %v1387
        %v1389 = vpop.f32.mrb[0].mxu0
        %1390 = vmatprep.mubr.f32.mxu0 0.0
        %1391 = vmatmul.mubr.f32.gmra.mrb[0].mxu0 %v878
        %v1392 = vpop.f32.mrb[0].mxu0
        %v1393 = vadd.f32 %v1178, %v1392
        %v1394 = vpop.f32.mrb[0].mxu0
        %1395 = vmatprep.mubr.f32.mxu0 0.0
        %1396 = vmatmul.mubr.f32.gmra.mrb[0].mxu0 %v881
        %v1397 = vpop.f32.mrb[0].mxu0
        %v1398 = vadd.f32 %v1183, %v1397
        %v1399 = vpop.f32.mrb[0].mxu0
        %1400 = vmatprep.mubr.f32.mxu0 0.0
        %1401 = vmatmul.mubr.f32.gmra.mrb[0].mxu0 %v884
        %v1402 = vpop.f32.mrb[0].mxu0
        %v1403 = vadd.f32 %v1188, %v1402
        %v1404 = vpop.f32.mrb[0].mxu0
        %1405 = vmatprep.mubr.f32.mxu0 0.0
        %1406 = vmatmul.mubr.f32.gmra.mrb[0].mxu0 %v935
        %v1407 = vpop.f32.mrb[0].mxu0
        %v1408 = vadd.f32 %v1193, %v1407
        %v1409 = vpop.f32.mrb[0].mxu0
        %1410 = vmatprep.mubr.f32.mxu0 0.0
        %1411 = vmatmul.mubr.f32.gmra.mrb[0].mxu0 %v938
        %v1412 = vpop.f32.mrb[0].mxu0
        %v1413 = vadd.f32 %v1198, %v1412
        %v1414 = vpop.f32.mrb[0].mxu0
        %1415 = vmatprep.mubr.f32.mxu0 0.0
        %1416 = vmatmul.mubr.f32.gmra.mrb[0].mxu0 %v941
        %v1417 = vpop.f32.mrb[0].mxu0
        %v1418 = vadd.f32 %v1203, %v1417
        %v1419 = vpop.f32.mrb[0].mxu0
        %1420 = vdwg.mxu0
        %1421 = vmatprep.subr.mxu0 0.0
        %1422 = vmatpush1.msra.mxu0 %v885
        %1423 = vmatprep.subr.mxu0 0.0
        %1424 = vmatpush1.msra.mxu0 %v886
        %1425 = vmatprep.subr.mxu0 0.0
        %1426 = vmatpush1.msra.mxu0 %v887
        %1427 = vmatprep.subr.mxu0 0.0
        %1428 = vmatpush1.msra.mxu0 %v888
        %1429 = vmatprep.subr.mxu0 0.0
        %1430 = vmatpush1.msra.mxu0 %v889
        %1431 = vmatprep.subr.mxu0 0.0
        %1432 = vmatpush1.msra.mxu0 %v890
        %1433 = vmatprep.subr.mxu0 0.0
        %1434 = vmatpush1.msra.mxu0 %v891
        %1435 = vmatprep.subr.mxu0 0.0
        %1436 = vmatpush1.msra.mxu0 %v892
        %1437 = vmatprep.subr.mxu0 0.0
        %1438 = vmatpush1.msra.mxu0 %v893
        %1439 = vmatprep.subr.mxu0 0.0
        %1440 = vmatpush1.msra.mxu0 %v894
        %1441 = vmatprep.subr.mxu0 0.0
        %1442 = vmatpush1.msra.mxu0 %v895
        %1443 = vmatprep.subr.mxu0 0.0
        %1444 = vmatpush1.msra.mxu0 %v896
        %1445 = vmatprep.subr.mxu0 0.0
        %1446 = vmatpush1.msra.mxu0 %v897
        %1447 = vmatprep.subr.mxu0 0.0
        %1448 = vmatpush1.msra.mxu0 %v898
        %1449 = vmatprep.subr.mxu0 0.0
        %1450 = vmatpush1.msra.mxu0 %v899
        %1451 = vmatprep.subr.mxu0 0.0
        %1452 = vmatpush1.msra.mxu0 %v900
        %1453 = vmatprep.subr.mxu0 0.0
        %1454 = vmatpush1.msra.mxu0 %v901
        %1455 = vmatprep.subr.mxu0 0.0
        %1456 = vmatpush1.msra.mxu0 %v902
        %1457 = vmatprep.subr.mxu0 0.0
        %1458 = vmatpush1.msra.mxu0 %v903
        %1459 = vmatprep.subr.mxu0 0.0
        %1460 = vmatpush1.msra.mxu0 %v904
        %1461 = vmatprep.subr.mxu0 0.0
        %1462 = vmatpush1.msra.mxu0 %v905
        %1463 = vmatprep.subr.mxu0 0.0
        %1464 = vmatpush1.msra.mxu0 %v906
        %1465 = vmatprep.subr.mxu0 0.0
        %1466 = vmatpush1.msra.mxu0 %v907
        %1467 = vmatprep.subr.mxu0 0.0
        %1468 = vmatpush1.msra.mxu0 %v908
        %1469 = vmatprep.subr.mxu0 0.0
        %1470 = vmatpush1.msra.mxu0 %v909
        %1471 = vmatprep.subr.mxu0 0.0
        %1472 = vmatpush1.msra.mxu0 %v910
        %1473 = vmatprep.subr.mxu0 0.0
        %1474 = vmatpush1.msra.mxu0 %v911
        %1475 = vmatprep.subr.mxu0 0.0
        %1476 = vmatpush1.msra.mxu0 %v912
        %1477 = vmatprep.subr.mxu0 0.0
        %1478 = vmatpush1.msra.mxu0 %v913
        %1479 = vmatprep.subr.mxu0 0.0
        %1480 = vmatpush1.msra.mxu0 %v914
        %1481 = vmatprep.subr.mxu0 0.0
        %1482 = vmatpush1.msra.mxu0 %v915
        %1483 = vmatprep.subr.mxu0 0.0
        %1484 = vmatpush1.msra.mxu0 %v916
        %1485 = vmatprep.mubr.f32.mxu0 %v796
        %1486 = vmatmul.mubr.f32.gmra.mrb[0].mxu0 %v795
        %v1487 = vpop.f32.mrb[0].mxu0
        %v1488 = vadd.f32 %v1273, %v1487
        %v1489 = vpop.f32.mrb[0].mxu0
        %1490 = vmatprep.mubr.f32.mxu0 %v799
        %1491 = vmatmul.mubr.f32.gmra.mrb[0].mxu0 %v798
        %v1492 = vpop.f32.mrb[0].mxu0
        %v1493 = vadd.f32 %v1278, %v1492
        %v1494 = vpop.f32.mrb[0].mxu0
        %1495 = vmatprep.mubr.f32.mxu0 %v802
        %1496 = vmatmul.mubr.f32.gmra.mrb[0].mxu0 %v801
        %v1497 = vpop.f32.mrb[0].mxu0
        %v1498 = vadd.f32 %v1283, %v1497
        %v1499 = vpop.f32.mrb[0].mxu0
        %1500 = vmatprep.mubr.f32.mxu0 %v805
        %1501 = vmatmul.mubr.f32.gmra.mrb[0].mxu0 %v804
        %v1502 = vpop.f32.mrb[0].mxu0
        %v1503 = vadd.f32 %v1288, %v1502
        %v1504 = vpop.f32.mrb[0].mxu0
        %1505 = vmatprep.mubr.f32.mxu0 %v808
        %1506 = vmatmul.mubr.f32.gmra.mrb[0].mxu0 %v807
        %v1507 = vpop.f32.mrb[0].mxu0
        %v1508 = vadd.f32 %v1293, %v1507
        %v1509 = vpop.f32.mrb[0].mxu0
        %1510 = vmatprep.mubr.f32.mxu0 %v811
        %1511 = vmatmul.mubr.f32.gmra.mrb[0].mxu0 %v810
        %v1512 = vpop.f32.mrb[0].mxu0
        %v1513 = vadd.f32 %v1298, %v1512
        %v1514 = vpop.f32.mrb[0].mxu0
        %1515 = vmatprep.mubr.f32.mxu0 %v814
        %1516 = vmatmul.mubr.f32.gmra.mrb[0].mxu0 %v813
        %v1517 = vpop.f32.mrb[0].mxu0
        %v1518 = vadd.f32 %v1303, %v1517
        %v1519 = vpop.f32.mrb[0].mxu0
        %1520 = vmatprep.mubr.f32.mxu0 %v817
        %1521 = vmatmul.mubr.f32.gmra.mrb[0].mxu0 %v816
        %v1522 = vpop.f32.mrb[0].mxu0
        %v1523 = vadd.f32 %v1308, %v1522
        %v1524 = vpop.f32.mrb[0].mxu0
        %1525 = vmatprep.mubr.f32.mxu0 %v820
        %1526 = vmatmul.mubr.f32.gmra.mrb[0].mxu0 %v819
        %v1527 = vpop.f32.mrb[0].mxu0
        %v1528 = vadd.f32 %v1313, %v1527
        %v1529 = vpop.f32.mrb[0].mxu0
        %1530 = vmatprep.mubr.f32.mxu0 %v823
        %1531 = vmatmul.mubr.f32.gmra.mrb[0].mxu0 %v822
        %v1532 = vpop.f32.mrb[0].mxu0
        %v1533 = vadd.f32 %v1318, %v1532
        %v1534 = vpop.f32.mrb[0].mxu0
        %1535 = vmatprep.mubr.f32.mxu0 %v826
        %1536 = vmatmul.mubr.f32.gmra.mrb[0].mxu0 %v825
        %v1537 = vpop.f32.mrb[0].mxu0
        %v1538 = vadd.f32 %v1323, %v1537
        %v1539 = vpop.f32.mrb[0].mxu0
        %1540 = vmatprep.mubr.f32.mxu0 %v829
        %1541 = vmatmul.mubr.f32.gmra.mrb[0].mxu0 %v828
        %v1542 = vpop.f32.mrb[0].mxu0
        %v1543 = vadd.f32 %v1328, %v1542
        %v1544 = vpop.f32.mrb[0].mxu0
        %1545 = vmatprep.mubr.f32.mxu0 %v832
        %1546 = vmatmul.mubr.f32.gmra.mrb[0].mxu0 %v831
        %v1547 = vpop.f32.mrb[0].mxu0
        %v1548 = vadd.f32 %v1333, %v1547
        %v1549 = vpop.f32.mrb[0].mxu0
        %1550 = vmatprep.mubr.f32.mxu0 %v835
        %1551 = vmatmul.mubr.f32.gmra.mrb[0].mxu0 %v834
        %v1552 = vpop.f32.mrb[0].mxu0
        %v1553 = vadd.f32 %v1338, %v1552
        %v1554 = vpop.f32.mrb[0].mxu0
        %1555 = vmatprep.mubr.f32.mxu0 %v838
        %1556 = vmatmul.mubr.f32.gmra.mrb[0].mxu0 %v837
        %v1557 = vpop.f32.mrb[0].mxu0
        %v1558 = vadd.f32 %v1343, %v1557
        %v1559 = vpop.f32.mrb[0].mxu0
        %1560 = vmatprep.mubr.f32.mxu0 %v841
        %1561 = vmatmul.mubr.f32.gmra.mrb[0].mxu0 %v840
        %v1562 = vpop.f32.mrb[0].mxu0
        %v1563 = vadd.f32 %v1348, %v1562
        %v1564 = vpop.f32.mrb[0].mxu0
        %1565 = vmatprep.mubr.f32.mxu0 %v844
        %1566 = vmatmul.mubr.f32.gmra.mrb[0].mxu0 %v843
        %v1567 = vpop.f32.mrb[0].mxu0
        %v1568 = vadd.f32 %v1353, %v1567
        %v1569 = vpop.f32.mrb[0].mxu0
        %1570 = vmatprep.mubr.f32.mxu0 %v847
        %1571 = vmatmul.mubr.f32.gmra.mrb[0].mxu0 %v846
        %v1572 = vpop.f32.mrb[0].mxu0
        %v1573 = vadd.f32 %v1358, %v1572
        %v1574 = vpop.f32.mrb[0].mxu0
        %1575 = vmatprep.mubr.f32.mxu0 %v850
        %1576 = vmatmul.mubr.f32.gmra.mrb[0].mxu0 %v849
        %v1577 = vpop.f32.mrb[0].mxu0
        %v1578 = vadd.f32 %v1363, %v1577
        %v1579 = vpop.f32.mrb[0].mxu0
        %1580 = vmatprep.mubr.f32.mxu0 %v853
        %1581 = vmatmul.mubr.f32.gmra.mrb[0].mxu0 %v852
        %v1582 = vpop.f32.mrb[0].mxu0
        %v1583 = vadd.f32 %v1368, %v1582
        %v1584 = vpop.f32.mrb[0].mxu0
        %1585 = vmatprep.mubr.f32.mxu0 %v856
        %1586 = vmatmul.mubr.f32.gmra.mrb[0].mxu0 %v855
        %v1587 = vpop.f32.mrb[0].mxu0
        %v1588 = vadd.f32 %v1373, %v1587
        %v1589 = vpop.f32.mrb[0].mxu0
        %1590 = vmatprep.mubr.f32.mxu0 %v859
        %1591 = vmatmul.mubr.f32.gmra.mrb[0].mxu0 %v858
        %v1592 = vpop.f32.mrb[0].mxu0
        %v1593 = vadd.f32 %v1378, %v1592
        %v1594 = vpop.f32.mrb[0].mxu0
        %1595 = vmatprep.mubr.f32.mxu0 %v862
        %1596 = vmatmul.mubr.f32.gmra.mrb[0].mxu0 %v861
        %v1597 = vpop.f32.mrb[0].mxu0
        %v1598 = vadd.f32 %v1383, %v1597
        %v1599 = vpop.f32.mrb[0].mxu0
        %1600 = vmatprep.mubr.f32.mxu0 %v865
        %1601 = vmatmul.mubr.f32.gmra.mrb[0].mxu0 %v864
        %v1602 = vpop.f32.mrb[0].mxu0
        %v1603 = vadd.f32 %v1388, %v1602
        %v1604 = vpop.f32.mrb[0].mxu0
        %1605 = vmatprep.mubr.f32.mxu0 %v868
        %1606 = vmatmul.mubr.f32.gmra.mrb[0].mxu0 %v867
        %v1607 = vpop.f32.mrb[0].mxu0
        %v1608 = vadd.f32 %v1393, %v1607
        %v1609 = vpop.f32.mrb[0].mxu0
        %1610 = vmatprep.mubr.f32.mxu0 %v871
        %1611 = vmatmul.mubr.f32.gmra.mrb[0].mxu0 %v870
        %v1612 = vpop.f32.mrb[0].mxu0
        %v1613 = vadd.f32 %v1398, %v1612
        %v1614 = vpop.f32.mrb[0].mxu0
        %1615 = vmatprep.mubr.f32.mxu0 %v874
        %1616 = vmatmul.mubr.f32.gmra.mrb[0].mxu0 %v873
        %v1617 = vpop.f32.mrb[0].mxu0
        %v1618 = vadd.f32 %v1403, %v1617
        %v1619 = vpop.f32.mrb[0].mxu0
        %1620 = vmatprep.mubr.f32.mxu0 %v877
        %1621 = vmatmul.mubr.f32.gmra.mrb[0].mxu0 %v876
        %v1622 = vpop.f32.mrb[0].mxu0
        %v1623 = vadd.f32 %v1408, %v1622
        %v1624 = vpop.f32.mrb[0].mxu0
        %1625 = vmatprep.mubr.f32.mxu0 %v880
        %1626 = vmatmul.mubr.f32.gmra.mrb[0].mxu0 %v879
        %v1627 = vpop.f32.mrb[0].mxu0
        %v1628 = vadd.f32 %v1413, %v1627
        %v1629 = vpop.f32.mrb[0].mxu0
        %1630 = vmatprep.mubr.f32.mxu0 %v883
        %1631 = vmatmul.mubr.f32.gmra.mrb[0].mxu0 %v882
        %v1632 = vpop.f32.mrb[0].mxu0
        %v1633 = vadd.f32 %v1418, %v1632
        %v1634 = vpop.f32.mrb[0].mxu0
        %1635 = vdwg.mxu0
        %1636 = vmatprep.subr.mxu0 0.0
        %1637 = vmatpush1.msra.mxu0 %v917
        %1638 = vmatprep.subr.mxu0 0.0
        %1639 = vmatpush1.msra.mxu0 %v918
        %1640 = vmatprep.subr.mxu0 0.0
        %1641 = vmatpush1.msra.mxu0 %v919
        %1642 = vmatprep.subr.mxu0 0.0
        %1643 = vmatpush1.msra.mxu0 %v920
        %1644 = vmatprep.subr.mxu0 0.0
        %1645 = vmatpush1.msra.mxu0 %v921
        %1646 = vmatprep.subr.mxu0 0.0
        %1647 = vmatpush1.msra.mxu0 %v922
        %1648 = vmatprep.subr.mxu0 0.0
        %1649 = vmatpush1.msra.mxu0 %v923
        %1650 = vmatprep.subr.mxu0 0.0
        %1651 = vmatpush1.msra.mxu0 %v924
        %1652 = vmatprep.subr.mxu0 0.0
        %1653 = vmatpush1.msra.mxu0 %v925
        %1654 = vmatprep.subr.mxu0 0.0
        %1655 = vmatpush1.msra.mxu0 %v926
        %1656 = vmatprep.subr.mxu0 0.0
        %1657 = vmatpush1.msra.mxu0 %v927
        %1658 = vmatprep.subr.mxu0 0.0
        %1659 = vmatpush1.msra.mxu0 %v928
        %1660 = vmatprep.subr.mxu0 0.0
        %1661 = vmatpush1.msra.mxu0 %v929
        %1662 = vmatprep.subr.mxu0 0.0
        %1663 = vmatpush1.msra.mxu0 %v930
        %1664 = vmatprep.subr.mxu0 0.0
        %1665 = vmatpush1.msra.mxu0 %v931
        %1666 = vmatprep.subr.mxu0 0.0
        %1667 = vmatpush1.msra.mxu0 %v932
        %1668 = vmatprep.subr.mxu0 0.0
        %1669 = vmatpush1.msra.mxu0 0.0
        %1670 = vmatprep.subr.mxu0 0.0
        %1671 = vmatpush1.msra.mxu0 0.0
        %1672 = vmatprep.subr.mxu0 0.0
        %1673 = vmatpush1.msra.mxu0 0.0
        %1674 = vmatprep.subr.mxu0 0.0
        %1675 = vmatpush1.msra.mxu0 0.0
        %1676 = vmatprep.subr.mxu0 0.0
        %1677 = vmatpush1.msra.mxu0 0.0
        %1678 = vmatprep.subr.mxu0 0.0
        %1679 = vmatpush1.msra.mxu0 0.0
        %1680 = vmatprep.subr.mxu0 0.0
        %1681 = vmatpush1.msra.mxu0 0.0
        %1682 = vmatprep.subr.mxu0 0.0
        %1683 = vmatpush1.msra.mxu0 0.0
        %1684 = vmatprep.subr.mxu0 0.0
        %1685 = vmatpush1.msra.mxu0 0.0
        %1686 = vmatprep.subr.mxu0 0.0
        %1687 = vmatpush1.msra.mxu0 0.0
        %1688 = vmatprep.subr.mxu0 0.0
        %1689 = vmatpush1.msra.mxu0 0.0
        %1690 = vmatprep.subr.mxu0 0.0
        %1691 = vmatpush1.msra.mxu0 0.0
        %1692 = vmatprep.subr.mxu0 0.0
        %1693 = vmatpush1.msra.mxu0 0.0
        %1694 = vmatprep.subr.mxu0 0.0
        %1695 = vmatpush1.msra.mxu0 0.0
        %1696 = vmatprep.subr.mxu0 0.0
        %1697 = vmatpush1.msra.mxu0 0.0
        %1698 = vmatprep.subr.mxu0 0.0
        %1699 = vmatpush1.msra.mxu0 0.0
        %1700 = vmatprep.mubr.f32.mxu0 0.0
        %1701 = vmatmul.mubr.f32.gmra.mrb[0].mxu0 %v797
        %v1702 = vpop.f32.mrb[0].mxu0
        %v1703 = vadd.f32 %v1488, %v1702
        %v1704 = vpop.f32.mrb[0].mxu0
        %1705 = vmatprep.mubr.f32.mxu0 0.0
        %1706 = vmatmul.mubr.f32.gmra.mrb[0].mxu0 %v800
        %v1707 = vpop.f32.mrb[0].mxu0
        %v1708 = vadd.f32 %v1493, %v1707
        %v1709 = vpop.f32.mrb[0].mxu0
        %1710 = vmatprep.mubr.f32.mxu0 0.0
        %1711 = vmatmul.mubr.f32.gmra.mrb[0].mxu0 %v803
        %v1712 = vpop.f32.mrb[0].mxu0
        %v1713 = vadd.f32 %v1498, %v1712
        %v1714 = vpop.f32.mrb[0].mxu0
        %1715 = vmatprep.mubr.f32.mxu0 0.0
        %1716 = vmatmul.mubr.f32.gmra.mrb[0].mxu0 %v806
        %v1717 = vpop.f32.mrb[0].mxu0
        %v1718 = vadd.f32 %v1503, %v1717
        %v1719 = vpop.f32.mrb[0].mxu0
        %1720 = vmatprep.mubr.f32.mxu0 0.0
        %1721 = vmatmul.mubr.f32.gmra.mrb[0].mxu0 %v809
        %v1722 = vpop.f32.mrb[0].mxu0
        %v1723 = vadd.f32 %v1508, %v1722
        %v1724 = vpop.f32.mrb[0].mxu0
        %1725 = vmatprep.mubr.f32.mxu0 0.0
        %1726 = vmatmul.mubr.f32.gmra.mrb[0].mxu0 %v812
        %v1727 = vpop.f32.mrb[0].mxu0
        %v1728 = vadd.f32 %v1513, %v1727
        %v1729 = vpop.f32.mrb[0].mxu0
        %1730 = vmatprep.mubr.f32.mxu0 0.0
        %1731 = vmatmul.mubr.f32.gmra.mrb[0].mxu0 %v815
        %v1732 = vpop.f32.mrb[0].mxu0
        %v1733 = vadd.f32 %v1518, %v1732
        %v1734 = vpop.f32.mrb[0].mxu0
        %1735 = vmatprep.mubr.f32.mxu0 0.0
        %1736 = vmatmul.mubr.f32.gmra.mrb[0].mxu0 %v818
        %v1737 = vpop.f32.mrb[0].mxu0
        %v1738 = vadd.f32 %v1523, %v1737
        %v1739 = vpop.f32.mrb[0].mxu0
        %1740 = vmatprep.mubr.f32.mxu0 0.0
        %1741 = vmatmul.mubr.f32.gmra.mrb[0].mxu0 %v821
        %v1742 = vpop.f32.mrb[0].mxu0
        %v1743 = vadd.f32 %v1528, %v1742
        %v1744 = vpop.f32.mrb[0].mxu0
        %1745 = vmatprep.mubr.f32.mxu0 0.0
        %1746 = vmatmul.mubr.f32.gmra.mrb[0].mxu0 %v824
        %v1747 = vpop.f32.mrb[0].mxu0
        %v1748 = vadd.f32 %v1533, %v1747
        %v1749 = vpop.f32.mrb[0].mxu0
        %1750 = vmatprep.mubr.f32.mxu0 0.0
        %1751 = vmatmul.mubr.f32.gmra.mrb[0].mxu0 %v827
        %v1752 = vpop.f32.mrb[0].mxu0
        %v1753 = vadd.f32 %v1538, %v1752
        %v1754 = vpop.f32.mrb[0].mxu0
        %1755 = vmatprep.mubr.f32.mxu0 0.0
        %1756 = vmatmul.mubr.f32.gmra.mrb[0].mxu0 %v830
        %v1757 = vpop.f32.mrb[0].mxu0
        %v1758 = vadd.f32 %v1543, %v1757
        %v1759 = vpop.f32.mrb[0].mxu0
        %1760 = vmatprep.mubr.f32.mxu0 0.0
        %1761 = vmatmul.mubr.f32.gmra.mrb[0].mxu0 %v833
        %v1762 = vpop.f32.mrb[0].mxu0
        %v1763 = vadd.f32 %v1548, %v1762
        %v1764 = vpop.f32.mrb[0].mxu0
        %1765 = vmatprep.mubr.f32.mxu0 0.0
        %1766 = vmatmul.mubr.f32.gmra.mrb[0].mxu0 %v836
        %v1767 = vpop.f32.mrb[0].mxu0
        %v1768 = vadd.f32 %v1553, %v1767
        %v1769 = vpop.f32.mrb[0].mxu0
        %1770 = vmatprep.mubr.f32.mxu0 0.0
        %1771 = vmatmul.mubr.f32.gmra.mrb[0].mxu0 %v839
        %v1772 = vpop.f32.mrb[0].mxu0
        %v1773 = vadd.f32 %v1558, %v1772
        %v1774 = vpop.f32.mrb[0].mxu0
        %1775 = vmatprep.mubr.f32.mxu0 0.0
        %1776 = vmatmul.mubr.f32.gmra.mrb[0].mxu0 %v842
        %v1777 = vpop.f32.mrb[0].mxu0
        %v1778 = vadd.f32 %v1563, %v1777
        %v1779 = vpop.f32.mrb[0].mxu0
        %1780 = vmatprep.mubr.f32.mxu0 0.0
        %1781 = vmatmul.mubr.f32.gmra.mrb[0].mxu0 %v845
        %v1782 = vpop.f32.mrb[0].mxu0
        %v1783 = vadd.f32 %v1568, %v1782
        %v1784 = vpop.f32.mrb[0].mxu0
        %1785 = vmatprep.mubr.f32.mxu0 0.0
        %1786 = vmatmul.mubr.f32.gmra.mrb[0].mxu0 %v848
        %v1787 = vpop.f32.mrb[0].mxu0
        %v1788 = vadd.f32 %v1573, %v1787
        %v1789 = vpop.f32.mrb[0].mxu0
        %1790 = vmatprep.mubr.f32.mxu0 0.0
        %1791 = vmatmul.mubr.f32.gmra.mrb[0].mxu0 %v851
        %v1792 = vpop.f32.mrb[0].mxu0
        %v1793 = vadd.f32 %v1578, %v1792
        %v1794 = vpop.f32.mrb[0].mxu0
        %1795 = vmatprep.mubr.f32.mxu0 0.0
        %1796 = vmatmul.mubr.f32.gmra.mrb[0].mxu0 %v854
        %v1797 = vpop.f32.mrb[0].mxu0
        %v1798 = vadd.f32 %v1583, %v1797
        %v1799 = vpop.f32.mrb[0].mxu0
        %1800 = vmatprep.mubr.f32.mxu0 0.0
        %1801 = vmatmul.mubr.f32.gmra.mrb[0].mxu0 %v857
        %v1802 = vpop.f32.mrb[0].mxu0
        %v1803 = vadd.f32 %v1588, %v1802
        %v1804 = vpop.f32.mrb[0].mxu0
        %1805 = vmatprep.mubr.f32.mxu0 0.0
        %1806 = vmatmul.mubr.f32.gmra.mrb[0].mxu0 %v860
        %v1807 = vpop.f32.mrb[0].mxu0
        %v1808 = vadd.f32 %v1593, %v1807
        %v1809 = vpop.f32.mrb[0].mxu0
        %1810 = vmatprep.mubr.f32.mxu0 0.0
        %1811 = vmatmul.mubr.f32.gmra.mrb[0].mxu0 %v863
        %v1812 = vpop.f32.mrb[0].mxu0
        %v1813 = vadd.f32 %v1598, %v1812
        %v1814 = vpop.f32.mrb[0].mxu0
        %1815 = vmatprep.mubr.f32.mxu0 0.0
        %1816 = vmatmul.mubr.f32.gmra.mrb[0].mxu0 %v866
        %v1817 = vpop.f32.mrb[0].mxu0
        %v1818 = vadd.f32 %v1603, %v1817
        %v1819 = vpop.f32.mrb[0].mxu0
        %1820 = vmatprep.mubr.f32.mxu0 0.0
        %1821 = vmatmul.mubr.f32.gmra.mrb[0].mxu0 %v869
        %v1822 = vpop.f32.mrb[0].mxu0
        %v1823 = vadd.f32 %v1608, %v1822
        %v1824 = vpop.f32.mrb[0].mxu0
        %1825 = vmatprep.mubr.f32.mxu0 0.0
        %1826 = vmatmul.mubr.f32.gmra.mrb[0].mxu0 %v872
        %v1827 = vpop.f32.mrb[0].mxu0
        %v1828 = vadd.f32 %v1613, %v1827
        %v1829 = vpop.f32.mrb[0].mxu0
        %1830 = vmatprep.mubr.f32.mxu0 0.0
        %1831 = vmatmul.mubr.f32.gmra.mrb[0].mxu0 %v875
        %v1832 = vpop.f32.mrb[0].mxu0
        %v1833 = vadd.f32 %v1618, %v1832
        %v1834 = vpop.f32.mrb[0].mxu0
        %1835 = vmatprep.mubr.f32.mxu0 0.0
        %1836 = vmatmul.mubr.f32.gmra.mrb[0].mxu0 %v878
        %v1837 = vpop.f32.mrb[0].mxu0
        %v1838 = vadd.f32 %v1623, %v1837
        %v1839 = vpop.f32.mrb[0].mxu0
        %1840 = vmatprep.mubr.f32.mxu0 0.0
        %1841 = vmatmul.mubr.f32.gmra.mrb[0].mxu0 %v881
        %v1842 = vpop.f32.mrb[0].mxu0
        %v1843 = vadd.f32 %v1628, %v1842
        %v1844 = vpop.f32.mrb[0].mxu0
        %1845 = vmatprep.mubr.f32.mxu0 0.0
        %1846 = vmatmul.mubr.f32.gmra.mrb[0].mxu0 %v884
        %v1847 = vpop.f32.mrb[0].mxu0
        %v1848 = vadd.f32 %v1633, %v1847
        %v1849 = vpop.f32.mrb[0].mxu0
        %1850 = vdwg.mxu0
        %v1851 = vld [vmem:[#allocation3 + $0x90] sm:$0xff]
        %v1852 = vld [vmem:[#allocation3 + $0x98] sm:$0xff]
        %v1853 = vld [vmem:[#allocation3 + $0xa0] sm:$0xff]
        %v1854 = vld [vmem:[#allocation3 + $0xa8] sm:$0xff]
        %v1855 = vld [vmem:[#allocation3 + $0xb0] sm:$0xff]
        %v1856 = vld [vmem:[#allocation3 + $0xb8] sm:$0xff]
        %v1857 = vld [vmem:[#allocation3 + $0xc0] sm:$0xff]
        %v1858 = vld [vmem:[#allocation3 + $0xc8] sm:$0xff]
        %v1859 = vld [vmem:[#allocation3 + $0xd0] sm:$0xff]
        %v1860 = vld [vmem:[#allocation3 + $0xd8] sm:$0xff]
        %v1861 = vld [vmem:[#allocation3 + $0xe0] sm:$0xff]
        %v1862 = vld [vmem:[#allocation3 + $0xe8] sm:$0xff]
        %v1863 = vld [vmem:[#allocation3 + $0xf0] sm:$0xff]
        %v1864 = vld [vmem:[#allocation3 + $0xf8] sm:$0xff]
        %v1865 = vld [vmem:[#allocation3 + $0x100] sm:$0xff]
        %v1866 = vld [vmem:[#allocation3 + $0x108] sm:$0xff]
        %v1867 = vld [vmem:[#allocation3 + $0x110] sm:$0xff]
        %v1868 = vld [vmem:[#allocation3 + $0x118] sm:$0xff]
        %v1869 = vld [vmem:[#allocation3 + $0x120] sm:$0xff]
        %v1870 = vld [vmem:[#allocation3 + $0x128] sm:$0xff]
        %v1871 = vld [vmem:[#allocation3 + $0x130] sm:$0xff]
        %v1872 = vld [vmem:[#allocation3 + $0x138] sm:$0xff]
        %v1873 = vld [vmem:[#allocation3 + $0x140] sm:$0xff]
        %v1874 = vld [vmem:[#allocation3 + $0x148] sm:$0xff]
        %v1875 = vld [vmem:[#allocation3 + $0x150] sm:$0xff]
        %v1876 = vld [vmem:[#allocation3 + $0x158] sm:$0xff]
        %v1877 = vld [vmem:[#allocation3 + $0x160] sm:$0xff]
        %v1878 = vld [vmem:[#allocation3 + $0x168] sm:$0xff]
        %v1879 = vld [vmem:[#allocation3 + $0x170] sm:$0xff]
        %v1880 = vld [vmem:[#allocation3 + $0x178] sm:$0xff]
        %v1881 = vld [vmem:[#allocation3 + $0x180] sm:$0xff]
        %v1882 = vld [vmem:[#allocation3 + $0x188] sm:$0xff]
        %v1883 = vld [vmem:[#allocation3 + $0x190] sm:$0xff]
        %v1884 = vld [vmem:[#allocation3 + $0x198] sm:$0xff]
        %v1885 = vld [vmem:[#allocation3 + $0x1a0] sm:$0xff]
        %v1886 = vld [vmem:[#allocation3 + $0x1a8] sm:$0xff]
        %v1887 = vld [vmem:[#allocation3 + $0x1b0] sm:$0xff]
        %v1888 = vld [vmem:[#allocation3 + $0x1b8] sm:$0xff]
        %v1889 = vld [vmem:[#allocation3 + $0x1c0] sm:$0xff]
        %v1890 = vld [vmem:[#allocation3 + $0x1c8] sm:$0xff]
        %v1891 = vld [vmem:[#allocation3 + $0x1d0] sm:$0xff]
        %v1892 = vld [vmem:[#allocation3 + $0x1d8] sm:$0xff]
        %v1893 = vld [vmem:[#allocation3 + $0x1e0] sm:$0xff]
        %v1894 = vld [vmem:[#allocation3 + $0x1e8] sm:$0xff]
        %v1895 = vld [vmem:[#allocation3 + $0x1f0] sm:$0xff]
        %v1896 = vld [vmem:[#allocation3 + $0x1f8] sm:$0xff]
        %v1897 = vld [vmem:[#allocation3 + $0x200] sm:$0xff]
        %v1898 = vld [vmem:[#allocation3 + $0x208] sm:$0xff]
        %v1899 = vld [vmem:[#allocation3 + $0x210] sm:$0xff]
        %v1900 = vld [vmem:[#allocation3 + $0x218] sm:$0xff]
        %v1901 = vld [vmem:[#allocation3 + $0x220] sm:$0xff]
        %v1902 = vld [vmem:[#allocation3 + $0x228] sm:$0xff]
        %v1903 = vld [vmem:[#allocation3 + $0x230] sm:$0xff]
        %v1904 = vld [vmem:[#allocation3 + $0x238] sm:$0xff]
        %v1905 = vld [vmem:[#allocation3 + $0x240] sm:$0xff]
        %v1906 = vld [vmem:[#allocation3 + $0x248] sm:$0xff]
        %v1907 = vld [vmem:[#allocation3 + $0x250] sm:$0xff]
        %v1908 = vld [vmem:[#allocation3 + $0x258] sm:$0xff]
        %v1909 = vld [vmem:[#allocation3 + $0x260] sm:$0xff]
        %v1910 = vld [vmem:[#allocation3 + $0x268] sm:$0xff]
        %v1911 = vld [vmem:[#allocation3 + $0x270] sm:$0xff]
        %v1912 = vld [vmem:[#allocation3 + $0x278] sm:$0xff]
        %v1913 = vld [vmem:[#allocation3 + $0x280] sm:$0xff]
        %v1914 = vld [vmem:[#allocation3 + $0x288] sm:$0xff]
        %v1915 = vld [vmem:[#allocation3 + $0x290] sm:$0xff]
        %v1916 = vld [vmem:[#allocation3 + $0x298] sm:$0xff]
        %v1917 = vld [vmem:[#allocation3 + $0x2a0] sm:$0xff]
        %v1918 = vld [vmem:[#allocation3 + $0x2a8] sm:$0xff]
        %v1919 = vld [vmem:[#allocation3 + $0x2b0] sm:$0xff]
        %v1920 = vld [vmem:[#allocation3 + $0x2b8] sm:$0xff]
        %v1921 = vld [vmem:[#allocation3 + $0x2c0] sm:$0xff]
        %v1922 = vld [vmem:[#allocation3 + $0x2c8] sm:$0xff]
        %v1923 = vld [vmem:[#allocation3 + $0x2d0] sm:$0xff]
        %v1924 = vld [vmem:[#allocation3 + $0x2d8] sm:$0xff]
        %v1925 = vld [vmem:[#allocation3 + $0x2e0] sm:$0xff]
        %v1926 = vld [vmem:[#allocation3 + $0x2e8] sm:$0xff]
        %v1927 = vld [vmem:[#allocation3 + $0x2f0] sm:$0xff]
        %v1928 = vld [vmem:[#allocation3 + $0x2f8] sm:$0xff]
        %v1929 = vld [vmem:[#allocation3 + $0x300] sm:$0xff]
        %v1930 = vld [vmem:[#allocation3 + $0x308] sm:$0xff]
        %v1931 = vld [vmem:[#allocation3 + $0x310] sm:$0xff]
        %v1932 = vld [vmem:[#allocation3 + $0x318] sm:$0xff]
        %v1933 = vld [vmem:[#allocation3 + $0x320] sm:$0xff]
        %v1934 = vld [vmem:[#allocation3 + $0x328] sm:$0xff]
        %v1935 = vld [vmem:[#allocation3 + $0x330] sm:$0xff]
        %v1936 = vld [vmem:[#allocation3 + $0x338] sm:$0xff]
        %v1937 = vld [vmem:[#allocation3 + $0x340] sm:$0xff]
        %v1938 = vld [vmem:[#allocation3 + $0x348] sm:$0xff]
        %v1939 = vld [vmem:[#allocation3 + $0x350] sm:$0xff]
        %v1940 = vld [vmem:[#allocation3 + $0x358] sm:$0xff]
        %s1941 = scalar_lea.vmem %s1, 768
        %v1942 = vld [vmem:[%s1941] sm:$0xff]
        %v1943 = vld [vmem:[%s1941 + $0x8] sm:$0xff]
        %v1944 = vld [vmem:[%s1941 + $0x10] sm:$0xff]
        %v1945 = vld [vmem:[%s1941 + $0x18] sm:$0xff]
        %v1946 = vld [vmem:[%s1941 + $0x20] sm:$0xff]
        %v1947 = vld [vmem:[%s1941 + $0x28] sm:$0xff]
        %v1948 = vld [vmem:[%s1941 + $0x30] sm:$0xff]
        %v1949 = vld [vmem:[%s1941 + $0x38] sm:$0xff]
        %v1950 = vld [vmem:[%s1941 + $0x40] sm:$0xff]
        %v1951 = vld [vmem:[%s1941 + $0x48] sm:$0xff]
        %v1952 = vld [vmem:[%s1941 + $0x50] sm:$0xff]
        %v1953 = vld [vmem:[%s1941 + $0x58] sm:$0xff]
        %v1954 = vld [vmem:[%s1941 + $0x60] sm:$0xff]
        %v1955 = vld [vmem:[%s1941 + $0x68] sm:$0xff]
        %v1956 = vld [vmem:[%s1941 + $0x70] sm:$0xff]
        %v1957 = vld [vmem:[%s1941 + $0x78] sm:$0xff]
        %v1958 = vld [vmem:[%s1941 + $0x80] sm:$0xff]
        %v1959 = vld [vmem:[%s1941 + $0x88] sm:$0xff]
        %v1960 = vld [vmem:[%s1941 + $0x90] sm:$0xff]
        %v1961 = vld [vmem:[%s1941 + $0x98] sm:$0xff]
        %v1962 = vld [vmem:[%s1941 + $0xa0] sm:$0xff]
        %v1963 = vld [vmem:[%s1941 + $0xa8] sm:$0xff]
        %v1964 = vld [vmem:[%s1941 + $0xb0] sm:$0xff]
        %v1965 = vld [vmem:[%s1941 + $0xb8] sm:$0xff]
        %v1966 = vld [vmem:[%s1941 + $0xc0] sm:$0xff]
        %v1967 = vld [vmem:[%s1941 + $0xc8] sm:$0xff]
        %v1968 = vld [vmem:[%s1941 + $0xd0] sm:$0xff]
        %v1969 = vld [vmem:[%s1941 + $0xd8] sm:$0xff]
        %v1970 = vld [vmem:[%s1941 + $0xe0] sm:$0xff]
        %v1971 = vld [vmem:[%s1941 + $0xe8] sm:$0xff]
        %v1972 = vld [vmem:[%s1941 + $0xf0] sm:$0xff]
        %v1973 = vld [vmem:[%s1941 + $0xf8] sm:$0xff]
        %v1974 = vld [vmem:[%s1941 + $0x100] sm:$0xff]
        %v1975 = vld [vmem:[%s1941 + $0x108] sm:$0xff]
        %v1976 = vld [vmem:[%s1941 + $0x110] sm:$0xff]
        %v1977 = vld [vmem:[%s1941 + $0x118] sm:$0xff]
        %v1978 = vld [vmem:[%s1941 + $0x120] sm:$0xff]
        %v1979 = vld [vmem:[%s1941 + $0x128] sm:$0xff]
        %v1980 = vld [vmem:[%s1941 + $0x130] sm:$0xff]
        %v1981 = vld [vmem:[%s1941 + $0x138] sm:$0xff]
        %v1982 = vld [vmem:[%s1941 + $0x140] sm:$0xff]
        %v1983 = vld [vmem:[%s1941 + $0x148] sm:$0xff]
        %v1984 = vld [vmem:[%s1941 + $0x150] sm:$0xff]
        %v1985 = vld [vmem:[%s1941 + $0x158] sm:$0xff]
        %v1986 = vld [vmem:[%s1941 + $0x160] sm:$0xff]
        %v1987 = vld [vmem:[%s1941 + $0x168] sm:$0xff]
        %v1988 = vld [vmem:[%s1941 + $0x170] sm:$0xff]
        %v1989 = vld [vmem:[%s1941 + $0x178] sm:$0xff]
        %1990 = vmatprep.subr.mxu0 0.0
        %1991 = vmatpush1.msra.mxu0 %v1942
        %1992 = vmatprep.subr.mxu0 0.0
        %1993 = vmatpush1.msra.mxu0 %v1943
        %1994 = vmatprep.subr.mxu0 0.0
        %1995 = vmatpush1.msra.mxu0 %v1944
        %1996 = vmatprep.subr.mxu0 0.0
        %1997 = vmatpush1.msra.mxu0 %v1945
        %1998 = vmatprep.subr.mxu0 0.0
        %1999 = vmatpush1.msra.mxu0 %v1946
        %2000 = vmatprep.subr.mxu0 0.0
        %2001 = vmatpush1.msra.mxu0 %v1947
        %2002 = vmatprep.subr.mxu0 0.0
        %2003 = vmatpush1.msra.mxu0 %v1948
        %2004 = vmatprep.subr.mxu0 0.0
        %2005 = vmatpush1.msra.mxu0 %v1949
        %2006 = vmatprep.subr.mxu0 0.0
        %2007 = vmatpush1.msra.mxu0 %v1950
        %2008 = vmatprep.subr.mxu0 0.0
        %2009 = vmatpush1.msra.mxu0 %v1951
        %2010 = vmatprep.subr.mxu0 0.0
        %2011 = vmatpush1.msra.mxu0 %v1952
        %2012 = vmatprep.subr.mxu0 0.0
        %2013 = vmatpush1.msra.mxu0 %v1953
        %2014 = vmatprep.subr.mxu0 0.0
        %2015 = vmatpush1.msra.mxu0 %v1954
        %2016 = vmatprep.subr.mxu0 0.0
        %2017 = vmatpush1.msra.mxu0 %v1955
        %2018 = vmatprep.subr.mxu0 0.0
        %2019 = vmatpush1.msra.mxu0 %v1956
        %2020 = vmatprep.subr.mxu0 0.0
        %2021 = vmatpush1.msra.mxu0 %v1957
        %2022 = vmatprep.subr.mxu0 0.0
        %2023 = vmatpush1.msra.mxu0 %v1958
        %2024 = vmatprep.subr.mxu0 0.0
        %2025 = vmatpush1.msra.mxu0 %v1959
        %2026 = vmatprep.subr.mxu0 0.0
        %2027 = vmatpush1.msra.mxu0 %v1960
        %2028 = vmatprep.subr.mxu0 0.0
        %2029 = vmatpush1.msra.mxu0 %v1961
        %2030 = vmatprep.subr.mxu0 0.0
        %2031 = vmatpush1.msra.mxu0 %v1962
        %2032 = vmatprep.subr.mxu0 0.0
        %2033 = vmatpush1.msra.mxu0 %v1963
        %2034 = vmatprep.subr.mxu0 0.0
        %2035 = vmatpush1.msra.mxu0 %v1964
        %2036 = vmatprep.subr.mxu0 0.0
        %2037 = vmatpush1.msra.mxu0 %v1965
        %2038 = vmatprep.subr.mxu0 0.0
        %2039 = vmatpush1.msra.mxu0 %v1966
        %2040 = vmatprep.subr.mxu0 0.0
        %2041 = vmatpush1.msra.mxu0 %v1967
        %2042 = vmatprep.subr.mxu0 0.0
        %2043 = vmatpush1.msra.mxu0 %v1968
        %2044 = vmatprep.subr.mxu0 0.0
        %2045 = vmatpush1.msra.mxu0 %v1969
        %2046 = vmatprep.subr.mxu0 0.0
        %2047 = vmatpush1.msra.mxu0 %v1970
        %2048 = vmatprep.subr.mxu0 0.0
        %2049 = vmatpush1.msra.mxu0 %v1971
        %2050 = vmatprep.subr.mxu0 0.0
        %2051 = vmatpush1.msra.mxu0 %v1972
        %2052 = vmatprep.subr.mxu0 0.0
        %2053 = vmatpush1.msra.mxu0 %v1973
        %2054 = vmatprep.mubr.f32.mxu0 %v1852
        %2055 = vmatmul.mubr.f32.gmra.mrb[0].mxu0 %v1851
        %v2056 = vpop.f32.mrb[0].mxu0
        %v2057 = vadd.f32 0.0, %v2056
        %v2058 = vpop.f32.mrb[0].mxu0
        %2059 = vmatprep.mubr.f32.mxu0 %v1855
        %2060 = vmatmul.mubr.f32.gmra.mrb[0].mxu0 %v1854
        %v2061 = vpop.f32.mrb[0].mxu0
        %v2062 = vadd.f32 0.0, %v2061
        %v2063 = vpop.f32.mrb[0].mxu0
        %2064 = vmatprep.mubr.f32.mxu0 %v1858
        %2065 = vmatmul.mubr.f32.gmra.mrb[0].mxu0 %v1857
        %v2066 = vpop.f32.mrb[0].mxu0
        %v2067 = vadd.f32 0.0, %v2066
        %v2068 = vpop.f32.mrb[0].mxu0
        %2069 = vmatprep.mubr.f32.mxu0 %v1861
        %2070 = vmatmul.mubr.f32.gmra.mrb[0].mxu0 %v1860
        %v2071 = vpop.f32.mrb[0].mxu0
        %v2072 = vadd.f32 0.0, %v2071
        %v2073 = vpop.f32.mrb[0].mxu0
        %2074 = vmatprep.mubr.f32.mxu0 %v1864
        %2075 = vmatmul.mubr.f32.gmra.mrb[0].mxu0 %v1863
        %v2076 = vpop.f32.mrb[0].mxu0
        %v2077 = vadd.f32 0.0, %v2076
        %v2078 = vpop.f32.mrb[0].mxu0
        %2079 = vmatprep.mubr.f32.mxu0 %v1867
        %2080 = vmatmul.mubr.f32.gmra.mrb[0].mxu0 %v1866
        %v2081 = vpop.f32.mrb[0].mxu0
        %v2082 = vadd.f32 0.0, %v2081
        %v2083 = vpop.f32.mrb[0].mxu0
        %2084 = vmatprep.mubr.f32.mxu0 %v1870
        %2085 = vmatmul.mubr.f32.gmra.mrb[0].mxu0 %v1869
        %v2086 = vpop.f32.mrb[0].mxu0
        %v2087 = vadd.f32 0.0, %v2086
        %v2088 = vpop.f32.mrb[0].mxu0
        %2089 = vmatprep.mubr.f32.mxu0 %v1873
        %2090 = vmatmul.mubr.f32.gmra.mrb[0].mxu0 %v1872
        %v2091 = vpop.f32.mrb[0].mxu0
        %v2092 = vadd.f32 0.0, %v2091
        %v2093 = vpop.f32.mrb[0].mxu0
        %2094 = vmatprep.mubr.f32.mxu0 %v1876
        %2095 = vmatmul.mubr.f32.gmra.mrb[0].mxu0 %v1875
        %v2096 = vpop.f32.mrb[0].mxu0
        %v2097 = vadd.f32 0.0, %v2096
        %v2098 = vpop.f32.mrb[0].mxu0
        %2099 = vmatprep.mubr.f32.mxu0 %v1879
        %2100 = vmatmul.mubr.f32.gmra.mrb[0].mxu0 %v1878
        %v2101 = vpop.f32.mrb[0].mxu0
        %v2102 = vadd.f32 0.0, %v2101
        %v2103 = vpop.f32.mrb[0].mxu0
        %2104 = vmatprep.mubr.f32.mxu0 %v1882
        %2105 = vmatmul.mubr.f32.gmra.mrb[0].mxu0 %v1881
        %v2106 = vpop.f32.mrb[0].mxu0
        %v2107 = vadd.f32 0.0, %v2106
        %v2108 = vpop.f32.mrb[0].mxu0
        %2109 = vmatprep.mubr.f32.mxu0 %v1885
        %2110 = vmatmul.mubr.f32.gmra.mrb[0].mxu0 %v1884
        %v2111 = vpop.f32.mrb[0].mxu0
        %v2112 = vadd.f32 0.0, %v2111
        %v2113 = vpop.f32.mrb[0].mxu0
        %2114 = vmatprep.mubr.f32.mxu0 %v1888
        %2115 = vmatmul.mubr.f32.gmra.mrb[0].mxu0 %v1887
        %v2116 = vpop.f32.mrb[0].mxu0
        %v2117 = vadd.f32 0.0, %v2116
        %v2118 = vpop.f32.mrb[0].mxu0
        %2119 = vmatprep.mubr.f32.mxu0 %v1891
        %2120 = vmatmul.mubr.f32.gmra.mrb[0].mxu0 %v1890
        %v2121 = vpop.f32.mrb[0].mxu0
        %v2122 = vadd.f32 0.0, %v2121
        %v2123 = vpop.f32.mrb[0].mxu0
        %2124 = vmatprep.mubr.f32.mxu0 %v1894
        %2125 = vmatmul.mubr.f32.gmra.mrb[0].mxu0 %v1893
        %v2126 = vpop.f32.mrb[0].mxu0
        %v2127 = vadd.f32 0.0, %v2126
        %v2128 = vpop.f32.mrb[0].mxu0
        %2129 = vmatprep.mubr.f32.mxu0 %v1897
        %2130 = vmatmul.mubr.f32.gmra.mrb[0].mxu0 %v1896
        %v2131 = vpop.f32.mrb[0].mxu0
        %v2132 = vadd.f32 0.0, %v2131
        %v2133 = vpop.f32.mrb[0].mxu0
        %2134 = vmatprep.mubr.f32.mxu0 %v1900
        %2135 = vmatmul.mubr.f32.gmra.mrb[0].mxu0 %v1899
        %v2136 = vpop.f32.mrb[0].mxu0
        %v2137 = vadd.f32 0.0, %v2136
        %v2138 = vpop.f32.mrb[0].mxu0
        %2139 = vmatprep.mubr.f32.mxu0 %v1903
        %2140 = vmatmul.mubr.f32.gmra.mrb[0].mxu0 %v1902
        %v2141 = vpop.f32.mrb[0].mxu0
        %v2142 = vadd.f32 0.0, %v2141
        %v2143 = vpop.f32.mrb[0].mxu0
        %2144 = vmatprep.mubr.f32.mxu0 %v1906
        %2145 = vmatmul.mubr.f32.gmra.mrb[0].mxu0 %v1905
        %v2146 = vpop.f32.mrb[0].mxu0
        %v2147 = vadd.f32 0.0, %v2146
        %v2148 = vpop.f32.mrb[0].mxu0
        %2149 = vmatprep.mubr.f32.mxu0 %v1909
        %2150 = vmatmul.mubr.f32.gmra.mrb[0].mxu0 %v1908
        %v2151 = vpop.f32.mrb[0].mxu0
        %v2152 = vadd.f32 0.0, %v2151
        %v2153 = vpop.f32.mrb[0].mxu0
        %2154 = vmatprep.mubr.f32.mxu0 %v1912
        %2155 = vmatmul.mubr.f32.gmra.mrb[0].mxu0 %v1911
        %v2156 = vpop.f32.mrb[0].mxu0
        %v2157 = vadd.f32 0.0, %v2156
        %v2158 = vpop.f32.mrb[0].mxu0
        %2159 = vmatprep.mubr.f32.mxu0 %v1915
        %2160 = vmatmul.mubr.f32.gmra.mrb[0].mxu0 %v1914
        %v2161 = vpop.f32.mrb[0].mxu0
        %v2162 = vadd.f32 0.0, %v2161
        %v2163 = vpop.f32.mrb[0].mxu0
        %2164 = vmatprep.mubr.f32.mxu0 %v1918
        %2165 = vmatmul.mubr.f32.gmra.mrb[0].mxu0 %v1917
        %v2166 = vpop.f32.mrb[0].mxu0
        %v2167 = vadd.f32 0.0, %v2166
        %v2168 = vpop.f32.mrb[0].mxu0
        %2169 = vmatprep.mubr.f32.mxu0 %v1921
        %2170 = vmatmul.mubr.f32.gmra.mrb[0].mxu0 %v1920
        %v2171 = vpop.f32.mrb[0].mxu0
        %v2172 = vadd.f32 0.0, %v2171
        %v2173 = vpop.f32.mrb[0].mxu0
        %2174 = vmatprep.mubr.f32.mxu0 %v1924
        %2175 = vmatmul.mubr.f32.gmra.mrb[0].mxu0 %v1923
        %v2176 = vpop.f32.mrb[0].mxu0
        %v2177 = vadd.f32 0.0, %v2176
        %v2178 = vpop.f32.mrb[0].mxu0
        %2179 = vmatprep.mubr.f32.mxu0 %v1927
        %2180 = vmatmul.mubr.f32.gmra.mrb[0].mxu0 %v1926
        %v2181 = vpop.f32.mrb[0].mxu0
        %v2182 = vadd.f32 0.0, %v2181
        %v2183 = vpop.f32.mrb[0].mxu0
        %2184 = vmatprep.mubr.f32.mxu0 %v1930
        %2185 = vmatmul.mubr.f32.gmra.mrb[0].mxu0 %v1929
        %v2186 = vpop.f32.mrb[0].mxu0
        %v2187 = vadd.f32 0.0, %v2186
        %v2188 = vpop.f32.mrb[0].mxu0
        %2189 = vmatprep.mubr.f32.mxu0 %v1933
        %2190 = vmatmul.mubr.f32.gmra.mrb[0].mxu0 %v1932
        %v2191 = vpop.f32.mrb[0].mxu0
        %v2192 = vadd.f32 0.0, %v2191
        %v2193 = vpop.f32.mrb[0].mxu0
        %2194 = vmatprep.mubr.f32.mxu0 %v1936
        %2195 = vmatmul.mubr.f32.gmra.mrb[0].mxu0 %v1935
        %v2196 = vpop.f32.mrb[0].mxu0
        %v2197 = vadd.f32 0.0, %v2196
        %v2198 = vpop.f32.mrb[0].mxu0
        %2199 = vmatprep.mubr.f32.mxu0 %v1939
        %2200 = vmatmul.mubr.f32.gmra.mrb[0].mxu0 %v1938
        %v2201 = vpop.f32.mrb[0].mxu0
        %v2202 = vadd.f32 0.0, %v2201
        %v2203 = vpop.f32.mrb[0].mxu0
        %2204 = vdwg.mxu0
        %2205 = vmatprep.subr.mxu0 0.0
        %2206 = vmatpush1.msra.mxu0 %v1974
        %2207 = vmatprep.subr.mxu0 0.0
        %2208 = vmatpush1.msra.mxu0 %v1975
        %2209 = vmatprep.subr.mxu0 0.0
        %2210 = vmatpush1.msra.mxu0 %v1976
        %2211 = vmatprep.subr.mxu0 0.0
        %2212 = vmatpush1.msra.mxu0 %v1977
        %2213 = vmatprep.subr.mxu0 0.0
        %2214 = vmatpush1.msra.mxu0 %v1978
        %2215 = vmatprep.subr.mxu0 0.0
        %2216 = vmatpush1.msra.mxu0 %v1979
        %2217 = vmatprep.subr.mxu0 0.0
        %2218 = vmatpush1.msra.mxu0 %v1980
        %2219 = vmatprep.subr.mxu0 0.0
        %2220 = vmatpush1.msra.mxu0 %v1981
        %2221 = vmatprep.subr.mxu0 0.0
        %2222 = vmatpush1.msra.mxu0 %v1982
        %2223 = vmatprep.subr.mxu0 0.0
        %2224 = vmatpush1.msra.mxu0 %v1983
        %2225 = vmatprep.subr.mxu0 0.0
        %2226 = vmatpush1.msra.mxu0 %v1984
        %2227 = vmatprep.subr.mxu0 0.0
        %2228 = vmatpush1.msra.mxu0 %v1985
        %2229 = vmatprep.subr.mxu0 0.0
        %2230 = vmatpush1.msra.mxu0 %v1986
        %2231 = vmatprep.subr.mxu0 0.0
        %2232 = vmatpush1.msra.mxu0 %v1987
        %2233 = vmatprep.subr.mxu0 0.0
        %2234 = vmatpush1.msra.mxu0 %v1988
        %2235 = vmatprep.subr.mxu0 0.0
        %2236 = vmatpush1.msra.mxu0 %v1989
        %2237 = vmatprep.subr.mxu0 0.0
        %2238 = vmatpush1.msra.mxu0 0.0
        %2239 = vmatprep.subr.mxu0 0.0
        %2240 = vmatpush1.msra.mxu0 0.0
        %2241 = vmatprep.subr.mxu0 0.0
        %2242 = vmatpush1.msra.mxu0 0.0
        %2243 = vmatprep.subr.mxu0 0.0
        %2244 = vmatpush1.msra.mxu0 0.0
        %2245 = vmatprep.subr.mxu0 0.0
        %2246 = vmatpush1.msra.mxu0 0.0
        %2247 = vmatprep.subr.mxu0 0.0
        %2248 = vmatpush1.msra.mxu0 0.0
        %2249 = vmatprep.subr.mxu0 0.0
        %2250 = vmatpush1.msra.mxu0 0.0
        %2251 = vmatprep.subr.mxu0 0.0
        %2252 = vmatpush1.msra.mxu0 0.0
        %2253 = vmatprep.subr.mxu0 0.0
        %2254 = vmatpush1.msra.mxu0 0.0
        %2255 = vmatprep.subr.mxu0 0.0
        %2256 = vmatpush1.msra.mxu0 0.0
        %2257 = vmatprep.subr.mxu0 0.0
        %2258 = vmatpush1.msra.mxu0 0.0
        %2259 = vmatprep.subr.mxu0 0.0
        %2260 = vmatpush1.msra.mxu0 0.0
        %2261 = vmatprep.subr.mxu0 0.0
        %2262 = vmatpush1.msra.mxu0 0.0
        %2263 = vmatprep.subr.mxu0 0.0
        %2264 = vmatpush1.msra.mxu0 0.0
        %2265 = vmatprep.subr.mxu0 0.0
        %2266 = vmatpush1.msra.mxu0 0.0
        %2267 = vmatprep.subr.mxu0 0.0
        %2268 = vmatpush1.msra.mxu0 0.0
        %2269 = vmatprep.mubr.f32.mxu0 0.0
        %2270 = vmatmul.mubr.f32.gmra.mrb[0].mxu0 %v1853
        %v2271 = vpop.f32.mrb[0].mxu0
        %v2272 = vadd.f32 %v2057, %v2271
        %v2273 = vpop.f32.mrb[0].mxu0
        %2274 = vmatprep.mubr.f32.mxu0 0.0
        %2275 = vmatmul.mubr.f32.gmra.mrb[0].mxu0 %v1856
        %v2276 = vpop.f32.mrb[0].mxu0
        %v2277 = vadd.f32 %v2062, %v2276
        %v2278 = vpop.f32.mrb[0].mxu0
        %2279 = vmatprep.mubr.f32.mxu0 0.0
        %2280 = vmatmul.mubr.f32.gmra.mrb[0].mxu0 %v1859
        %v2281 = vpop.f32.mrb[0].mxu0
        %v2282 = vadd.f32 %v2067, %v2281
        %v2283 = vpop.f32.mrb[0].mxu0
        %2284 = vmatprep.mubr.f32.mxu0 0.0
        %2285 = vmatmul.mubr.f32.gmra.mrb[0].mxu0 %v1862
        %v2286 = vpop.f32.mrb[0].mxu0
        %v2287 = vadd.f32 %v2072, %v2286
        %v2288 = vpop.f32.mrb[0].mxu0
        %2289 = vmatprep.mubr.f32.mxu0 0.0
        %2290 = vmatmul.mubr.f32.gmra.mrb[0].mxu0 %v1865
        %v2291 = vpop.f32.mrb[0].mxu0
        %v2292 = vadd.f32 %v2077, %v2291
        %v2293 = vpop.f32.mrb[0].mxu0
        %2294 = vmatprep.mubr.f32.mxu0 0.0
        %2295 = vmatmul.mubr.f32.gmra.mrb[0].mxu0 %v1868
        %v2296 = vpop.f32.mrb[0].mxu0
        %v2297 = vadd.f32 %v2082, %v2296
        %v2298 = vpop.f32.mrb[0].mxu0
        %2299 = vmatprep.mubr.f32.mxu0 0.0
        %2300 = vmatmul.mubr.f32.gmra.mrb[0].mxu0 %v1871
        %v2301 = vpop.f32.mrb[0].mxu0
        %v2302 = vadd.f32 %v2087, %v2301
        %v2303 = vpop.f32.mrb[0].mxu0
        %2304 = vmatprep.mubr.f32.mxu0 0.0
        %2305 = vmatmul.mubr.f32.gmra.mrb[0].mxu0 %v1874
        %v2306 = vpop.f32.mrb[0].mxu0
        %v2307 = vadd.f32 %v2092, %v2306
        %v2308 = vpop.f32.mrb[0].mxu0
        %2309 = vmatprep.mubr.f32.mxu0 0.0
        %2310 = vmatmul.mubr.f32.gmra.mrb[0].mxu0 %v1877
        %v2311 = vpop.f32.mrb[0].mxu0
        %v2312 = vadd.f32 %v2097, %v2311
        %v2313 = vpop.f32.mrb[0].mxu0
        %2314 = vmatprep.mubr.f32.mxu0 0.0
        %2315 = vmatmul.mubr.f32.gmra.mrb[0].mxu0 %v1880
        %v2316 = vpop.f32.mrb[0].mxu0
        %v2317 = vadd.f32 %v2102, %v2316
        %v2318 = vpop.f32.mrb[0].mxu0
        %2319 = vmatprep.mubr.f32.mxu0 0.0
        %2320 = vmatmul.mubr.f32.gmra.mrb[0].mxu0 %v1883
        %v2321 = vpop.f32.mrb[0].mxu0
        %v2322 = vadd.f32 %v2107, %v2321
        %v2323 = vpop.f32.mrb[0].mxu0
        %2324 = vmatprep.mubr.f32.mxu0 0.0
        %2325 = vmatmul.mubr.f32.gmra.mrb[0].mxu0 %v1886
        %v2326 = vpop.f32.mrb[0].mxu0
        %v2327 = vadd.f32 %v2112, %v2326
        %v2328 = vpop.f32.mrb[0].mxu0
        %2329 = vmatprep.mubr.f32.mxu0 0.0
        %2330 = vmatmul.mubr.f32.gmra.mrb[0].mxu0 %v1889
        %v2331 = vpop.f32.mrb[0].mxu0
        %v2332 = vadd.f32 %v2117, %v2331
        %v2333 = vpop.f32.mrb[0].mxu0
        %2334 = vmatprep.mubr.f32.mxu0 0.0
        %2335 = vmatmul.mubr.f32.gmra.mrb[0].mxu0 %v1892
        %v2336 = vpop.f32.mrb[0].mxu0
        %v2337 = vadd.f32 %v2122, %v2336
        %v2338 = vpop.f32.mrb[0].mxu0
        %2339 = vmatprep.mubr.f32.mxu0 0.0
        %2340 = vmatmul.mubr.f32.gmra.mrb[0].mxu0 %v1895
        %v2341 = vpop.f32.mrb[0].mxu0
        %v2342 = vadd.f32 %v2127, %v2341
        %v2343 = vpop.f32.mrb[0].mxu0
        %2344 = vmatprep.mubr.f32.mxu0 0.0
        %2345 = vmatmul.mubr.f32.gmra.mrb[0].mxu0 %v1898
        %v2346 = vpop.f32.mrb[0].mxu0
        %v2347 = vadd.f32 %v2132, %v2346
        %v2348 = vpop.f32.mrb[0].mxu0
        %2349 = vmatprep.mubr.f32.mxu0 0.0
        %2350 = vmatmul.mubr.f32.gmra.mrb[0].mxu0 %v1901
        %v2351 = vpop.f32.mrb[0].mxu0
        %v2352 = vadd.f32 %v2137, %v2351
        %v2353 = vpop.f32.mrb[0].mxu0
        %2354 = vmatprep.mubr.f32.mxu0 0.0
        %2355 = vmatmul.mubr.f32.gmra.mrb[0].mxu0 %v1904
        %v2356 = vpop.f32.mrb[0].mxu0
        %v2357 = vadd.f32 %v2142, %v2356
        %v2358 = vpop.f32.mrb[0].mxu0
        %2359 = vmatprep.mubr.f32.mxu0 0.0
        %2360 = vmatmul.mubr.f32.gmra.mrb[0].mxu0 %v1907
        %v2361 = vpop.f32.mrb[0].mxu0
        %v2362 = vadd.f32 %v2147, %v2361
        %v2363 = vpop.f32.mrb[0].mxu0
        %2364 = vmatprep.mubr.f32.mxu0 0.0
        %2365 = vmatmul.mubr.f32.gmra.mrb[0].mxu0 %v1910
        %v2366 = vpop.f32.mrb[0].mxu0
        %v2367 = vadd.f32 %v2152, %v2366
        %v2368 = vpop.f32.mrb[0].mxu0
        %2369 = vmatprep.mubr.f32.mxu0 0.0
        %2370 = vmatmul.mubr.f32.gmra.mrb[0].mxu0 %v1913
        %v2371 = vpop.f32.mrb[0].mxu0
        %v2372 = vadd.f32 %v2157, %v2371
        %v2373 = vpop.f32.mrb[0].mxu0
        %2374 = vmatprep.mubr.f32.mxu0 0.0
        %2375 = vmatmul.mubr.f32.gmra.mrb[0].mxu0 %v1916
        %v2376 = vpop.f32.mrb[0].mxu0
        %v2377 = vadd.f32 %v2162, %v2376
        %v2378 = vpop.f32.mrb[0].mxu0
        %2379 = vmatprep.mubr.f32.mxu0 0.0
        %2380 = vmatmul.mubr.f32.gmra.mrb[0].mxu0 %v1919
        %v2381 = vpop.f32.mrb[0].mxu0
        %v2382 = vadd.f32 %v2167, %v2381
        %v2383 = vpop.f32.mrb[0].mxu0
        %2384 = vmatprep.mubr.f32.mxu0 0.0
        %2385 = vmatmul.mubr.f32.gmra.mrb[0].mxu0 %v1922
        %v2386 = vpop.f32.mrb[0].mxu0
        %v2387 = vadd.f32 %v2172, %v2386
        %v2388 = vpop.f32.mrb[0].mxu0
        %2389 = vmatprep.mubr.f32.mxu0 0.0
        %2390 = vmatmul.mubr.f32.gmra.mrb[0].mxu0 %v1925
        %v2391 = vpop.f32.mrb[0].mxu0
        %v2392 = vadd.f32 %v2177, %v2391
        %v2393 = vpop.f32.mrb[0].mxu0
        %2394 = vmatprep.mubr.f32.mxu0 0.0
        %2395 = vmatmul.mubr.f32.gmra.mrb[0].mxu0 %v1928
        %v2396 = vpop.f32.mrb[0].mxu0
        %v2397 = vadd.f32 %v2182, %v2396
        %v2398 = vpop.f32.mrb[0].mxu0
        %2399 = vmatprep.mubr.f32.mxu0 0.0
        %2400 = vmatmul.mubr.f32.gmra.mrb[0].mxu0 %v1931
        %v2401 = vpop.f32.mrb[0].mxu0
        %v2402 = vadd.f32 %v2187, %v2401
        %v2403 = vpop.f32.mrb[0].mxu0
        %2404 = vmatprep.mubr.f32.mxu0 0.0
        %2405 = vmatmul.mubr.f32.gmra.mrb[0].mxu0 %v1934
        %v2406 = vpop.f32.mrb[0].mxu0
        %v2407 = vadd.f32 %v2192, %v2406
        %v2408 = vpop.f32.mrb[0].mxu0
        %2409 = vmatprep.mubr.f32.mxu0 0.0
        %2410 = vmatmul.mubr.f32.gmra.mrb[0].mxu0 %v1937
        %v2411 = vpop.f32.mrb[0].mxu0
        %v2412 = vadd.f32 %v2197, %v2411
        %v2413 = vpop.f32.mrb[0].mxu0
        %2414 = vmatprep.mubr.f32.mxu0 0.0
        %2415 = vmatmul.mubr.f32.gmra.mrb[0].mxu0 %v1940
        %v2416 = vpop.f32.mrb[0].mxu0
        %v2417 = vadd.f32 %v2202, %v2416
        %v2418 = vpop.f32.mrb[0].mxu0
        %2419 = vdwg.mxu0
        %v2420 = vadd.f32 %v1703, %v2272
        %v2421 = vadd.f32 %v1708, %v2277
        %v2422 = vadd.f32 %v1713, %v2282
        %v2423 = vadd.f32 %v1718, %v2287
        %v2424 = vadd.f32 %v1723, %v2292
        %v2425 = vadd.f32 %v1728, %v2297
        %v2426 = vadd.f32 %v1733, %v2302
        %v2427 = vadd.f32 %v1738, %v2307
        %v2428 = vadd.f32 %v1743, %v2312
        %v2429 = vadd.f32 %v1748, %v2317
        %v2430 = vadd.f32 %v1753, %v2322
        %v2431 = vadd.f32 %v1758, %v2327
        %v2432 = vadd.f32 %v1763, %v2332
        %v2433 = vadd.f32 %v1768, %v2337
        %v2434 = vadd.f32 %v1773, %v2342
        %v2435 = vadd.f32 %v1778, %v2347
        %v2436 = vadd.f32 %v1783, %v2352
        %v2437 = vadd.f32 %v1788, %v2357
        %v2438 = vadd.f32 %v1793, %v2362
        %v2439 = vadd.f32 %v1798, %v2367
        %v2440 = vadd.f32 %v1803, %v2372
        %v2441 = vadd.f32 %v1808, %v2377
        %v2442 = vadd.f32 %v1813, %v2382
        %v2443 = vadd.f32 %v1818, %v2387
        %v2444 = vadd.f32 %v1823, %v2392
        %v2445 = vadd.f32 %v1828, %v2397
        %v2446 = vadd.f32 %v1833, %v2402
        %v2447 = vadd.f32 %v1838, %v2407
        %v2448 = vadd.f32 %v1843, %v2412
        %v2449 = vadd.f32 %v1848, %v2417
        %v2450 = vld [vmem:[%s2] sm:$0x1]
        %v2452 = vlaneseq
        %v2453 = vshrl.u32 %v2452, 7
        %v2454 = vsub.s32 0, %v2453
        %v2455 = vrot.slane %v2450, %v2454
        %v2457 = vadd.f32 %v2420, %v2455
        %v2458 = vadd.f32 %v2421, %v2455
        %v2459 = vadd.f32 %v2422, %v2455
        %v2460 = vadd.f32 %v2423, %v2455
        %v2461 = vadd.f32 %v2424, %v2455
        %v2462 = vadd.f32 %v2425, %v2455
        %v2463 = vadd.f32 %v2426, %v2455
        %v2464 = vadd.f32 %v2427, %v2455
        %v2465 = vadd.f32 %v2428, %v2455
        %v2466 = vadd.f32 %v2429, %v2455
        %v2467 = vadd.f32 %v2430, %v2455
        %v2468 = vadd.f32 %v2431, %v2455
        %v2469 = vadd.f32 %v2432, %v2455
        %v2470 = vadd.f32 %v2433, %v2455
        %v2471 = vadd.f32 %v2434, %v2455
        %v2472 = vadd.f32 %v2435, %v2455
        %v2473 = vadd.f32 %v2436, %v2455
        %v2474 = vadd.f32 %v2437, %v2455
        %v2475 = vadd.f32 %v2438, %v2455
        %v2476 = vadd.f32 %v2439, %v2455
        %v2477 = vadd.f32 %v2440, %v2455
        %v2478 = vadd.f32 %v2441, %v2455
        %v2479 = vadd.f32 %v2442, %v2455
        %v2480 = vadd.f32 %v2443, %v2455
        %v2481 = vadd.f32 %v2444, %v2455
        %v2482 = vadd.f32 %v2445, %v2455
        %v2483 = vadd.f32 %v2446, %v2455
        %v2484 = vadd.f32 %v2447, %v2455
        %v2485 = vadd.f32 %v2448, %v2455
        %v2486 = vadd.f32 %v2449, %v2455
        %v2487 = vmax.f32 %v2457, 0.0
        %v2488 = vmax.f32 %v2458, 0.0
        %v2489 = vmax.f32 %v2459, 0.0
        %v2490 = vmax.f32 %v2460, 0.0
        %v2491 = vmax.f32 %v2461, 0.0
        %v2492 = vmax.f32 %v2462, 0.0
        %v2493 = vmax.f32 %v2463, 0.0
        %v2494 = vmax.f32 %v2464, 0.0
        %v2495 = vmax.f32 %v2465, 0.0
        %v2496 = vmax.f32 %v2466, 0.0
        %v2497 = vmax.f32 %v2467, 0.0
        %v2498 = vmax.f32 %v2468, 0.0
        %v2499 = vmax.f32 %v2469, 0.0
        %v2500 = vmax.f32 %v2470, 0.0
        %v2501 = vmax.f32 %v2471, 0.0
        %v2502 = vmax.f32 %v2472, 0.0
        %v2503 = vmax.f32 %v2473, 0.0
        %v2504 = vmax.f32 %v2474, 0.0
        %v2505 = vmax.f32 %v2475, 0.0
        %v2506 = vmax.f32 %v2476, 0.0
        %v2507 = vmax.f32 %v2477, 0.0
        %v2508 = vmax.f32 %v2478, 0.0
        %v2509 = vmax.f32 %v2479, 0.0
        %v2510 = vmax.f32 %v2480, 0.0
        %v2511 = vmax.f32 %v2481, 0.0
        %v2512 = vmax.f32 %v2482, 0.0
        %v2513 = vmax.f32 %v2483, 0.0
        %v2514 = vmax.f32 %v2484, 0.0
        %v2515 = vmax.f32 %v2485, 0.0
        %v2516 = vmax.f32 %v2486, 0.0
        %v2517 = vlaneseq
        %v2518 = vshrl.u32 %v2517, 7
        %v2519 = vadd.s32 %v2518, 8
        %v2520 = vadd.s32 %v2518, 16
        %v2521 = vstv %s378
        %v2522 = vadd.s32 %v2521, 2
        %v2523 = vadd.s32 %v2521, 3
        %v2524 = vadd.s32 %v2521, 4
        %v2525 = vadd.s32 %v2521, 5
        %v2526 = vadd.s32 %v2521, 6
        %v2527 = vadd.s32 %v2521, 7
        %v2528 = vadd.s32 %v2521, 8
        %v2529 = vadd.s32 %v2521, 9
        %v2530 = vsub.s32 %v2521, 1
        %v2531 = vsub.s32 %v2522, 1
        %v2532 = vsub.s32 %v2523, 1
        %v2533 = vsub.s32 %v2524, 1
        %v2534 = vsub.s32 %v2525, 1
        %v2535 = vsub.s32 %v2526, 1
        %v2536 = vsub.s32 %v2527, 1
        %v2537 = vsub.s32 %v2528, 1
        %v2538 = vsub.s32 %v2529, 1
        %vm2539 = vcmp.ge.s32.totalorder %v2530, 0
        %vm2540 = vcmp.ge.s32.totalorder %v2521, 0
        %vm2541 = vcmp.ge.s32.totalorder %v2531, 0
        %vm2542 = vcmp.ge.s32.totalorder %v2532, 0
        %vm2543 = vcmp.ge.s32.totalorder %v2533, 0
        %vm2544 = vcmp.ge.s32.totalorder %v2534, 0
        %vm2545 = vcmp.ge.s32.totalorder %v2535, 0
        %vm2546 = vcmp.ge.s32.totalorder %v2536, 0
        %vm2547 = vcmp.ge.s32.totalorder %v2537, 0
        %vm2548 = vcmp.ge.s32.totalorder %v2538, 0
        %vm2549 = vcmp.lt.s32.totalorder %v2530, 16
        %vm2550 = vcmp.lt.s32.totalorder %v2521, 16
        %vm2551 = vcmp.lt.s32.totalorder %v2531, 16
        %vm2552 = vcmp.lt.s32.totalorder %v2532, 16
        %vm2553 = vcmp.lt.s32.totalorder %v2533, 16
        %vm2554 = vcmp.lt.s32.totalorder %v2534, 16
        %vm2555 = vcmp.lt.s32.totalorder %v2535, 16
        %vm2556 = vcmp.lt.s32.totalorder %v2536, 16
        %vm2557 = vcmp.lt.s32.totalorder %v2537, 16
        %vm2558 = vcmp.lt.s32.totalorder %v2538, 16
        %vm2559 = vmand %vm2539, %vm2549
        %vm2560 = vmand %vm2540, %vm2550
        %vm2561 = vmand %vm2541, %vm2551
        %vm2562 = vmand %vm2542, %vm2552
        %vm2563 = vmand %vm2543, %vm2553
        %vm2564 = vmand %vm2544, %vm2554
        %vm2565 = vmand %vm2545, %vm2555
        %vm2566 = vmand %vm2546, %vm2556
        %vm2567 = vmand %vm2547, %vm2557
        %vm2568 = vmand %vm2548, %vm2558
        %vm2569 = vcmp.ge.s32.totalorder %v2518, 1
        %vm2570 = vcmp.ge.s32.totalorder %v2519, 1
        %vm2571 = vcmp.ge.s32.totalorder %v2520, 1
        %vm2572 = vmand %vm2559, %vm2569
        %vm2573 = vmand %vm2559, %vm2570
        %vm2574 = vmand %vm2559, %vm2571
        %vm2575 = vmand %vm2560, %vm2569
        %vm2576 = vmand %vm2560, %vm2570
        %vm2577 = vmand %vm2560, %vm2571
        %vm2578 = vmand %vm2561, %vm2569
        %vm2579 = vmand %vm2561, %vm2570
        %vm2580 = vmand %vm2561, %vm2571
        %vm2581 = vmand %vm2562, %vm2569
        %vm2582 = vmand %vm2562, %vm2570
        %vm2583 = vmand %vm2562, %vm2571
        %vm2584 = vmand %vm2563, %vm2569
        %vm2585 = vmand %vm2563, %vm2570
        %vm2586 = vmand %vm2563, %vm2571
        %vm2587 = vmand %vm2564, %vm2569
        %vm2588 = vmand %vm2564, %vm2570
        %vm2589 = vmand %vm2564, %vm2571
        %vm2590 = vmand %vm2565, %vm2569
        %vm2591 = vmand %vm2565, %vm2570
        %vm2592 = vmand %vm2565, %vm2571
        %vm2593 = vmand %vm2566, %vm2569
        %vm2594 = vmand %vm2566, %vm2570
        %vm2595 = vmand %vm2566, %vm2571
        %vm2596 = vmand %vm2567, %vm2569
        %vm2597 = vmand %vm2567, %vm2570
        %vm2598 = vmand %vm2567, %vm2571
        %vm2599 = vmand %vm2568, %vm2569
        %vm2600 = vmand %vm2568, %vm2570
        %vm2601 = vmand %vm2568, %vm2571
        %vm2602 = vcmp.le.s32.totalorder %v2518, 16
        %vm2603 = vcmp.le.s32.totalorder %v2519, 16
        %vm2604 = vcmp.le.s32.totalorder %v2520, 16
        %vm2605 = vmand %vm2572, %vm2602
        %vm2606 = vmand %vm2573, %vm2603
        %vm2607 = vmand %vm2574, %vm2604
        %vm2608 = vmand %vm2575, %vm2602
        %vm2609 = vmand %vm2576, %vm2603
        %vm2610 = vmand %vm2577, %vm2604
        %vm2611 = vmand %vm2578, %vm2602
        %vm2612 = vmand %vm2579, %vm2603
        %vm2613 = vmand %vm2580, %vm2604
        %vm2614 = vmand %vm2581, %vm2602
        %vm2615 = vmand %vm2582, %vm2603
        %vm2616 = vmand %vm2583, %vm2604
        %vm2617 = vmand %vm2584, %vm2602
        %vm2618 = vmand %vm2585, %vm2603
        %vm2619 = vmand %vm2586, %vm2604
        %vm2620 = vmand %vm2587, %vm2602
        %vm2621 = vmand %vm2588, %vm2603
        %vm2622 = vmand %vm2589, %vm2604
        %vm2623 = vmand %vm2590, %vm2602
        %vm2624 = vmand %vm2591, %vm2603
        %vm2625 = vmand %vm2592, %vm2604
        %vm2626 = vmand %vm2593, %vm2602
        %vm2627 = vmand %vm2594, %vm2603
        %vm2628 = vmand %vm2595, %vm2604
        %vm2629 = vmand %vm2596, %vm2602
        %vm2630 = vmand %vm2597, %vm2603
        %vm2631 = vmand %vm2598, %vm2604
        %vm2632 = vmand %vm2599, %vm2602
        %vm2633 = vmand %vm2600, %vm2603
        %vm2634 = vmand %vm2601, %vm2604
        %v2635 = vsel %vm2605, 1, 0
        %v2636 = vsel %vm2606, 1, 0
        %v2637 = vsel %vm2607, 1, 0
        %v2638 = vsel %vm2608, 1, 0
        %v2639 = vsel %vm2609, 1, 0
        %v2640 = vsel %vm2610, 1, 0
        %v2641 = vsel %vm2611, 1, 0
        %v2642 = vsel %vm2612, 1, 0
        %v2643 = vsel %vm2613, 1, 0
        %v2644 = vsel %vm2614, 1, 0
        %v2645 = vsel %vm2615, 1, 0
        %v2646 = vsel %vm2616, 1, 0
        %v2647 = vsel %vm2617, 1, 0
        %v2648 = vsel %vm2618, 1, 0
        %v2649 = vsel %vm2619, 1, 0
        %v2650 = vsel %vm2620, 1, 0
        %v2651 = vsel %vm2621, 1, 0
        %v2652 = vsel %vm2622, 1, 0
        %v2653 = vsel %vm2623, 1, 0
        %v2654 = vsel %vm2624, 1, 0
        %v2655 = vsel %vm2625, 1, 0
        %v2656 = vsel %vm2626, 1, 0
        %v2657 = vsel %vm2627, 1, 0
        %v2658 = vsel %vm2628, 1, 0
        %v2659 = vsel %vm2629, 1, 0
        %v2660 = vsel %vm2630, 1, 0
        %v2661 = vsel %vm2631, 1, 0
        %v2662 = vsel %vm2632, 1, 0
        %v2663 = vsel %vm2633, 1, 0
        %v2664 = vsel %vm2634, 1, 0
        %vm2665 = vcmp.eq.s32.totalorder %v2635, 1
        %vm2666 = vcmp.eq.s32.totalorder %v2636, 1
        %vm2667 = vcmp.eq.s32.totalorder %v2637, 1
        %vm2668 = vcmp.eq.s32.totalorder %v2638, 1
        %vm2669 = vcmp.eq.s32.totalorder %v2639, 1
        %vm2670 = vcmp.eq.s32.totalorder %v2640, 1
        %vm2671 = vcmp.eq.s32.totalorder %v2641, 1
        %vm2672 = vcmp.eq.s32.totalorder %v2642, 1
        %vm2673 = vcmp.eq.s32.totalorder %v2643, 1
        %vm2674 = vcmp.eq.s32.totalorder %v2644, 1
        %vm2675 = vcmp.eq.s32.totalorder %v2645, 1
        %vm2676 = vcmp.eq.s32.totalorder %v2646, 1
        %vm2677 = vcmp.eq.s32.totalorder %v2647, 1
        %vm2678 = vcmp.eq.s32.totalorder %v2648, 1
        %vm2679 = vcmp.eq.s32.totalorder %v2649, 1
        %vm2680 = vcmp.eq.s32.totalorder %v2650, 1
        %vm2681 = vcmp.eq.s32.totalorder %v2651, 1
        %vm2682 = vcmp.eq.s32.totalorder %v2652, 1
        %vm2683 = vcmp.eq.s32.totalorder %v2653, 1
        %vm2684 = vcmp.eq.s32.totalorder %v2654, 1
        %vm2685 = vcmp.eq.s32.totalorder %v2655, 1
        %vm2686 = vcmp.eq.s32.totalorder %v2656, 1
        %vm2687 = vcmp.eq.s32.totalorder %v2657, 1
        %vm2688 = vcmp.eq.s32.totalorder %v2658, 1
        %vm2689 = vcmp.eq.s32.totalorder %v2659, 1
        %vm2690 = vcmp.eq.s32.totalorder %v2660, 1
        %vm2691 = vcmp.eq.s32.totalorder %v2661, 1
        %vm2692 = vcmp.eq.s32.totalorder %v2662, 1
        %vm2693 = vcmp.eq.s32.totalorder %v2663, 1
        %vm2694 = vcmp.eq.s32.totalorder %v2664, 1
        %v2695 = vsel %vm2665, %v2487, 0.0
        %v2696 = vsel %vm2666, %v2488, 0.0
        %v2697 = vsel %vm2667, %v2489, 0.0
        %v2698 = vsel %vm2668, %v2490, 0.0
        %v2699 = vsel %vm2669, %v2491, 0.0
        %v2700 = vsel %vm2670, %v2492, 0.0
        %v2701 = vsel %vm2671, %v2493, 0.0
        %v2702 = vsel %vm2672, %v2494, 0.0
        %v2703 = vsel %vm2673, %v2495, 0.0
        %v2704 = vsel %vm2674, %v2496, 0.0
        %v2705 = vsel %vm2675, %v2497, 0.0
        %v2706 = vsel %vm2676, %v2498, 0.0
        %v2707 = vsel %vm2677, %v2499, 0.0
        %v2708 = vsel %vm2678, %v2500, 0.0
        %v2709 = vsel %vm2679, %v2501, 0.0
        %v2710 = vsel %vm2680, %v2502, 0.0
        %v2711 = vsel %vm2681, %v2503, 0.0
        %v2712 = vsel %vm2682, %v2504, 0.0
        %v2713 = vsel %vm2683, %v2505, 0.0
        %v2714 = vsel %vm2684, %v2506, 0.0
        %v2715 = vsel %vm2685, %v2507, 0.0
        %v2716 = vsel %vm2686, %v2508, 0.0
        %v2717 = vsel %vm2687, %v2509, 0.0
        %v2718 = vsel %vm2688, %v2510, 0.0
        %v2719 = vsel %vm2689, %v2511, 0.0
        %v2720 = vsel %vm2690, %v2512, 0.0
        %v2721 = vsel %vm2691, %v2513, 0.0
        %v2722 = vsel %vm2692, %v2514, 0.0
        %v2723 = vsel %vm2693, %v2515, 0.0
        %v2724 = vsel %vm2694, %v2516, 0.0
        %2725 = vst [vmem:[#allocation4] sm:$0xff] %v2695
        %2726 = vst [vmem:[#allocation4 + $0x18] sm:$0xff] %v2696
        %2727 = vst [vmem:[#allocation4 + $0x30] sm:$0xff] %v2698
        %2728 = vst [vmem:[#allocation4 + $0x48] sm:$0xff] %v2699
        %2729 = vst [vmem:[#allocation4 + $0x60] sm:$0xff] %v2701
        %2730 = vst [vmem:[#allocation4 + $0x78] sm:$0xff] %v2702
        %2731 = vst [vmem:[#allocation4 + $0x90] sm:$0xff] %v2704
        %2732 = vst [vmem:[#allocation4 + $0xa8] sm:$0xff] %v2705
        %2733 = vst [vmem:[#allocation4 + $0xc0] sm:$0xff] %v2707
        %2734 = vst [vmem:[#allocation4 + $0xd8] sm:$0xff] %v2708
        %2735 = vst [vmem:[#allocation4 + $0xf0] sm:$0xff] %v2710
        %2736 = vst [vmem:[#allocation4 + $0x108] sm:$0xff] %v2711
        %2737 = vst [vmem:[#allocation4 + $0x120] sm:$0xff] %v2713
        %2738 = vst [vmem:[#allocation4 + $0x138] sm:$0xff] %v2714
        %2739 = vst [vmem:[#allocation4 + $0x150] sm:$0xff] %v2716
        %2740 = vst [vmem:[#allocation4 + $0x168] sm:$0xff] %v2717
        %2741 = vst [vmem:[#allocation4 + $0x180] sm:$0xff] %v2719
        %2742 = vst [vmem:[#allocation4 + $0x198] sm:$0xff] %v2720
        %2743 = vst [vmem:[#allocation4 + $0x1b0] sm:$0xff] %v2722
        %2744 = vst [vmem:[#allocation4 + $0x1c8] sm:$0xff] %v2723
        %vm2775 = vcmask 1046528
        %v2776 = vrot.slane %v2695, 1
        %v2777 = vrot.slane %v2696, 1
        %v2778 = vsel %vm2775, %v2776, %v2777
        %v2779 = vrot.slane %v2697, 1
        %v2780 = vsel %vm2775, %v2777, %v2779
        %v2781 = vrot.slane %v2698, 1
        %v2782 = vrot.slane %v2699, 1
        %v2783 = vsel %vm2775, %v2781, %v2782
        %v2784 = vrot.slane %v2700, 1
        %v2785 = vsel %vm2775, %v2782, %v2784
        %v2786 = vrot.slane %v2701, 1
        %v2787 = vrot.slane %v2702, 1
        %v2788 = vsel %vm2775, %v2786, %v2787
        %v2789 = vrot.slane %v2703, 1
        %v2790 = vsel %vm2775, %v2787, %v2789
        %v2791 = vrot.slane %v2704, 1
        %v2792 = vrot.slane %v2705, 1
        %v2793 = vsel %vm2775, %v2791, %v2792
        %v2794 = vrot.slane %v2706, 1
        %v2795 = vsel %vm2775, %v2792, %v2794
        %v2796 = vrot.slane %v2707, 1
        %v2797 = vrot.slane %v2708, 1
        %v2798 = vsel %vm2775, %v2796, %v2797
        %v2799 = vrot.slane %v2709, 1
        %v2800 = vsel %vm2775, %v2797, %v2799
        %v2801 = vrot.slane %v2710, 1
        %v2802 = vrot.slane %v2711, 1
        %v2803 = vsel %vm2775, %v2801, %v2802
        %v2804 = vrot.slane %v2712, 1
        %v2805 = vsel %vm2775, %v2802, %v2804
        %v2806 = vrot.slane %v2713, 1
        %v2807 = vrot.slane %v2714, 1
        %v2808 = vsel %vm2775, %v2806, %v2807
        %v2809 = vrot.slane %v2715, 1
        %v2810 = vsel %vm2775, %v2807, %v2809
        %v2811 = vrot.slane %v2716, 1
        %v2812 = vrot.slane %v2717, 1
        %v2813 = vsel %vm2775, %v2811, %v2812
        %v2814 = vrot.slane %v2718, 1
        %v2815 = vsel %vm2775, %v2812, %v2814
        %v2816 = vrot.slane %v2719, 1
        %v2817 = vrot.slane %v2720, 1
        %v2818 = vsel %vm2775, %v2816, %v2817
        %v2819 = vrot.slane %v2721, 1
        %v2820 = vsel %vm2775, %v2817, %v2819
        %v2821 = vrot.slane %v2722, 1
        %v2822 = vrot.slane %v2723, 1
        %v2823 = vsel %vm2775, %v2821, %v2822
        %v2824 = vrot.slane %v2724, 1
        %v2825 = vsel %vm2775, %v2822, %v2824
        %2846 = vst [vmem:[#allocation4 + $0x8] sm:$0xff] %v2778
        %2847 = vst [vmem:[#allocation4 + $0x20] sm:$0xff] %v2780
        %2848 = vst [vmem:[#allocation4 + $0x38] sm:$0xff] %v2783
        %2849 = vst [vmem:[#allocation4 + $0x50] sm:$0xff] %v2785
        %2850 = vst [vmem:[#allocation4 + $0x68] sm:$0xff] %v2788
        %2851 = vst [vmem:[#allocation4 + $0x80] sm:$0xff] %v2790
        %2852 = vst [vmem:[#allocation4 + $0x98] sm:$0xff] %v2793
        %2853 = vst [vmem:[#allocation4 + $0xb0] sm:$0xff] %v2795
        %2854 = vst [vmem:[#allocation4 + $0xc8] sm:$0xff] %v2798
        %2855 = vst [vmem:[#allocation4 + $0xe0] sm:$0xff] %v2800
        %2856 = vst [vmem:[#allocation4 + $0xf8] sm:$0xff] %v2803
        %2857 = vst [vmem:[#allocation4 + $0x110] sm:$0xff] %v2805
        %2858 = vst [vmem:[#allocation4 + $0x128] sm:$0xff] %v2808
        %2859 = vst [vmem:[#allocation4 + $0x140] sm:$0xff] %v2810
        %2860 = vst [vmem:[#allocation4 + $0x158] sm:$0xff] %v2813
        %2861 = vst [vmem:[#allocation4 + $0x170] sm:$0xff] %v2815
        %2862 = vst [vmem:[#allocation4 + $0x188] sm:$0xff] %v2818
        %2863 = vst [vmem:[#allocation4 + $0x1a0] sm:$0xff] %v2820
        %2864 = vst [vmem:[#allocation4 + $0x1b8] sm:$0xff] %v2823
        %2865 = vst [vmem:[#allocation4 + $0x1d0] sm:$0xff] %v2825
        %vm2866 = vcmask 1045504
        %v2867 = vrot.slane %v2695, 2
        %v2868 = vrot.slane %v2696, 2
        %v2869 = vsel %vm2866, %v2867, %v2868
        %v2870 = vrot.slane %v2697, 2
        %v2871 = vsel %vm2866, %v2868, %v2870
        %v2872 = vrot.slane %v2698, 2
        %v2873 = vrot.slane %v2699, 2
        %v2874 = vsel %vm2866, %v2872, %v2873
        %v2875 = vrot.slane %v2700, 2
        %v2876 = vsel %vm2866, %v2873, %v2875
        %v2877 = vrot.slane %v2701, 2
        %v2878 = vrot.slane %v2702, 2
        %v2879 = vsel %vm2866, %v2877, %v2878
        %v2880 = vrot.slane %v2703, 2
        %v2881 = vsel %vm2866, %v2878, %v2880
        %v2882 = vrot.slane %v2704, 2
        %v2883 = vrot.slane %v2705, 2
        %v2884 = vsel %vm2866, %v2882, %v2883
        %v2885 = vrot.slane %v2706, 2
        %v2886 = vsel %vm2866, %v2883, %v2885
        %v2887 = vrot.slane %v2707, 2
        %v2888 = vrot.slane %v2708, 2
        %v2889 = vsel %vm2866, %v2887, %v2888
        %v2890 = vrot.slane %v2709, 2
        %v2891 = vsel %vm2866, %v2888, %v2890
        %v2892 = vrot.slane %v2710, 2
        %v2893 = vrot.slane %v2711, 2
        %v2894 = vsel %vm2866, %v2892, %v2893
        %v2895 = vrot.slane %v2712, 2
        %v2896 = vsel %vm2866, %v2893, %v2895
        %v2897 = vrot.slane %v2713, 2
        %v2898 = vrot.slane %v2714, 2
        %v2899 = vsel %vm2866, %v2897, %v2898
        %v2900 = vrot.slane %v2715, 2
        %v2901 = vsel %vm2866, %v2898, %v2900
        %v2902 = vrot.slane %v2716, 2
        %v2903 = vrot.slane %v2717, 2
        %v2904 = vsel %vm2866, %v2902, %v2903
        %v2905 = vrot.slane %v2718, 2
        %v2906 = vsel %vm2866, %v2903, %v2905
        %v2907 = vrot.slane %v2719, 2
        %v2908 = vrot.slane %v2720, 2
        %v2909 = vsel %vm2866, %v2907, %v2908
        %v2910 = vrot.slane %v2721, 2
        %v2911 = vsel %vm2866, %v2908, %v2910
        %v2912 = vrot.slane %v2722, 2
        %v2913 = vrot.slane %v2723, 2
        %v2914 = vsel %vm2866, %v2912, %v2913
        %v2915 = vrot.slane %v2724, 2
        %v2916 = vsel %vm2866, %v2913, %v2915
        %2937 = vst [vmem:[#allocation4 + $0x10] sm:$0xff] %v2869
        %2938 = vst [vmem:[#allocation4 + $0x28] sm:$0xff] %v2871
        %2939 = vst [vmem:[#allocation4 + $0x40] sm:$0xff] %v2874
        %2940 = vst [vmem:[#allocation4 + $0x58] sm:$0xff] %v2876
        %2941 = vst [vmem:[#allocation4 + $0x70] sm:$0xff] %v2879
        %2942 = vst [vmem:[#allocation4 + $0x88] sm:$0xff] %v2881
        %2943 = vst [vmem:[#allocation4 + $0xa0] sm:$0xff] %v2884
        %2944 = vst [vmem:[#allocation4 + $0xb8] sm:$0xff] %v2886
        %2945 = vst [vmem:[#allocation4 + $0xd0] sm:$0xff] %v2889
        %2946 = vst [vmem:[#allocation4 + $0xe8] sm:$0xff] %v2891
        %2947 = vst [vmem:[#allocation4 + $0x100] sm:$0xff] %v2894
        %2948 = vst [vmem:[#allocation4 + $0x118] sm:$0xff] %v2896
        %2949 = vst [vmem:[#allocation4 + $0x130] sm:$0xff] %v2899
        %2950 = vst [vmem:[#allocation4 + $0x148] sm:$0xff] %v2901
        %2951 = vst [vmem:[#allocation4 + $0x160] sm:$0xff] %v2904
        %2952 = vst [vmem:[#allocation4 + $0x178] sm:$0xff] %v2906
        %2953 = vst [vmem:[#allocation4 + $0x190] sm:$0xff] %v2909
        %2954 = vst [vmem:[#allocation4 + $0x1a8] sm:$0xff] %v2911
        %2955 = vst [vmem:[#allocation4 + $0x1c0] sm:$0xff] %v2914
        %2956 = vst [vmem:[#allocation4 + $0x1d8] sm:$0xff] %v2916
        %v2957 = vld [vmem:[#allocation4] sm:$0xff]
        %v2958 = vld [vmem:[#allocation4 + $0x8] sm:$0xff]
        %v2959 = vld [vmem:[#allocation4 + $0x10] sm:$0xff]
        %v2960 = vld [vmem:[#allocation4 + $0x18] sm:$0xff]
        %v2961 = vld [vmem:[#allocation4 + $0x20] sm:$0xff]
        %v2962 = vld [vmem:[#allocation4 + $0x28] sm:$0xff]
        %v2963 = vld [vmem:[#allocation4 + $0x30] sm:$0xff]
        %v2964 = vld [vmem:[#allocation4 + $0x38] sm:$0xff]
        %v2965 = vld [vmem:[#allocation4 + $0x40] sm:$0xff]
        %v2966 = vld [vmem:[#allocation4 + $0x48] sm:$0xff]
        %v2967 = vld [vmem:[#allocation4 + $0x50] sm:$0xff]
        %v2968 = vld [vmem:[#allocation4 + $0x58] sm:$0xff]
        %v2969 = vld [vmem:[#allocation4 + $0x60] sm:$0xff]
        %v2970 = vld [vmem:[#allocation4 + $0x68] sm:$0xff]
        %v2971 = vld [vmem:[#allocation4 + $0x70] sm:$0xff]
        %v2972 = vld [vmem:[#allocation4 + $0x78] sm:$0xff]
        %v2973 = vld [vmem:[#allocation4 + $0x80] sm:$0xff]
        %v2974 = vld [vmem:[#allocation4 + $0x88] sm:$0xff]
        %v2975 = vld [vmem:[#allocation4 + $0x90] sm:$0xff]
        %v2976 = vld [vmem:[#allocation4 + $0x98] sm:$0xff]
        %v2977 = vld [vmem:[#allocation4 + $0xa0] sm:$0xff]
        %v2978 = vld [vmem:[#allocation4 + $0xa8] sm:$0xff]
        %v2979 = vld [vmem:[#allocation4 + $0xb0] sm:$0xff]
        %v2980 = vld [vmem:[#allocation4 + $0xb8] sm:$0xff]
        %v2981 = vld [vmem:[#allocation4 + $0xc0] sm:$0xff]
        %v2982 = vld [vmem:[#allocation4 + $0xc8] sm:$0xff]
        %v2983 = vld [vmem:[#allocation4 + $0xd0] sm:$0xff]
        %v2984 = vld [vmem:[#allocation4 + $0xd8] sm:$0xff]
        %v2985 = vld [vmem:[#allocation4 + $0xe0] sm:$0xff]
        %v2986 = vld [vmem:[#allocation4 + $0xe8] sm:$0xff]
        %v2987 = vld [vmem:[#allocation4 + $0xf0] sm:$0xff]
        %v2988 = vld [vmem:[#allocation4 + $0xf8] sm:$0xff]
        %v2989 = vld [vmem:[#allocation4 + $0x100] sm:$0xff]
        %v2990 = vld [vmem:[#allocation4 + $0x108] sm:$0xff]
        %v2991 = vld [vmem:[#allocation4 + $0x110] sm:$0xff]
        %v2992 = vld [vmem:[#allocation4 + $0x118] sm:$0xff]
        %v2993 = vld [vmem:[#allocation4 + $0x120] sm:$0xff]
        %v2994 = vld [vmem:[#allocation4 + $0x128] sm:$0xff]
        %v2995 = vld [vmem:[#allocation4 + $0x130] sm:$0xff]
        %v2996 = vld [vmem:[#allocation4 + $0x138] sm:$0xff]
        %v2997 = vld [vmem:[#allocation4 + $0x140] sm:$0xff]
        %v2998 = vld [vmem:[#allocation4 + $0x148] sm:$0xff]
        %v2999 = vld [vmem:[#allocation4 + $0x150] sm:$0xff]
        %v3000 = vld [vmem:[#allocation4 + $0x158] sm:$0xff]
        %v3001 = vld [vmem:[#allocation4 + $0x160] sm:$0xff]
        %v3002 = vld [vmem:[#allocation4 + $0x168] sm:$0xff]
        %v3003 = vld [vmem:[#allocation4 + $0x170] sm:$0xff]
        %v3004 = vld [vmem:[#allocation4 + $0x178] sm:$0xff]
        %v3005 = vld [vmem:[%s3] sm:$0xff]
        %v3006 = vld [vmem:[%s3 + $0x8] sm:$0xff]
        %v3007 = vld [vmem:[%s3 + $0x10] sm:$0xff]
        %v3008 = vld [vmem:[%s3 + $0x18] sm:$0xff]
        %v3009 = vld [vmem:[%s3 + $0x20] sm:$0xff]
        %v3010 = vld [vmem:[%s3 + $0x28] sm:$0xff]
        %v3011 = vld [vmem:[%s3 + $0x30] sm:$0xff]
        %v3012 = vld [vmem:[%s3 + $0x38] sm:$0xff]
        %v3013 = vld [vmem:[%s3 + $0x40] sm:$0xff]
        %v3014 = vld [vmem:[%s3 + $0x48] sm:$0xff]
        %v3015 = vld [vmem:[%s3 + $0x50] sm:$0xff]
        %v3016 = vld [vmem:[%s3 + $0x58] sm:$0xff]
        %v3017 = vld [vmem:[%s3 + $0x60] sm:$0xff]
        %v3018 = vld [vmem:[%s3 + $0x68] sm:$0xff]
        %v3019 = vld [vmem:[%s3 + $0x70] sm:$0xff]
        %v3020 = vld [vmem:[%s3 + $0x78] sm:$0xff]
        %v3021 = vld [vmem:[%s3 + $0x80] sm:$0xff]
        %v3022 = vld [vmem:[%s3 + $0x88] sm:$0xff]
        %v3023 = vld [vmem:[%s3 + $0x90] sm:$0xff]
        %v3024 = vld [vmem:[%s3 + $0x98] sm:$0xff]
        %v3025 = vld [vmem:[%s3 + $0xa0] sm:$0xff]
        %v3026 = vld [vmem:[%s3 + $0xa8] sm:$0xff]
        %v3027 = vld [vmem:[%s3 + $0xb0] sm:$0xff]
        %v3028 = vld [vmem:[%s3 + $0xb8] sm:$0xff]
        %v3029 = vld [vmem:[%s3 + $0xc0] sm:$0xff]
        %v3030 = vld [vmem:[%s3 + $0xc8] sm:$0xff]
        %v3031 = vld [vmem:[%s3 + $0xd0] sm:$0xff]
        %v3032 = vld [vmem:[%s3 + $0xd8] sm:$0xff]
        %v3033 = vld [vmem:[%s3 + $0xe0] sm:$0xff]
        %v3034 = vld [vmem:[%s3 + $0xe8] sm:$0xff]
        %v3035 = vld [vmem:[%s3 + $0xf0] sm:$0xff]
        %v3036 = vld [vmem:[%s3 + $0xf8] sm:$0xff]
        %v3037 = vld [vmem:[%s3 + $0x100] sm:$0xff]
        %v3038 = vld [vmem:[%s3 + $0x108] sm:$0xff]
        %v3039 = vld [vmem:[%s3 + $0x110] sm:$0xff]
        %v3040 = vld [vmem:[%s3 + $0x118] sm:$0xff]
        %v3041 = vld [vmem:[%s3 + $0x120] sm:$0xff]
        %v3042 = vld [vmem:[%s3 + $0x128] sm:$0xff]
        %v3043 = vld [vmem:[%s3 + $0x130] sm:$0xff]
        %v3044 = vld [vmem:[%s3 + $0x138] sm:$0xff]
        %v3045 = vld [vmem:[%s3 + $0x140] sm:$0xff]
        %v3046 = vld [vmem:[%s3 + $0x148] sm:$0xff]
        %v3047 = vld [vmem:[%s3 + $0x150] sm:$0xff]
        %v3048 = vld [vmem:[%s3 + $0x158] sm:$0xff]
        %v3049 = vld [vmem:[%s3 + $0x160] sm:$0xff]
        %v3050 = vld [vmem:[%s3 + $0x168] sm:$0xff]
        %v3051 = vld [vmem:[%s3 + $0x170] sm:$0xff]
        %v3052 = vld [vmem:[%s3 + $0x178] sm:$0xff]
        %v3053 = vld [vmem:[#allocation4 + $0x180] sm:$0xff]
        %v3054 = vld [vmem:[#allocation4 + $0x188] sm:$0xff]
        %v3055 = vld [vmem:[#allocation4 + $0x190] sm:$0xff]
        %v3056 = vld [vmem:[#allocation4 + $0x198] sm:$0xff]
        %v3057 = vld [vmem:[#allocation4 + $0x1a0] sm:$0xff]
        %v3058 = vld [vmem:[#allocation4 + $0x1a8] sm:$0xff]
        %s3059 = scalar_lea.vmem %s3, 384
        %v3060 = vld [vmem:[%s3059] sm:$0xff]
        %v3061 = vld [vmem:[%s3059 + $0x8] sm:$0xff]
        %v3062 = vld [vmem:[%s3059 + $0x10] sm:$0xff]
        %v3063 = vld [vmem:[%s3059 + $0x18] sm:$0xff]
        %v3064 = vld [vmem:[%s3059 + $0x20] sm:$0xff]
        %v3065 = vld [vmem:[%s3059 + $0x28] sm:$0xff]
        %v3066 = vld [vmem:[%s3059 + $0x30] sm:$0xff]
        %v3067 = vld [vmem:[%s3059 + $0x38] sm:$0xff]
        %v3068 = vld [vmem:[%s3059 + $0x40] sm:$0xff]
        %v3069 = vld [vmem:[%s3059 + $0x48] sm:$0xff]
        %v3070 = vld [vmem:[%s3059 + $0x50] sm:$0xff]
        %v3071 = vld [vmem:[%s3059 + $0x58] sm:$0xff]
        %v3072 = vld [vmem:[%s3059 + $0x60] sm:$0xff]
        %v3073 = vld [vmem:[%s3059 + $0x68] sm:$0xff]
        %v3074 = vld [vmem:[%s3059 + $0x70] sm:$0xff]
        %v3075 = vld [vmem:[%s3059 + $0x78] sm:$0xff]
        %v3076 = vld [vmem:[%s3059 + $0x80] sm:$0xff]
        %v3077 = vld [vmem:[%s3059 + $0x88] sm:$0xff]
        %v3078 = vld [vmem:[%s3059 + $0x90] sm:$0xff]
        %v3079 = vld [vmem:[%s3059 + $0x98] sm:$0xff]
        %v3080 = vld [vmem:[%s3059 + $0xa0] sm:$0xff]
        %v3081 = vld [vmem:[%s3059 + $0xa8] sm:$0xff]
        %v3082 = vld [vmem:[%s3059 + $0xb0] sm:$0xff]
        %v3083 = vld [vmem:[%s3059 + $0xb8] sm:$0xff]
        %v3084 = vld [vmem:[%s3059 + $0xc0] sm:$0xff]
        %v3085 = vld [vmem:[%s3059 + $0xc8] sm:$0xff]
        %v3086 = vld [vmem:[%s3059 + $0xd0] sm:$0xff]
        %v3087 = vld [vmem:[%s3059 + $0xd8] sm:$0xff]
        %v3088 = vld [vmem:[%s3059 + $0xe0] sm:$0xff]
        %v3089 = vld [vmem:[%s3059 + $0xe8] sm:$0xff]
        %v3090 = vld [vmem:[%s3059 + $0xf0] sm:$0xff]
        %v3091 = vld [vmem:[%s3059 + $0xf8] sm:$0xff]
        %v3092 = vld [vmem:[%s3059 + $0x100] sm:$0xff]
        %v3093 = vld [vmem:[%s3059 + $0x108] sm:$0xff]
        %v3094 = vld [vmem:[%s3059 + $0x110] sm:$0xff]
        %v3095 = vld [vmem:[%s3059 + $0x118] sm:$0xff]
        %v3096 = vld [vmem:[%s3059 + $0x120] sm:$0xff]
        %v3097 = vld [vmem:[%s3059 + $0x128] sm:$0xff]
        %v3098 = vld [vmem:[%s3059 + $0x130] sm:$0xff]
        %v3099 = vld [vmem:[%s3059 + $0x138] sm:$0xff]
        %v3100 = vld [vmem:[%s3059 + $0x140] sm:$0xff]
        %v3101 = vld [vmem:[%s3059 + $0x148] sm:$0xff]
        %v3102 = vld [vmem:[%s3059 + $0x150] sm:$0xff]
        %v3103 = vld [vmem:[%s3059 + $0x158] sm:$0xff]
        %v3104 = vld [vmem:[%s3059 + $0x160] sm:$0xff]
        %v3105 = vld [vmem:[%s3059 + $0x168] sm:$0xff]
        %v3106 = vld [vmem:[%s3059 + $0x170] sm:$0xff]
        %v3107 = vld [vmem:[%s3059 + $0x178] sm:$0xff]
        %3108 = vmatprep.subr.mxu0 0.0
        %3109 = vmatpush1.msra.mxu0 %v3060
        %3110 = vmatprep.subr.mxu0 0.0
        %3111 = vmatpush1.msra.mxu0 %v3061
        %3112 = vmatprep.subr.mxu0 0.0
        %3113 = vmatpush1.msra.mxu0 %v3062
        %3114 = vmatprep.subr.mxu0 0.0
        %3115 = vmatpush1.msra.mxu0 %v3063
        %3116 = vmatprep.subr.mxu0 0.0
        %3117 = vmatpush1.msra.mxu0 %v3064
        %3118 = vmatprep.subr.mxu0 0.0
        %3119 = vmatpush1.msra.mxu0 %v3065
        %3120 = vmatprep.subr.mxu0 0.0
        %3121 = vmatpush1.msra.mxu0 %v3066
        %3122 = vmatprep.subr.mxu0 0.0
        %3123 = vmatpush1.msra.mxu0 %v3067
        %3124 = vmatprep.subr.mxu0 0.0
        %3125 = vmatpush1.msra.mxu0 %v3068
        %3126 = vmatprep.subr.mxu0 0.0
        %3127 = vmatpush1.msra.mxu0 %v3069
        %3128 = vmatprep.subr.mxu0 0.0
        %3129 = vmatpush1.msra.mxu0 %v3070
        %3130 = vmatprep.subr.mxu0 0.0
        %3131 = vmatpush1.msra.mxu0 %v3071
        %3132 = vmatprep.subr.mxu0 0.0
        %3133 = vmatpush1.msra.mxu0 %v3072
        %3134 = vmatprep.subr.mxu0 0.0
        %3135 = vmatpush1.msra.mxu0 %v3073
        %3136 = vmatprep.subr.mxu0 0.0
        %3137 = vmatpush1.msra.mxu0 %v3074
        %3138 = vmatprep.subr.mxu0 0.0
        %3139 = vmatpush1.msra.mxu0 %v3075
        %3140 = vmatprep.subr.mxu0 0.0
        %3141 = vmatpush1.msra.mxu0 %v3076
        %3142 = vmatprep.subr.mxu0 0.0
        %3143 = vmatpush1.msra.mxu0 %v3077
        %3144 = vmatprep.subr.mxu0 0.0
        %3145 = vmatpush1.msra.mxu0 %v3078
        %3146 = vmatprep.subr.mxu0 0.0
        %3147 = vmatpush1.msra.mxu0 %v3079
        %3148 = vmatprep.subr.mxu0 0.0
        %3149 = vmatpush1.msra.mxu0 %v3080
        %3150 = vmatprep.subr.mxu0 0.0
        %3151 = vmatpush1.msra.mxu0 %v3081
        %3152 = vmatprep.subr.mxu0 0.0
        %3153 = vmatpush1.msra.mxu0 %v3082
        %3154 = vmatprep.subr.mxu0 0.0
        %3155 = vmatpush1.msra.mxu0 %v3083
        %3156 = vmatprep.subr.mxu0 0.0
        %3157 = vmatpush1.msra.mxu0 %v3084
        %3158 = vmatprep.subr.mxu0 0.0
        %3159 = vmatpush1.msra.mxu0 %v3085
        %3160 = vmatprep.subr.mxu0 0.0
        %3161 = vmatpush1.msra.mxu0 %v3086
        %3162 = vmatprep.subr.mxu0 0.0
        %3163 = vmatpush1.msra.mxu0 %v3087
        %3164 = vmatprep.subr.mxu0 0.0
        %3165 = vmatpush1.msra.mxu0 %v3088
        %3166 = vmatprep.subr.mxu0 0.0
        %3167 = vmatpush1.msra.mxu0 %v3089
        %3168 = vmatprep.subr.mxu0 0.0
        %3169 = vmatpush1.msra.mxu0 %v3090
        %3170 = vmatprep.subr.mxu0 0.0
        %3171 = vmatpush1.msra.mxu0 %v3091
        %3172 = vmatprep.mubr.f32.mxu0 %v2964
        %3173 = vmatmul.mubr.f32.gmra.mrb[0].mxu0 %v2963
        %v3174 = vpop.f32.mrb[0].mxu0
        %v3175 = vadd.f32 0.0, %v3174
        %v3176 = vpop.f32.mrb[0].mxu0
        %3177 = vmatprep.mubr.f32.mxu0 %v2967
        %3178 = vmatmul.mubr.f32.gmra.mrb[0].mxu0 %v2966
        %v3179 = vpop.f32.mrb[0].mxu0
        %v3180 = vadd.f32 0.0, %v3179
        %v3181 = vpop.f32.mrb[0].mxu0
        %3182 = vmatprep.mubr.f32.mxu0 %v2970
        %3183 = vmatmul.mubr.f32.gmra.mrb[0].mxu0 %v2969
        %v3184 = vpop.f32.mrb[0].mxu0
        %v3185 = vadd.f32 0.0, %v3184
        %v3186 = vpop.f32.mrb[0].mxu0
        %3187 = vmatprep.mubr.f32.mxu0 %v2973
        %3188 = vmatmul.mubr.f32.gmra.mrb[0].mxu0 %v2972
        %v3189 = vpop.f32.mrb[0].mxu0
        %v3190 = vadd.f32 0.0, %v3189
        %v3191 = vpop.f32.mrb[0].mxu0
        %3192 = vmatprep.mubr.f32.mxu0 %v2976
        %3193 = vmatmul.mubr.f32.gmra.mrb[0].mxu0 %v2975
        %v3194 = vpop.f32.mrb[0].mxu0
        %v3195 = vadd.f32 0.0, %v3194
        %v3196 = vpop.f32.mrb[0].mxu0
        %3197 = vmatprep.mubr.f32.mxu0 %v2979
        %3198 = vmatmul.mubr.f32.gmra.mrb[0].mxu0 %v2978
        %v3199 = vpop.f32.mrb[0].mxu0
        %v3200 = vadd.f32 0.0, %v3199
        %v3201 = vpop.f32.mrb[0].mxu0
        %3202 = vmatprep.mubr.f32.mxu0 %v2982
        %3203 = vmatmul.mubr.f32.gmra.mrb[0].mxu0 %v2981
        %v3204 = vpop.f32.mrb[0].mxu0
        %v3205 = vadd.f32 0.0, %v3204
        %v3206 = vpop.f32.mrb[0].mxu0
        %3207 = vmatprep.mubr.f32.mxu0 %v2985
        %3208 = vmatmul.mubr.f32.gmra.mrb[0].mxu0 %v2984
        %v3209 = vpop.f32.mrb[0].mxu0
        %v3210 = vadd.f32 0.0, %v3209
        %v3211 = vpop.f32.mrb[0].mxu0
        %3212 = vmatprep.mubr.f32.mxu0 %v2988
        %3213 = vmatmul.mubr.f32.gmra.mrb[0].mxu0 %v2987
        %v3214 = vpop.f32.mrb[0].mxu0
        %v3215 = vadd.f32 0.0, %v3214
        %v3216 = vpop.f32.mrb[0].mxu0
        %3217 = vmatprep.mubr.f32.mxu0 %v2991
        %3218 = vmatmul.mubr.f32.gmra.mrb[0].mxu0 %v2990
        %v3219 = vpop.f32.mrb[0].mxu0
        %v3220 = vadd.f32 0.0, %v3219
        %v3221 = vpop.f32.mrb[0].mxu0
        %3222 = vmatprep.mubr.f32.mxu0 %v2994
        %3223 = vmatmul.mubr.f32.gmra.mrb[0].mxu0 %v2993
        %v3224 = vpop.f32.mrb[0].mxu0
        %v3225 = vadd.f32 0.0, %v3224
        %v3226 = vpop.f32.mrb[0].mxu0
        %3227 = vmatprep.mubr.f32.mxu0 %v2997
        %3228 = vmatmul.mubr.f32.gmra.mrb[0].mxu0 %v2996
        %v3229 = vpop.f32.mrb[0].mxu0
        %v3230 = vadd.f32 0.0, %v3229
        %v3231 = vpop.f32.mrb[0].mxu0
        %3232 = vmatprep.mubr.f32.mxu0 %v3000
        %3233 = vmatmul.mubr.f32.gmra.mrb[0].mxu0 %v2999
        %v3234 = vpop.f32.mrb[0].mxu0
        %v3235 = vadd.f32 0.0, %v3234
        %v3236 = vpop.f32.mrb[0].mxu0
        %3237 = vmatprep.mubr.f32.mxu0 %v3003
        %3238 = vmatmul.mubr.f32.gmra.mrb[0].mxu0 %v3002
        %v3239 = vpop.f32.mrb[0].mxu0
        %v3240 = vadd.f32 0.0, %v3239
        %v3241 = vpop.f32.mrb[0].mxu0
        %3242 = vmatprep.mubr.f32.mxu0 %v3054
        %3243 = vmatmul.mubr.f32.gmra.mrb[0].mxu0 %v3053
        %v3244 = vpop.f32.mrb[0].mxu0
        %v3245 = vadd.f32 0.0, %v3244
        %v3246 = vpop.f32.mrb[0].mxu0
        %3247 = vmatprep.mubr.f32.mxu0 %v3057
        %3248 = vmatmul.mubr.f32.gmra.mrb[0].mxu0 %v3056
        %v3249 = vpop.f32.mrb[0].mxu0
        %v3250 = vadd.f32 0.0, %v3249
        %v3251 = vpop.f32.mrb[0].mxu0
        %3252 = vdwg.mxu0
        %3253 = vmatprep.subr.mxu0 0.0
        %3254 = vmatpush1.msra.mxu0 %v3092
        %3255 = vmatprep.subr.mxu0 0.0
        %3256 = vmatpush1.msra.mxu0 %v3093
        %3257 = vmatprep.subr.mxu0 0.0
        %3258 = vmatpush1.msra.mxu0 %v3094
        %3259 = vmatprep.subr.mxu0 0.0
        %3260 = vmatpush1.msra.mxu0 %v3095
        %3261 = vmatprep.subr.mxu0 0.0
        %3262 = vmatpush1.msra.mxu0 %v3096
        %3263 = vmatprep.subr.mxu0 0.0
        %3264 = vmatpush1.msra.mxu0 %v3097
        %3265 = vmatprep.subr.mxu0 0.0
        %3266 = vmatpush1.msra.mxu0 %v3098
        %3267 = vmatprep.subr.mxu0 0.0
        %3268 = vmatpush1.msra.mxu0 %v3099
        %3269 = vmatprep.subr.mxu0 0.0
        %3270 = vmatpush1.msra.mxu0 %v3100
        %3271 = vmatprep.subr.mxu0 0.0
        %3272 = vmatpush1.msra.mxu0 %v3101
        %3273 = vmatprep.subr.mxu0 0.0
        %3274 = vmatpush1.msra.mxu0 %v3102
        %3275 = vmatprep.subr.mxu0 0.0
        %3276 = vmatpush1.msra.mxu0 %v3103
        %3277 = vmatprep.subr.mxu0 0.0
        %3278 = vmatpush1.msra.mxu0 %v3104
        %3279 = vmatprep.subr.mxu0 0.0
        %3280 = vmatpush1.msra.mxu0 %v3105
        %3281 = vmatprep.subr.mxu0 0.0
        %3282 = vmatpush1.msra.mxu0 %v3106
        %3283 = vmatprep.subr.mxu0 0.0
        %3284 = vmatpush1.msra.mxu0 %v3107
        %3285 = vmatprep.subr.mxu0 0.0
        %3286 = vmatpush1.msra.mxu0 0.0
        %3287 = vmatprep.subr.mxu0 0.0
        %3288 = vmatpush1.msra.mxu0 0.0
        %3289 = vmatprep.subr.mxu0 0.0
        %3290 = vmatpush1.msra.mxu0 0.0
        %3291 = vmatprep.subr.mxu0 0.0
        %3292 = vmatpush1.msra.mxu0 0.0
        %3293 = vmatprep.subr.mxu0 0.0
        %3294 = vmatpush1.msra.mxu0 0.0
        %3295 = vmatprep.subr.mxu0 0.0
        %3296 = vmatpush1.msra.mxu0 0.0
        %3297 = vmatprep.subr.mxu0 0.0
        %3298 = vmatpush1.msra.mxu0 0.0
        %3299 = vmatprep.subr.mxu0 0.0
        %3300 = vmatpush1.msra.mxu0 0.0
        %3301 = vmatprep.subr.mxu0 0.0
        %3302 = vmatpush1.msra.mxu0 0.0
        %3303 = vmatprep.subr.mxu0 0.0
        %3304 = vmatpush1.msra.mxu0 0.0
        %3305 = vmatprep.subr.mxu0 0.0
        %3306 = vmatpush1.msra.mxu0 0.0
        %3307 = vmatprep.subr.mxu0 0.0
        %3308 = vmatpush1.msra.mxu0 0.0
        %3309 = vmatprep.subr.mxu0 0.0
        %3310 = vmatpush1.msra.mxu0 0.0
        %3311 = vmatprep.subr.mxu0 0.0
        %3312 = vmatpush1.msra.mxu0 0.0
        %3313 = vmatprep.subr.mxu0 0.0
        %3314 = vmatpush1.msra.mxu0 0.0
        %3315 = vmatprep.subr.mxu0 0.0
        %3316 = vmatpush1.msra.mxu0 0.0
        %3317 = vmatprep.mubr.f32.mxu0 0.0
        %3318 = vmatmul.mubr.f32.gmra.mrb[0].mxu0 %v2965
        %v3319 = vpop.f32.mrb[0].mxu0
        %v3320 = vadd.f32 %v3175, %v3319
        %v3321 = vpop.f32.mrb[0].mxu0
        %3322 = vmatprep.mubr.f32.mxu0 0.0
        %3323 = vmatmul.mubr.f32.gmra.mrb[0].mxu0 %v2968
        %v3324 = vpop.f32.mrb[0].mxu0
        %v3325 = vadd.f32 %v3180, %v3324
        %v3326 = vpop.f32.mrb[0].mxu0
        %3327 = vmatprep.mubr.f32.mxu0 0.0
        %3328 = vmatmul.mubr.f32.gmra.mrb[0].mxu0 %v2971
        %v3329 = vpop.f32.mrb[0].mxu0
        %v3330 = vadd.f32 %v3185, %v3329
        %v3331 = vpop.f32.mrb[0].mxu0
        %3332 = vmatprep.mubr.f32.mxu0 0.0
        %3333 = vmatmul.mubr.f32.gmra.mrb[0].mxu0 %v2974
        %v3334 = vpop.f32.mrb[0].mxu0
        %v3335 = vadd.f32 %v3190, %v3334
        %v3336 = vpop.f32.mrb[0].mxu0
        %3337 = vmatprep.mubr.f32.mxu0 0.0
        %3338 = vmatmul.mubr.f32.gmra.mrb[0].mxu0 %v2977
        %v3339 = vpop.f32.mrb[0].mxu0
        %v3340 = vadd.f32 %v3195, %v3339
        %v3341 = vpop.f32.mrb[0].mxu0
        %3342 = vmatprep.mubr.f32.mxu0 0.0
        %3343 = vmatmul.mubr.f32.gmra.mrb[0].mxu0 %v2980
        %v3344 = vpop.f32.mrb[0].mxu0
        %v3345 = vadd.f32 %v3200, %v3344
        %v3346 = vpop.f32.mrb[0].mxu0
        %3347 = vmatprep.mubr.f32.mxu0 0.0
        %3348 = vmatmul.mubr.f32.gmra.mrb[0].mxu0 %v2983
        %v3349 = vpop.f32.mrb[0].mxu0
        %v3350 = vadd.f32 %v3205, %v3349
        %v3351 = vpop.f32.mrb[0].mxu0
        %3352 = vmatprep.mubr.f32.mxu0 0.0
        %3353 = vmatmul.mubr.f32.gmra.mrb[0].mxu0 %v2986
        %v3354 = vpop.f32.mrb[0].mxu0
        %v3355 = vadd.f32 %v3210, %v3354
        %v3356 = vpop.f32.mrb[0].mxu0
        %3357 = vmatprep.mubr.f32.mxu0 0.0
        %3358 = vmatmul.mubr.f32.gmra.mrb[0].mxu0 %v2989
        %v3359 = vpop.f32.mrb[0].mxu0
        %v3360 = vadd.f32 %v3215, %v3359
        %v3361 = vpop.f32.mrb[0].mxu0
        %3362 = vmatprep.mubr.f32.mxu0 0.0
        %3363 = vmatmul.mubr.f32.gmra.mrb[0].mxu0 %v2992
        %v3364 = vpop.f32.mrb[0].mxu0
        %v3365 = vadd.f32 %v3220, %v3364
        %v3366 = vpop.f32.mrb[0].mxu0
        %3367 = vmatprep.mubr.f32.mxu0 0.0
        %3368 = vmatmul.mubr.f32.gmra.mrb[0].mxu0 %v2995
        %v3369 = vpop.f32.mrb[0].mxu0
        %v3370 = vadd.f32 %v3225, %v3369
        %v3371 = vpop.f32.mrb[0].mxu0
        %3372 = vmatprep.mubr.f32.mxu0 0.0
        %3373 = vmatmul.mubr.f32.gmra.mrb[0].mxu0 %v2998
        %v3374 = vpop.f32.mrb[0].mxu0
        %v3375 = vadd.f32 %v3230, %v3374
        %v3376 = vpop.f32.mrb[0].mxu0
        %3377 = vmatprep.mubr.f32.mxu0 0.0
        %3378 = vmatmul.mubr.f32.gmra.mrb[0].mxu0 %v3001
        %v3379 = vpop.f32.mrb[0].mxu0
        %v3380 = vadd.f32 %v3235, %v3379
        %v3381 = vpop.f32.mrb[0].mxu0
        %3382 = vmatprep.mubr.f32.mxu0 0.0
        %3383 = vmatmul.mubr.f32.gmra.mrb[0].mxu0 %v3004
        %v3384 = vpop.f32.mrb[0].mxu0
        %v3385 = vadd.f32 %v3240, %v3384
        %v3386 = vpop.f32.mrb[0].mxu0
        %3387 = vmatprep.mubr.f32.mxu0 0.0
        %3388 = vmatmul.mubr.f32.gmra.mrb[0].mxu0 %v3055
        %v3389 = vpop.f32.mrb[0].mxu0
        %v3390 = vadd.f32 %v3245, %v3389
        %v3391 = vpop.f32.mrb[0].mxu0
        %3392 = vmatprep.mubr.f32.mxu0 0.0
        %3393 = vmatmul.mubr.f32.gmra.mrb[0].mxu0 %v3058
        %v3394 = vpop.f32.mrb[0].mxu0
        %v3395 = vadd.f32 %v3250, %v3394
        %v3396 = vpop.f32.mrb[0].mxu0
        %3397 = vdwg.mxu0
        %3398 = vmatprep.subr.mxu0 0.0
        %3399 = vmatpush1.msra.mxu0 %v3005
        %3400 = vmatprep.subr.mxu0 0.0
        %3401 = vmatpush1.msra.mxu0 %v3006
        %3402 = vmatprep.subr.mxu0 0.0
        %3403 = vmatpush1.msra.mxu0 %v3007
        %3404 = vmatprep.subr.mxu0 0.0
        %3405 = vmatpush1.msra.mxu0 %v3008
        %3406 = vmatprep.subr.mxu0 0.0
        %3407 = vmatpush1.msra.mxu0 %v3009
        %3408 = vmatprep.subr.mxu0 0.0
        %3409 = vmatpush1.msra.mxu0 %v3010
        %3410 = vmatprep.subr.mxu0 0.0
        %3411 = vmatpush1.msra.mxu0 %v3011
        %3412 = vmatprep.subr.mxu0 0.0
        %3413 = vmatpush1.msra.mxu0 %v3012
        %3414 = vmatprep.subr.mxu0 0.0
        %3415 = vmatpush1.msra.mxu0 %v3013
        %3416 = vmatprep.subr.mxu0 0.0
        %3417 = vmatpush1.msra.mxu0 %v3014
        %3418 = vmatprep.subr.mxu0 0.0
        %3419 = vmatpush1.msra.mxu0 %v3015
        %3420 = vmatprep.subr.mxu0 0.0
        %3421 = vmatpush1.msra.mxu0 %v3016
        %3422 = vmatprep.subr.mxu0 0.0
        %3423 = vmatpush1.msra.mxu0 %v3017
        %3424 = vmatprep.subr.mxu0 0.0
        %3425 = vmatpush1.msra.mxu0 %v3018
        %3426 = vmatprep.subr.mxu0 0.0
        %3427 = vmatpush1.msra.mxu0 %v3019
        %3428 = vmatprep.subr.mxu0 0.0
        %3429 = vmatpush1.msra.mxu0 %v3020
        %3430 = vmatprep.subr.mxu0 0.0
        %3431 = vmatpush1.msra.mxu0 %v3021
        %3432 = vmatprep.subr.mxu0 0.0
        %3433 = vmatpush1.msra.mxu0 %v3022
        %3434 = vmatprep.subr.mxu0 0.0
        %3435 = vmatpush1.msra.mxu0 %v3023
        %3436 = vmatprep.subr.mxu0 0.0
        %3437 = vmatpush1.msra.mxu0 %v3024
        %3438 = vmatprep.subr.mxu0 0.0
        %3439 = vmatpush1.msra.mxu0 %v3025
        %3440 = vmatprep.subr.mxu0 0.0
        %3441 = vmatpush1.msra.mxu0 %v3026
        %3442 = vmatprep.subr.mxu0 0.0
        %3443 = vmatpush1.msra.mxu0 %v3027
        %3444 = vmatprep.subr.mxu0 0.0
        %3445 = vmatpush1.msra.mxu0 %v3028
        %3446 = vmatprep.subr.mxu0 0.0
        %3447 = vmatpush1.msra.mxu0 %v3029
        %3448 = vmatprep.subr.mxu0 0.0
        %3449 = vmatpush1.msra.mxu0 %v3030
        %3450 = vmatprep.subr.mxu0 0.0
        %3451 = vmatpush1.msra.mxu0 %v3031
        %3452 = vmatprep.subr.mxu0 0.0
        %3453 = vmatpush1.msra.mxu0 %v3032
        %3454 = vmatprep.subr.mxu0 0.0
        %3455 = vmatpush1.msra.mxu0 %v3033
        %3456 = vmatprep.subr.mxu0 0.0
        %3457 = vmatpush1.msra.mxu0 %v3034
        %3458 = vmatprep.subr.mxu0 0.0
        %3459 = vmatpush1.msra.mxu0 %v3035
        %3460 = vmatprep.subr.mxu0 0.0
        %3461 = vmatpush1.msra.mxu0 %v3036
        %3462 = vmatprep.mubr.f32.mxu0 %v2958
        %3463 = vmatmul.mubr.f32.gmra.mrb[0].mxu0 %v2957
        %v3464 = vpop.f32.mrb[0].mxu0
        %v3465 = vadd.f32 %v3320, %v3464
        %v3466 = vpop.f32.mrb[0].mxu0
        %3467 = vmatprep.mubr.f32.mxu0 %v2961
        %3468 = vmatmul.mubr.f32.gmra.mrb[0].mxu0 %v2960
        %v3469 = vpop.f32.mrb[0].mxu0
        %v3470 = vadd.f32 %v3325, %v3469
        %v3471 = vpop.f32.mrb[0].mxu0
        %3472 = vmatprep.mubr.f32.mxu0 %v2964
        %3473 = vmatmul.mubr.f32.gmra.mrb[0].mxu0 %v2963
        %v3474 = vpop.f32.mrb[0].mxu0
        %v3475 = vadd.f32 %v3330, %v3474
        %v3476 = vpop.f32.mrb[0].mxu0
        %3477 = vmatprep.mubr.f32.mxu0 %v2967
        %3478 = vmatmul.mubr.f32.gmra.mrb[0].mxu0 %v2966
        %v3479 = vpop.f32.mrb[0].mxu0
        %v3480 = vadd.f32 %v3335, %v3479
        %v3481 = vpop.f32.mrb[0].mxu0
        %3482 = vmatprep.mubr.f32.mxu0 %v2970
        %3483 = vmatmul.mubr.f32.gmra.mrb[0].mxu0 %v2969
        %v3484 = vpop.f32.mrb[0].mxu0
        %v3485 = vadd.f32 %v3340, %v3484
        %v3486 = vpop.f32.mrb[0].mxu0
        %3487 = vmatprep.mubr.f32.mxu0 %v2973
        %3488 = vmatmul.mubr.f32.gmra.mrb[0].mxu0 %v2972
        %v3489 = vpop.f32.mrb[0].mxu0
        %v3490 = vadd.f32 %v3345, %v3489
        %v3491 = vpop.f32.mrb[0].mxu0
        %3492 = vmatprep.mubr.f32.mxu0 %v2976
        %3493 = vmatmul.mubr.f32.gmra.mrb[0].mxu0 %v2975
        %v3494 = vpop.f32.mrb[0].mxu0
        %v3495 = vadd.f32 %v3350, %v3494
        %v3496 = vpop.f32.mrb[0].mxu0
        %3497 = vmatprep.mubr.f32.mxu0 %v2979
        %3498 = vmatmul.mubr.f32.gmra.mrb[0].mxu0 %v2978
        %v3499 = vpop.f32.mrb[0].mxu0
        %v3500 = vadd.f32 %v3355, %v3499
        %v3501 = vpop.f32.mrb[0].mxu0
        %3502 = vmatprep.mubr.f32.mxu0 %v2982
        %3503 = vmatmul.mubr.f32.gmra.mrb[0].mxu0 %v2981
        %v3504 = vpop.f32.mrb[0].mxu0
        %v3505 = vadd.f32 %v3360, %v3504
        %v3506 = vpop.f32.mrb[0].mxu0
        %3507 = vmatprep.mubr.f32.mxu0 %v2985
        %3508 = vmatmul.mubr.f32.gmra.mrb[0].mxu0 %v2984
        %v3509 = vpop.f32.mrb[0].mxu0
        %v3510 = vadd.f32 %v3365, %v3509
        %v3511 = vpop.f32.mrb[0].mxu0
        %3512 = vmatprep.mubr.f32.mxu0 %v2988
        %3513 = vmatmul.mubr.f32.gmra.mrb[0].mxu0 %v2987
        %v3514 = vpop.f32.mrb[0].mxu0
        %v3515 = vadd.f32 %v3370, %v3514
        %v3516 = vpop.f32.mrb[0].mxu0
        %3517 = vmatprep.mubr.f32.mxu0 %v2991
        %3518 = vmatmul.mubr.f32.gmra.mrb[0].mxu0 %v2990
        %v3519 = vpop.f32.mrb[0].mxu0
        %v3520 = vadd.f32 %v3375, %v3519
        %v3521 = vpop.f32.mrb[0].mxu0
        %3522 = vmatprep.mubr.f32.mxu0 %v2994
        %3523 = vmatmul.mubr.f32.gmra.mrb[0].mxu0 %v2993
        %v3524 = vpop.f32.mrb[0].mxu0
        %v3525 = vadd.f32 %v3380, %v3524
        %v3526 = vpop.f32.mrb[0].mxu0
        %3527 = vmatprep.mubr.f32.mxu0 %v2997
        %3528 = vmatmul.mubr.f32.gmra.mrb[0].mxu0 %v2996
        %v3529 = vpop.f32.mrb[0].mxu0
        %v3530 = vadd.f32 %v3385, %v3529
        %v3531 = vpop.f32.mrb[0].mxu0
        %3532 = vmatprep.mubr.f32.mxu0 %v3000
        %3533 = vmatmul.mubr.f32.gmra.mrb[0].mxu0 %v2999
        %v3534 = vpop.f32.mrb[0].mxu0
        %v3535 = vadd.f32 %v3390, %v3534
        %v3536 = vpop.f32.mrb[0].mxu0
        %3537 = vmatprep.mubr.f32.mxu0 %v3003
        %3538 = vmatmul.mubr.f32.gmra.mrb[0].mxu0 %v3002
        %v3539 = vpop.f32.mrb[0].mxu0
        %v3540 = vadd.f32 %v3395, %v3539
        %v3541 = vpop.f32.mrb[0].mxu0
        %3542 = vdwg.mxu0
        %3543 = vmatprep.subr.mxu0 0.0
        %3544 = vmatpush1.msra.mxu0 %v3037
        %3545 = vmatprep.subr.mxu0 0.0
        %3546 = vmatpush1.msra.mxu0 %v3038
        %3547 = vmatprep.subr.mxu0 0.0
        %3548 = vmatpush1.msra.mxu0 %v3039
        %3549 = vmatprep.subr.mxu0 0.0
        %3550 = vmatpush1.msra.mxu0 %v3040
        %3551 = vmatprep.subr.mxu0 0.0
        %3552 = vmatpush1.msra.mxu0 %v3041
        %3553 = vmatprep.subr.mxu0 0.0
        %3554 = vmatpush1.msra.mxu0 %v3042
        %3555 = vmatprep.subr.mxu0 0.0
        %3556 = vmatpush1.msra.mxu0 %v3043
        %3557 = vmatprep.subr.mxu0 0.0
        %3558 = vmatpush1.msra.mxu0 %v3044
        %3559 = vmatprep.subr.mxu0 0.0
        %3560 = vmatpush1.msra.mxu0 %v3045
        %3561 = vmatprep.subr.mxu0 0.0
        %3562 = vmatpush1.msra.mxu0 %v3046
        %3563 = vmatprep.subr.mxu0 0.0
        %3564 = vmatpush1.msra.mxu0 %v3047
        %3565 = vmatprep.subr.mxu0 0.0
        %3566 = vmatpush1.msra.mxu0 %v3048
        %3567 = vmatprep.subr.mxu0 0.0
        %3568 = vmatpush1.msra.mxu0 %v3049
        %3569 = vmatprep.subr.mxu0 0.0
        %3570 = vmatpush1.msra.mxu0 %v3050
        %3571 = vmatprep.subr.mxu0 0.0
        %3572 = vmatpush1.msra.mxu0 %v3051
        %3573 = vmatprep.subr.mxu0 0.0
        %3574 = vmatpush1.msra.mxu0 %v3052
        %3575 = vmatprep.subr.mxu0 0.0
        %3576 = vmatpush1.msra.mxu0 0.0
        %3577 = vmatprep.subr.mxu0 0.0
        %3578 = vmatpush1.msra.mxu0 0.0
        %3579 = vmatprep.subr.mxu0 0.0
        %3580 = vmatpush1.msra.mxu0 0.0
        %3581 = vmatprep.subr.mxu0 0.0
        %3582 = vmatpush1.msra.mxu0 0.0
        %3583 = vmatprep.subr.mxu0 0.0
        %3584 = vmatpush1.msra.mxu0 0.0
        %3585 = vmatprep.subr.mxu0 0.0
        %3586 = vmatpush1.msra.mxu0 0.0
        %3587 = vmatprep.subr.mxu0 0.0
        %3588 = vmatpush1.msra.mxu0 0.0
        %3589 = vmatprep.subr.mxu0 0.0
        %3590 = vmatpush1.msra.mxu0 0.0
        %3591 = vmatprep.subr.mxu0 0.0
        %3592 = vmatpush1.msra.mxu0 0.0
        %3593 = vmatprep.subr.mxu0 0.0
        %3594 = vmatpush1.msra.mxu0 0.0
        %3595 = vmatprep.subr.mxu0 0.0
        %3596 = vmatpush1.msra.mxu0 0.0
        %3597 = vmatprep.subr.mxu0 0.0
        %3598 = vmatpush1.msra.mxu0 0.0
        %3599 = vmatprep.subr.mxu0 0.0
        %3600 = vmatpush1.msra.mxu0 0.0
        %3601 = vmatprep.subr.mxu0 0.0
        %3602 = vmatpush1.msra.mxu0 0.0
        %3603 = vmatprep.subr.mxu0 0.0
        %3604 = vmatpush1.msra.mxu0 0.0
        %3605 = vmatprep.subr.mxu0 0.0
        %3606 = vmatpush1.msra.mxu0 0.0
        %3607 = vmatprep.mubr.f32.mxu0 0.0
        %3608 = vmatmul.mubr.f32.gmra.mrb[0].mxu0 %v2959
        %v3609 = vpop.f32.mrb[0].mxu0
        %v3610 = vadd.f32 %v3465, %v3609
        %v3611 = vpop.f32.mrb[0].mxu0
        %3612 = vmatprep.mubr.f32.mxu0 0.0
        %3613 = vmatmul.mubr.f32.gmra.mrb[0].mxu0 %v2962
        %v3614 = vpop.f32.mrb[0].mxu0
        %v3615 = vadd.f32 %v3470, %v3614
        %v3616 = vpop.f32.mrb[0].mxu0
        %3617 = vmatprep.mubr.f32.mxu0 0.0
        %3618 = vmatmul.mubr.f32.gmra.mrb[0].mxu0 %v2965
        %v3619 = vpop.f32.mrb[0].mxu0
        %v3620 = vadd.f32 %v3475, %v3619
        %v3621 = vpop.f32.mrb[0].mxu0
        %3622 = vmatprep.mubr.f32.mxu0 0.0
        %3623 = vmatmul.mubr.f32.gmra.mrb[0].mxu0 %v2968
        %v3624 = vpop.f32.mrb[0].mxu0
        %v3625 = vadd.f32 %v3480, %v3624
        %v3626 = vpop.f32.mrb[0].mxu0
        %3627 = vmatprep.mubr.f32.mxu0 0.0
        %3628 = vmatmul.mubr.f32.gmra.mrb[0].mxu0 %v2971
        %v3629 = vpop.f32.mrb[0].mxu0
        %v3630 = vadd.f32 %v3485, %v3629
        %v3631 = vpop.f32.mrb[0].mxu0
        %3632 = vmatprep.mubr.f32.mxu0 0.0
        %3633 = vmatmul.mubr.f32.gmra.mrb[0].mxu0 %v2974
        %v3634 = vpop.f32.mrb[0].mxu0
        %v3635 = vadd.f32 %v3490, %v3634
        %v3636 = vpop.f32.mrb[0].mxu0
        %3637 = vmatprep.mubr.f32.mxu0 0.0
        %3638 = vmatmul.mubr.f32.gmra.mrb[0].mxu0 %v2977
        %v3639 = vpop.f32.mrb[0].mxu0
        %v3640 = vadd.f32 %v3495, %v3639
        %v3641 = vpop.f32.mrb[0].mxu0
        %3642 = vmatprep.mubr.f32.mxu0 0.0
        %3643 = vmatmul.mubr.f32.gmra.mrb[0].mxu0 %v2980
        %v3644 = vpop.f32.mrb[0].mxu0
        %v3645 = vadd.f32 %v3500, %v3644
        %v3646 = vpop.f32.mrb[0].mxu0
        %3647 = vmatprep.mubr.f32.mxu0 0.0
        %3648 = vmatmul.mubr.f32.gmra.mrb[0].mxu0 %v2983
        %v3649 = vpop.f32.mrb[0].mxu0
        %v3650 = vadd.f32 %v3505, %v3649
        %v3651 = vpop.f32.mrb[0].mxu0
        %3652 = vmatprep.mubr.f32.mxu0 0.0
        %3653 = vmatmul.mubr.f32.gmra.mrb[0].mxu0 %v2986
        %v3654 = vpop.f32.mrb[0].mxu0
        %v3655 = vadd.f32 %v3510, %v3654
        %v3656 = vpop.f32.mrb[0].mxu0
        %3657 = vmatprep.mubr.f32.mxu0 0.0
        %3658 = vmatmul.mubr.f32.gmra.mrb[0].mxu0 %v2989
        %v3659 = vpop.f32.mrb[0].mxu0
        %v3660 = vadd.f32 %v3515, %v3659
        %v3661 = vpop.f32.mrb[0].mxu0
        %3662 = vmatprep.mubr.f32.mxu0 0.0
        %3663 = vmatmul.mubr.f32.gmra.mrb[0].mxu0 %v2992
        %v3664 = vpop.f32.mrb[0].mxu0
        %v3665 = vadd.f32 %v3520, %v3664
        %v3666 = vpop.f32.mrb[0].mxu0
        %3667 = vmatprep.mubr.f32.mxu0 0.0
        %3668 = vmatmul.mubr.f32.gmra.mrb[0].mxu0 %v2995
        %v3669 = vpop.f32.mrb[0].mxu0
        %v3670 = vadd.f32 %v3525, %v3669
        %v3671 = vpop.f32.mrb[0].mxu0
        %3672 = vmatprep.mubr.f32.mxu0 0.0
        %3673 = vmatmul.mubr.f32.gmra.mrb[0].mxu0 %v2998
        %v3674 = vpop.f32.mrb[0].mxu0
        %v3675 = vadd.f32 %v3530, %v3674
        %v3676 = vpop.f32.mrb[0].mxu0
        %3677 = vmatprep.mubr.f32.mxu0 0.0
        %3678 = vmatmul.mubr.f32.gmra.mrb[0].mxu0 %v3001
        %v3679 = vpop.f32.mrb[0].mxu0
        %v3680 = vadd.f32 %v3535, %v3679
        %v3681 = vpop.f32.mrb[0].mxu0
        %3682 = vmatprep.mubr.f32.mxu0 0.0
        %3683 = vmatmul.mubr.f32.gmra.mrb[0].mxu0 %v3004
        %v3684 = vpop.f32.mrb[0].mxu0
        %v3685 = vadd.f32 %v3540, %v3684
        %v3686 = vpop.f32.mrb[0].mxu0
        %3687 = vdwg.mxu0
        %v3688 = vld [vmem:[#allocation4 + $0x60] sm:$0xff]
        %v3689 = vld [vmem:[#allocation4 + $0x68] sm:$0xff]
        %v3690 = vld [vmem:[#allocation4 + $0x70] sm:$0xff]
        %v3691 = vld [vmem:[#allocation4 + $0x78] sm:$0xff]
        %v3692 = vld [vmem:[#allocation4 + $0x80] sm:$0xff]
        %v3693 = vld [vmem:[#allocation4 + $0x88] sm:$0xff]
        %v3694 = vld [vmem:[#allocation4 + $0x90] sm:$0xff]
        %v3695 = vld [vmem:[#allocation4 + $0x98] sm:$0xff]
        %v3696 = vld [vmem:[#allocation4 + $0xa0] sm:$0xff]
        %v3697 = vld [vmem:[#allocation4 + $0xa8] sm:$0xff]
        %v3698 = vld [vmem:[#allocation4 + $0xb0] sm:$0xff]
        %v3699 = vld [vmem:[#allocation4 + $0xb8] sm:$0xff]
        %v3700 = vld [vmem:[#allocation4 + $0xc0] sm:$0xff]
        %v3701 = vld [vmem:[#allocation4 + $0xc8] sm:$0xff]
        %v3702 = vld [vmem:[#allocation4 + $0xd0] sm:$0xff]
        %v3703 = vld [vmem:[#allocation4 + $0xd8] sm:$0xff]
        %v3704 = vld [vmem:[#allocation4 + $0xe0] sm:$0xff]
        %v3705 = vld [vmem:[#allocation4 + $0xe8] sm:$0xff]
        %v3706 = vld [vmem:[#allocation4 + $0xf0] sm:$0xff]
        %v3707 = vld [vmem:[#allocation4 + $0xf8] sm:$0xff]
        %v3708 = vld [vmem:[#allocation4 + $0x100] sm:$0xff]
        %v3709 = vld [vmem:[#allocation4 + $0x108] sm:$0xff]
        %v3710 = vld [vmem:[#allocation4 + $0x110] sm:$0xff]
        %v3711 = vld [vmem:[#allocation4 + $0x118] sm:$0xff]
        %v3712 = vld [vmem:[#allocation4 + $0x120] sm:$0xff]
        %v3713 = vld [vmem:[#allocation4 + $0x128] sm:$0xff]
        %v3714 = vld [vmem:[#allocation4 + $0x130] sm:$0xff]
        %v3715 = vld [vmem:[#allocation4 + $0x138] sm:$0xff]
        %v3716 = vld [vmem:[#allocation4 + $0x140] sm:$0xff]
        %v3717 = vld [vmem:[#allocation4 + $0x148] sm:$0xff]
        %v3718 = vld [vmem:[#allocation4 + $0x150] sm:$0xff]
        %v3719 = vld [vmem:[#allocation4 + $0x158] sm:$0xff]
        %v3720 = vld [vmem:[#allocation4 + $0x160] sm:$0xff]
        %v3721 = vld [vmem:[#allocation4 + $0x168] sm:$0xff]
        %v3722 = vld [vmem:[#allocation4 + $0x170] sm:$0xff]
        %v3723 = vld [vmem:[#allocation4 + $0x178] sm:$0xff]
        %v3724 = vld [vmem:[#allocation4 + $0x180] sm:$0xff]
        %v3725 = vld [vmem:[#allocation4 + $0x188] sm:$0xff]
        %v3726 = vld [vmem:[#allocation4 + $0x190] sm:$0xff]
        %v3727 = vld [vmem:[#allocation4 + $0x198] sm:$0xff]
        %v3728 = vld [vmem:[#allocation4 + $0x1a0] sm:$0xff]
        %v3729 = vld [vmem:[#allocation4 + $0x1a8] sm:$0xff]
        %v3730 = vld [vmem:[#allocation4 + $0x1b0] sm:$0xff]
        %v3731 = vld [vmem:[#allocation4 + $0x1b8] sm:$0xff]
        %v3732 = vld [vmem:[#allocation4 + $0x1c0] sm:$0xff]
        %v3733 = vld [vmem:[#allocation4 + $0x1c8] sm:$0xff]
        %v3734 = vld [vmem:[#allocation4 + $0x1d0] sm:$0xff]
        %v3735 = vld [vmem:[#allocation4 + $0x1d8] sm:$0xff]
        %s3736 = scalar_lea.vmem %s3, 768
        %v3737 = vld [vmem:[%s3736] sm:$0xff]
        %v3738 = vld [vmem:[%s3736 + $0x8] sm:$0xff]
        %v3739 = vld [vmem:[%s3736 + $0x10] sm:$0xff]
        %v3740 = vld [vmem:[%s3736 + $0x18] sm:$0xff]
        %v3741 = vld [vmem:[%s3736 + $0x20] sm:$0xff]
        %v3742 = vld [vmem:[%s3736 + $0x28] sm:$0xff]
        %v3743 = vld [vmem:[%s3736 + $0x30] sm:$0xff]
        %v3744 = vld [vmem:[%s3736 + $0x38] sm:$0xff]
        %v3745 = vld [vmem:[%s3736 + $0x40] sm:$0xff]
        %v3746 = vld [vmem:[%s3736 + $0x48] sm:$0xff]
        %v3747 = vld [vmem:[%s3736 + $0x50] sm:$0xff]
        %v3748 = vld [vmem:[%s3736 + $0x58] sm:$0xff]
        %v3749 = vld [vmem:[%s3736 + $0x60] sm:$0xff]
        %v3750 = vld [vmem:[%s3736 + $0x68] sm:$0xff]
        %v3751 = vld [vmem:[%s3736 + $0x70] sm:$0xff]
        %v3752 = vld [vmem:[%s3736 + $0x78] sm:$0xff]
        %v3753 = vld [vmem:[%s3736 + $0x80] sm:$0xff]
        %v3754 = vld [vmem:[%s3736 + $0x88] sm:$0xff]
        %v3755 = vld [vmem:[%s3736 + $0x90] sm:$0xff]
        %v3756 = vld [vmem:[%s3736 + $0x98] sm:$0xff]
        %v3757 = vld [vmem:[%s3736 + $0xa0] sm:$0xff]
        %v3758 = vld [vmem:[%s3736 + $0xa8] sm:$0xff]
        %v3759 = vld [vmem:[%s3736 + $0xb0] sm:$0xff]
        %v3760 = vld [vmem:[%s3736 + $0xb8] sm:$0xff]
        %v3761 = vld [vmem:[%s3736 + $0xc0] sm:$0xff]
        %v3762 = vld [vmem:[%s3736 + $0xc8] sm:$0xff]
        %v3763 = vld [vmem:[%s3736 + $0xd0] sm:$0xff]
        %v3764 = vld [vmem:[%s3736 + $0xd8] sm:$0xff]
        %v3765 = vld [vmem:[%s3736 + $0xe0] sm:$0xff]
        %v3766 = vld [vmem:[%s3736 + $0xe8] sm:$0xff]
        %v3767 = vld [vmem:[%s3736 + $0xf0] sm:$0xff]
        %v3768 = vld [vmem:[%s3736 + $0xf8] sm:$0xff]
        %v3769 = vld [vmem:[%s3736 + $0x100] sm:$0xff]
        %v3770 = vld [vmem:[%s3736 + $0x108] sm:$0xff]
        %v3771 = vld [vmem:[%s3736 + $0x110] sm:$0xff]
        %v3772 = vld [vmem:[%s3736 + $0x118] sm:$0xff]
        %v3773 = vld [vmem:[%s3736 + $0x120] sm:$0xff]
        %v3774 = vld [vmem:[%s3736 + $0x128] sm:$0xff]
        %v3775 = vld [vmem:[%s3736 + $0x130] sm:$0xff]
        %v3776 = vld [vmem:[%s3736 + $0x138] sm:$0xff]
        %v3777 = vld [vmem:[%s3736 + $0x140] sm:$0xff]
        %v3778 = vld [vmem:[%s3736 + $0x148] sm:$0xff]
        %v3779 = vld [vmem:[%s3736 + $0x150] sm:$0xff]
        %v3780 = vld [vmem:[%s3736 + $0x158] sm:$0xff]
        %v3781 = vld [vmem:[%s3736 + $0x160] sm:$0xff]
        %v3782 = vld [vmem:[%s3736 + $0x168] sm:$0xff]
        %v3783 = vld [vmem:[%s3736 + $0x170] sm:$0xff]
        %v3784 = vld [vmem:[%s3736 + $0x178] sm:$0xff]
        %3785 = vmatprep.subr.mxu0 0.0
        %3786 = vmatpush1.msra.mxu0 %v3737
        %3787 = vmatprep.subr.mxu0 0.0
        %3788 = vmatpush1.msra.mxu0 %v3738
        %3789 = vmatprep.subr.mxu0 0.0
        %3790 = vmatpush1.msra.mxu0 %v3739
        %3791 = vmatprep.subr.mxu0 0.0
        %3792 = vmatpush1.msra.mxu0 %v3740
        %3793 = vmatprep.subr.mxu0 0.0
        %3794 = vmatpush1.msra.mxu0 %v3741
        %3795 = vmatprep.subr.mxu0 0.0
        %3796 = vmatpush1.msra.mxu0 %v3742
        %3797 = vmatprep.subr.mxu0 0.0
        %3798 = vmatpush1.msra.mxu0 %v3743
        %3799 = vmatprep.subr.mxu0 0.0
        %3800 = vmatpush1.msra.mxu0 %v3744
        %3801 = vmatprep.subr.mxu0 0.0
        %3802 = vmatpush1.msra.mxu0 %v3745
        %3803 = vmatprep.subr.mxu0 0.0
        %3804 = vmatpush1.msra.mxu0 %v3746
        %3805 = vmatprep.subr.mxu0 0.0
        %3806 = vmatpush1.msra.mxu0 %v3747
        %3807 = vmatprep.subr.mxu0 0.0
        %3808 = vmatpush1.msra.mxu0 %v3748
        %3809 = vmatprep.subr.mxu0 0.0
        %3810 = vmatpush1.msra.mxu0 %v3749
        %3811 = vmatprep.subr.mxu0 0.0
        %3812 = vmatpush1.msra.mxu0 %v3750
        %3813 = vmatprep.subr.mxu0 0.0
        %3814 = vmatpush1.msra.mxu0 %v3751
        %3815 = vmatprep.subr.mxu0 0.0
        %3816 = vmatpush1.msra.mxu0 %v3752
        %3817 = vmatprep.subr.mxu0 0.0
        %3818 = vmatpush1.msra.mxu0 %v3753
        %3819 = vmatprep.subr.mxu0 0.0
        %3820 = vmatpush1.msra.mxu0 %v3754
        %3821 = vmatprep.subr.mxu0 0.0
        %3822 = vmatpush1.msra.mxu0 %v3755
        %3823 = vmatprep.subr.mxu0 0.0
        %3824 = vmatpush1.msra.mxu0 %v3756
        %3825 = vmatprep.subr.mxu0 0.0
        %3826 = vmatpush1.msra.mxu0 %v3757
        %3827 = vmatprep.subr.mxu0 0.0
        %3828 = vmatpush1.msra.mxu0 %v3758
        %3829 = vmatprep.subr.mxu0 0.0
        %3830 = vmatpush1.msra.mxu0 %v3759
        %3831 = vmatprep.subr.mxu0 0.0
        %3832 = vmatpush1.msra.mxu0 %v3760
        %3833 = vmatprep.subr.mxu0 0.0
        %3834 = vmatpush1.msra.mxu0 %v3761
        %3835 = vmatprep.subr.mxu0 0.0
        %3836 = vmatpush1.msra.mxu0 %v3762
        %3837 = vmatprep.subr.mxu0 0.0
        %3838 = vmatpush1.msra.mxu0 %v3763
        %3839 = vmatprep.subr.mxu0 0.0
        %3840 = vmatpush1.msra.mxu0 %v3764
        %3841 = vmatprep.subr.mxu0 0.0
        %3842 = vmatpush1.msra.mxu0 %v3765
        %3843 = vmatprep.subr.mxu0 0.0
        %3844 = vmatpush1.msra.mxu0 %v3766
        %3845 = vmatprep.subr.mxu0 0.0
        %3846 = vmatpush1.msra.mxu0 %v3767
        %3847 = vmatprep.subr.mxu0 0.0
        %3848 = vmatpush1.msra.mxu0 %v3768
        %3849 = vmatprep.mubr.f32.mxu0 %v3689
        %3850 = vmatmul.mubr.f32.gmra.mrb[0].mxu0 %v3688
        %v3851 = vpop.f32.mrb[0].mxu0
        %v3852 = vadd.f32 0.0, %v3851
        %v3853 = vpop.f32.mrb[0].mxu0
        %3854 = vmatprep.mubr.f32.mxu0 %v3692
        %3855 = vmatmul.mubr.f32.gmra.mrb[0].mxu0 %v3691
        %v3856 = vpop.f32.mrb[0].mxu0
        %v3857 = vadd.f32 0.0, %v3856
        %v3858 = vpop.f32.mrb[0].mxu0
        %3859 = vmatprep.mubr.f32.mxu0 %v3695
        %3860 = vmatmul.mubr.f32.gmra.mrb[0].mxu0 %v3694
        %v3861 = vpop.f32.mrb[0].mxu0
        %v3862 = vadd.f32 0.0, %v3861
        %v3863 = vpop.f32.mrb[0].mxu0
        %3864 = vmatprep.mubr.f32.mxu0 %v3698
        %3865 = vmatmul.mubr.f32.gmra.mrb[0].mxu0 %v3697
        %v3866 = vpop.f32.mrb[0].mxu0
        %v3867 = vadd.f32 0.0, %v3866
        %v3868 = vpop.f32.mrb[0].mxu0
        %3869 = vmatprep.mubr.f32.mxu0 %v3701
        %3870 = vmatmul.mubr.f32.gmra.mrb[0].mxu0 %v3700
        %v3871 = vpop.f32.mrb[0].mxu0
        %v3872 = vadd.f32 0.0, %v3871
        %v3873 = vpop.f32.mrb[0].mxu0
        %3874 = vmatprep.mubr.f32.mxu0 %v3704
        %3875 = vmatmul.mubr.f32.gmra.mrb[0].mxu0 %v3703
        %v3876 = vpop.f32.mrb[0].mxu0
        %v3877 = vadd.f32 0.0, %v3876
        %v3878 = vpop.f32.mrb[0].mxu0
        %3879 = vmatprep.mubr.f32.mxu0 %v3707
        %3880 = vmatmul.mubr.f32.gmra.mrb[0].mxu0 %v3706
        %v3881 = vpop.f32.mrb[0].mxu0
        %v3882 = vadd.f32 0.0, %v3881
        %v3883 = vpop.f32.mrb[0].mxu0
        %3884 = vmatprep.mubr.f32.mxu0 %v3710
        %3885 = vmatmul.mubr.f32.gmra.mrb[0].mxu0 %v3709
        %v3886 = vpop.f32.mrb[0].mxu0
        %v3887 = vadd.f32 0.0, %v3886
        %v3888 = vpop.f32.mrb[0].mxu0
        %3889 = vmatprep.mubr.f32.mxu0 %v3713
        %3890 = vmatmul.mubr.f32.gmra.mrb[0].mxu0 %v3712
        %v3891 = vpop.f32.mrb[0].mxu0
        %v3892 = vadd.f32 0.0, %v3891
        %v3893 = vpop.f32.mrb[0].mxu0
        %3894 = vmatprep.mubr.f32.mxu0 %v3716
        %3895 = vmatmul.mubr.f32.gmra.mrb[0].mxu0 %v3715
        %v3896 = vpop.f32.mrb[0].mxu0
        %v3897 = vadd.f32 0.0, %v3896
        %v3898 = vpop.f32.mrb[0].mxu0
        %3899 = vmatprep.mubr.f32.mxu0 %v3719
        %3900 = vmatmul.mubr.f32.gmra.mrb[0].mxu0 %v3718
        %v3901 = vpop.f32.mrb[0].mxu0
        %v3902 = vadd.f32 0.0, %v3901
        %v3903 = vpop.f32.mrb[0].mxu0
        %3904 = vmatprep.mubr.f32.mxu0 %v3722
        %3905 = vmatmul.mubr.f32.gmra.mrb[0].mxu0 %v3721
        %v3906 = vpop.f32.mrb[0].mxu0
        %v3907 = vadd.f32 0.0, %v3906
        %v3908 = vpop.f32.mrb[0].mxu0
        %3909 = vmatprep.mubr.f32.mxu0 %v3725
        %3910 = vmatmul.mubr.f32.gmra.mrb[0].mxu0 %v3724
        %v3911 = vpop.f32.mrb[0].mxu0
        %v3912 = vadd.f32 0.0, %v3911
        %v3913 = vpop.f32.mrb[0].mxu0
        %3914 = vmatprep.mubr.f32.mxu0 %v3728
        %3915 = vmatmul.mubr.f32.gmra.mrb[0].mxu0 %v3727
        %v3916 = vpop.f32.mrb[0].mxu0
        %v3917 = vadd.f32 0.0, %v3916
        %v3918 = vpop.f32.mrb[0].mxu0
        %3919 = vmatprep.mubr.f32.mxu0 %v3731
        %3920 = vmatmul.mubr.f32.gmra.mrb[0].mxu0 %v3730
        %v3921 = vpop.f32.mrb[0].mxu0
        %v3922 = vadd.f32 0.0, %v3921
        %v3923 = vpop.f32.mrb[0].mxu0
        %3924 = vmatprep.mubr.f32.mxu0 %v3734
        %3925 = vmatmul.mubr.f32.gmra.mrb[0].mxu0 %v3733
        %v3926 = vpop.f32.mrb[0].mxu0
        %v3927 = vadd.f32 0.0, %v3926
        %v3928 = vpop.f32.mrb[0].mxu0
        %3929 = vdwg.mxu0
        %3930 = vmatprep.subr.mxu0 0.0
        %3931 = vmatpush1.msra.mxu0 %v3769
        %3932 = vmatprep.subr.mxu0 0.0
        %3933 = vmatpush1.msra.mxu0 %v3770
        %3934 = vmatprep.subr.mxu0 0.0
        %3935 = vmatpush1.msra.mxu0 %v3771
        %3936 = vmatprep.subr.mxu0 0.0
        %3937 = vmatpush1.msra.mxu0 %v3772
        %3938 = vmatprep.subr.mxu0 0.0
        %3939 = vmatpush1.msra.mxu0 %v3773
        %3940 = vmatprep.subr.mxu0 0.0
        %3941 = vmatpush1.msra.mxu0 %v3774
        %3942 = vmatprep.subr.mxu0 0.0
        %3943 = vmatpush1.msra.mxu0 %v3775
        %3944 = vmatprep.subr.mxu0 0.0
        %3945 = vmatpush1.msra.mxu0 %v3776
        %3946 = vmatprep.subr.mxu0 0.0
        %3947 = vmatpush1.msra.mxu0 %v3777
        %3948 = vmatprep.subr.mxu0 0.0
        %3949 = vmatpush1.msra.mxu0 %v3778
        %3950 = vmatprep.subr.mxu0 0.0
        %3951 = vmatpush1.msra.mxu0 %v3779
        %3952 = vmatprep.subr.mxu0 0.0
        %3953 = vmatpush1.msra.mxu0 %v3780
        %3954 = vmatprep.subr.mxu0 0.0
        %3955 = vmatpush1.msra.mxu0 %v3781
        %3956 = vmatprep.subr.mxu0 0.0
        %3957 = vmatpush1.msra.mxu0 %v3782
        %3958 = vmatprep.subr.mxu0 0.0
        %3959 = vmatpush1.msra.mxu0 %v3783
        %3960 = vmatprep.subr.mxu0 0.0
        %3961 = vmatpush1.msra.mxu0 %v3784
        %3962 = vmatprep.subr.mxu0 0.0
        %3963 = vmatpush1.msra.mxu0 0.0
        %3964 = vmatprep.subr.mxu0 0.0
        %3965 = vmatpush1.msra.mxu0 0.0
        %3966 = vmatprep.subr.mxu0 0.0
        %3967 = vmatpush1.msra.mxu0 0.0
        %3968 = vmatprep.subr.mxu0 0.0
        %3969 = vmatpush1.msra.mxu0 0.0
        %3970 = vmatprep.subr.mxu0 0.0
        %3971 = vmatpush1.msra.mxu0 0.0
        %3972 = vmatprep.subr.mxu0 0.0
        %3973 = vmatpush1.msra.mxu0 0.0
        %3974 = vmatprep.subr.mxu0 0.0
        %3975 = vmatpush1.msra.mxu0 0.0
        %3976 = vmatprep.subr.mxu0 0.0
        %3977 = vmatpush1.msra.mxu0 0.0
        %3978 = vmatprep.subr.mxu0 0.0
        %3979 = vmatpush1.msra.mxu0 0.0
        %3980 = vmatprep.subr.mxu0 0.0
        %3981 = vmatpush1.msra.mxu0 0.0
        %3982 = vmatprep.subr.mxu0 0.0
        %3983 = vmatpush1.msra.mxu0 0.0
        %3984 = vmatprep.subr.mxu0 0.0
        %3985 = vmatpush1.msra.mxu0 0.0
        %3986 = vmatprep.subr.mxu0 0.0
        %3987 = vmatpush1.msra.mxu0 0.0
        %3988 = vmatprep.subr.mxu0 0.0
        %3989 = vmatpush1.msra.mxu0 0.0
        %3990 = vmatprep.subr.mxu0 0.0
        %3991 = vmatpush1.msra.mxu0 0.0
        %3992 = vmatprep.subr.mxu0 0.0
        %3993 = vmatpush1.msra.mxu0 0.0
        %3994 = vmatprep.mubr.f32.mxu0 0.0
        %3995 = vmatmul.mubr.f32.gmra.mrb[0].mxu0 %v3690
        %v3996 = vpop.f32.mrb[0].mxu0
        %v3997 = vadd.f32 %v3852, %v3996
        %v3998 = vpop.f32.mrb[0].mxu0
        %3999 = vmatprep.mubr.f32.mxu0 0.0
        %4000 = vmatmul.mubr.f32.gmra.mrb[0].mxu0 %v3693
        %v4001 = vpop.f32.mrb[0].mxu0
        %v4002 = vadd.f32 %v3857, %v4001
        %v4003 = vpop.f32.mrb[0].mxu0
        %4004 = vmatprep.mubr.f32.mxu0 0.0
        %4005 = vmatmul.mubr.f32.gmra.mrb[0].mxu0 %v3696
        %v4006 = vpop.f32.mrb[0].mxu0
        %v4007 = vadd.f32 %v3862, %v4006
        %v4008 = vpop.f32.mrb[0].mxu0
        %4009 = vmatprep.mubr.f32.mxu0 0.0
        %4010 = vmatmul.mubr.f32.gmra.mrb[0].mxu0 %v3699
        %v4011 = vpop.f32.mrb[0].mxu0
        %v4012 = vadd.f32 %v3867, %v4011
        %v4013 = vpop.f32.mrb[0].mxu0
        %4014 = vmatprep.mubr.f32.mxu0 0.0
        %4015 = vmatmul.mubr.f32.gmra.mrb[0].mxu0 %v3702
        %v4016 = vpop.f32.mrb[0].mxu0
        %v4017 = vadd.f32 %v3872, %v4016
        %v4018 = vpop.f32.mrb[0].mxu0
        %4019 = vmatprep.mubr.f32.mxu0 0.0
        %4020 = vmatmul.mubr.f32.gmra.mrb[0].mxu0 %v3705
        %v4021 = vpop.f32.mrb[0].mxu0
        %v4022 = vadd.f32 %v3877, %v4021
        %v4023 = vpop.f32.mrb[0].mxu0
        %4024 = vmatprep.mubr.f32.mxu0 0.0
        %4025 = vmatmul.mubr.f32.gmra.mrb[0].mxu0 %v3708
        %v4026 = vpop.f32.mrb[0].mxu0
        %v4027 = vadd.f32 %v3882, %v4026
        %v4028 = vpop.f32.mrb[0].mxu0
        %4029 = vmatprep.mubr.f32.mxu0 0.0
        %4030 = vmatmul.mubr.f32.gmra.mrb[0].mxu0 %v3711
        %v4031 = vpop.f32.mrb[0].mxu0
        %v4032 = vadd.f32 %v3887, %v4031
        %v4033 = vpop.f32.mrb[0].mxu0
        %4034 = vmatprep.mubr.f32.mxu0 0.0
        %4035 = vmatmul.mubr.f32.gmra.mrb[0].mxu0 %v3714
        %v4036 = vpop.f32.mrb[0].mxu0
        %v4037 = vadd.f32 %v3892, %v4036
        %v4038 = vpop.f32.mrb[0].mxu0
        %4039 = vmatprep.mubr.f32.mxu0 0.0
        %4040 = vmatmul.mubr.f32.gmra.mrb[0].mxu0 %v3717
        %v4041 = vpop.f32.mrb[0].mxu0
        %v4042 = vadd.f32 %v3897, %v4041
        %v4043 = vpop.f32.mrb[0].mxu0
        %4044 = vmatprep.mubr.f32.mxu0 0.0
        %4045 = vmatmul.mubr.f32.gmra.mrb[0].mxu0 %v3720
        %v4046 = vpop.f32.mrb[0].mxu0
        %v4047 = vadd.f32 %v3902, %v4046
        %v4048 = vpop.f32.mrb[0].mxu0
        %4049 = vmatprep.mubr.f32.mxu0 0.0
        %4050 = vmatmul.mubr.f32.gmra.mrb[0].mxu0 %v3723
        %v4051 = vpop.f32.mrb[0].mxu0
        %v4052 = vadd.f32 %v3907, %v4051
        %v4053 = vpop.f32.mrb[0].mxu0
        %4054 = vmatprep.mubr.f32.mxu0 0.0
        %4055 = vmatmul.mubr.f32.gmra.mrb[0].mxu0 %v3726
        %v4056 = vpop.f32.mrb[0].mxu0
        %v4057 = vadd.f32 %v3912, %v4056
        %v4058 = vpop.f32.mrb[0].mxu0
        %4059 = vmatprep.mubr.f32.mxu0 0.0
        %4060 = vmatmul.mubr.f32.gmra.mrb[0].mxu0 %v3729
        %v4061 = vpop.f32.mrb[0].mxu0
        %v4062 = vadd.f32 %v3917, %v4061
        %v4063 = vpop.f32.mrb[0].mxu0
        %4064 = vmatprep.mubr.f32.mxu0 0.0
        %4065 = vmatmul.mubr.f32.gmra.mrb[0].mxu0 %v3732
        %v4066 = vpop.f32.mrb[0].mxu0
        %v4067 = vadd.f32 %v3922, %v4066
        %v4068 = vpop.f32.mrb[0].mxu0
        %4069 = vmatprep.mubr.f32.mxu0 0.0
        %4070 = vmatmul.mubr.f32.gmra.mrb[0].mxu0 %v3735
        %v4071 = vpop.f32.mrb[0].mxu0
        %v4072 = vadd.f32 %v3927, %v4071
        %v4073 = vpop.f32.mrb[0].mxu0
        %4074 = vdwg.mxu0
        %v4075 = vadd.f32 %v3610, %v3997
        %v4076 = vadd.f32 %v3615, %v4002
        %v4077 = vadd.f32 %v3620, %v4007
        %v4078 = vadd.f32 %v3625, %v4012
        %v4079 = vadd.f32 %v3630, %v4017
        %v4080 = vadd.f32 %v3635, %v4022
        %v4081 = vadd.f32 %v3640, %v4027
        %v4082 = vadd.f32 %v3645, %v4032
        %v4083 = vadd.f32 %v3650, %v4037
        %v4084 = vadd.f32 %v3655, %v4042
        %v4085 = vadd.f32 %v3660, %v4047
        %v4086 = vadd.f32 %v3665, %v4052
        %v4087 = vadd.f32 %v3670, %v4057
        %v4088 = vadd.f32 %v3675, %v4062
        %v4089 = vadd.f32 %v3680, %v4067
        %v4090 = vadd.f32 %v3685, %v4072
        %s4091 = scalar_lea.vmem %s380, 64 [#allocation2]
        %v4092 = vld [vmem:[%s4091 + $0x2] sm:$0xff]
        %v4093 = vld [vmem:[%s4091 + $0xa] sm:$0xff]
        %v4094 = vld [vmem:[%s4091 + $0x22] sm:$0xff]
        %v4095 = vld [vmem:[%s4091 + $0x2a] sm:$0xff]
        %v4096 = vld [vmem:[%s4091 + $0x42] sm:$0xff]
        %v4097 = vld [vmem:[%s4091 + $0x4a] sm:$0xff]
        %v4098 = vld [vmem:[%s4091 + $0x62] sm:$0xff]
        %v4099 = vld [vmem:[%s4091 + $0x6a] sm:$0xff]
        %v4100 = vld [vmem:[%s4091 + $0x82] sm:$0xff]
        %v4101 = vld [vmem:[%s4091 + $0x8a] sm:$0xff]
        %v4102 = vld [vmem:[%s4091 + $0xa2] sm:$0xff]
        %v4103 = vld [vmem:[%s4091 + $0xaa] sm:$0xff]
        %v4104 = vld [vmem:[%s4091 + $0xc2] sm:$0xff]
        %v4105 = vld [vmem:[%s4091 + $0xca] sm:$0xff]
        %v4106 = vld [vmem:[%s4091 + $0xe2] sm:$0xff]
        %v4107 = vld [vmem:[%s4091 + $0xea] sm:$0xff]
        %v4108 = vld [vmem:[%s4] sm:$0x1]
        %v4110 = vlaneseq
        %v4111 = vshrl.u32 %v4110, 7
        %v4112 = vsub.s32 0, %v4111
        %v4113 = vrot.slane %v4108, %v4112
        %v4115 = vadd.f32 %v4075, %v4113
        %v4116 = vadd.f32 %v4076, %v4113
        %v4117 = vadd.f32 %v4077, %v4113
        %v4118 = vadd.f32 %v4078, %v4113
        %v4119 = vadd.f32 %v4079, %v4113
        %v4120 = vadd.f32 %v4080, %v4113
        %v4121 = vadd.f32 %v4081, %v4113
        %v4122 = vadd.f32 %v4082, %v4113
        %v4123 = vadd.f32 %v4083, %v4113
        %v4124 = vadd.f32 %v4084, %v4113
        %v4125 = vadd.f32 %v4085, %v4113
        %v4126 = vadd.f32 %v4086, %v4113
        %v4127 = vadd.f32 %v4087, %v4113
        %v4128 = vadd.f32 %v4088, %v4113
        %v4129 = vadd.f32 %v4089, %v4113
        %v4130 = vadd.f32 %v4090, %v4113
        %v4131 = vadd.f32 %v4115, %v4092
        %v4132 = vadd.f32 %v4116, %v4093
        %v4133 = vadd.f32 %v4117, %v4094
        %v4134 = vadd.f32 %v4118, %v4095
        %v4135 = vadd.f32 %v4119, %v4096
        %v4136 = vadd.f32 %v4120, %v4097
        %v4137 = vadd.f32 %v4121, %v4098
        %v4138 = vadd.f32 %v4122, %v4099
        %v4139 = vadd.f32 %v4123, %v4100
        %v4140 = vadd.f32 %v4124, %v4101
        %v4141 = vadd.f32 %v4125, %v4102
        %v4142 = vadd.f32 %v4126, %v4103
        %v4143 = vadd.f32 %v4127, %v4104
        %v4144 = vadd.f32 %v4128, %v4105
        %v4145 = vadd.f32 %v4129, %v4106
        %v4146 = vadd.f32 %v4130, %v4107
        %v4147 = vmax.f32 %v4131, 0.0
        %v4148 = vmax.f32 %v4132, 0.0
        %v4149 = vmax.f32 %v4133, 0.0
        %v4150 = vmax.f32 %v4134, 0.0
        %v4151 = vmax.f32 %v4135, 0.0
        %v4152 = vmax.f32 %v4136, 0.0
        %v4153 = vmax.f32 %v4137, 0.0
        %v4154 = vmax.f32 %v4138, 0.0
        %v4155 = vmax.f32 %v4139, 0.0
        %v4156 = vmax.f32 %v4140, 0.0
        %v4157 = vmax.f32 %v4141, 0.0
        %v4158 = vmax.f32 %v4142, 0.0
        %v4159 = vmax.f32 %v4143, 0.0
        %v4160 = vmax.f32 %v4144, 0.0
        %v4161 = vmax.f32 %v4145, 0.0
        %v4162 = vmax.f32 %v4146, 0.0
        %4163 = vst [vmem:[%s190] sm:$0xff] %v4147
        %4164 = vst [vmem:[%s190 + $0x8] sm:$0xff] %v4148
        %4165 = vst [vmem:[%s190 + $0x10] sm:$0xff] %v4149
        %4166 = vst [vmem:[%s190 + $0x18] sm:$0xff] %v4150
        %4167 = vst [vmem:[%s190 + $0x20] sm:$0xff] %v4151
        %4168 = vst [vmem:[%s190 + $0x28] sm:$0xff] %v4152
        %4169 = vst [vmem:[%s190 + $0x30] sm:$0xff] %v4153
        %4170 = vst [vmem:[%s190 + $0x38] sm:$0xff] %v4154
        %4171 = vst [vmem:[%s190 + $0x40] sm:$0xff] %v4155
        %4172 = vst [vmem:[%s190 + $0x48] sm:$0xff] %v4156
        %4173 = vst [vmem:[%s190 + $0x50] sm:$0xff] %v4157
        %4174 = vst [vmem:[%s190 + $0x58] sm:$0xff] %v4158
        %4175 = vst [vmem:[%s190 + $0x60] sm:$0xff] %v4159
        %4176 = vst [vmem:[%s190 + $0x68] sm:$0xff] %v4160
        %4177 = vst [vmem:[%s190 + $0x70] sm:$0xff] %v4161
        %4178 = vst [vmem:[%s190 + $0x78] sm:$0xff] %v4162
        %s4179 = sand.u32 %s125, 1
        %s4180 = scalar_lea.sflag [#allocation7], %s4179
        %s4181 = sand.u32 %s125, 1
        %s4182 = smul.addr %s4181, 128
        %s4183 = scalar_lea.vmem [#allocation6], %s4182
        // Predicated region
        $region119: #{tpu_custom_call.1} parent=35 // pred_check
          %p4184 = pneg %p135
        $region120: #{tpu_custom_call.1} parent=35 // pred_check_branch
          %4186 = sbr.rel (%p4184) target = $region122
        $region121: #{tpu_custom_call.1} parent=35 // pred_region
          %s4187 = smul.u32 8, %s24
          %s4189 = ssub.s32 2048, 2048
          %4190 = vsyncadd %s4180, %s4189
          %s4191 = smul.addr %s4187, 2
          %s4192 = smul.addr %s23, 32
          %s4193 = sadd.s32 %s4191, %s4192
          %s4194 = smul.addr %s4193, 128
          %s4195 = scalar_lea.hbm %s5, %s4194
          %s4196 = sshll.u32 %s4183, 4
          %s4197 = int_to_ptr.vmem [resolvable:$true] %s4196
          %4202 = dma.vmem_to_hbm [thread:$0]  %s4197, 2048, %s4195, %s4180, 128, 128, 8
        $region122: #{tpu_custom_call.1} parent=35 // pred_fallthru
          _
      $region36: #{tpu_custom_call.1} parent=5 // pred_fallthru
        _
      %p4203 = scmp.le.s32.totalorder 2, %s14
      // Predicated region
      $region123: #{tpu_custom_call.1} parent=5 // pred_check
        %p4204 = pneg %p4203
      $region124: #{tpu_custom_call.1} parent=5 // pred_check_branch
        %4206 = sbr.rel (%p4204) target = $region126
      $region125: #{tpu_custom_call.1} parent=5 // pred_region
        %s4207 = ssub.s32 %s14, 2
        // Predicated region
        $region127: #{tpu_custom_call.1} parent=125 // pred_check
          %p4208 = pneg %p141
        $region128: #{tpu_custom_call.1} parent=125 // pred_check_branch
          %4210 = sbr.rel (%p4208) target = $region130
        $region129: #{tpu_custom_call.1} parent=125 // pred_region
          %s4211 = sand.u32 %s126, 1
          %s4212 = scalar_lea.sflag [#allocation7], %s4211
          %s4213 = sand.u32 %s126, 1
          %s4214 = smul.addr %s4213, 128
          %s4215 = scalar_lea.vmem [#allocation6], %s4214
          %4216 = dma.done %s4212, 2048
        $region130: #{tpu_custom_call.1} parent=125 // pred_fallthru
          _
      $region126: #{tpu_custom_call.1} parent=5 // pred_fallthru
        _
    $region6: #{tpu_custom_call.1} parent=1 // loop_footer
      %s18 = sadd.s32 1, %s14
    $region7: #{tpu_custom_call.1} parent=1 // loop_footer_branch
      %13 = sbr.rel target = $region3
    $region8: #{tpu_custom_call.1} parent=1 // loop_exit
      _
    %4217 = vsyncpa [#allocation7], 1
    %s4218 = scalar_lea.sflag [#allocation7], 1
    %4219 = vsyncpa %s4218, 1
  %4220 = vsyncmov [#allocation5]
  %s4221 = vpop.sfrf %4220
  %p4222 = scmp.eq.s32.totalorder %s4221, 0
  %p4223 = pneg %p4222
  %4225 = shalt.err (%p4223)
  %s4226 = scalar_lea.sflag [#allocation5], 1
  %4227 = vsyncmov %s4226
  %s4228 = vpop.sfrf %4227
  %p4229 = scmp.eq.s32.totalorder %s4228, 0
  %p4230 = pneg %p4229
  %4232 = shalt.err (%p4230)

</llo_original>
